<compile_context>
chip_gen: v5e
topology: v5e:2x2
jax: 0.10.0
libtpu: 0.0.40
codegen_flags: <defaults>
</compile_context>

<pallas_src>
import functools

import jax
import jax.numpy as jnp
from jax.experimental import pallas as pl
from jax.experimental.pallas import tpu as pltpu


def _round_up(x, m):
    return ((x + m - 1) // m) * m


# ----------------------------------------------------------------------------
# Parameter init (PyTorch nn.Conv2d / nn.Linear default layout + init)
# ----------------------------------------------------------------------------
def init_params(key, input_len, output_num, conv_size=(32, 64), fc_size=(1024, 128)):
    ks = jax.random.split(key, 10)

    def u(k, shape, fan_in):
        bound = 1.0 / jnp.sqrt(fan_in)
        return jax.random.uniform(k, shape, jnp.float32, -bound, bound)

    c1, c2 = conv_size
    f1, f2 = fc_size
    flat = c2 * input_len * input_len
    return {
        "conv1_w": u(ks[0], (c1, 1, 3, 3), 1 * 9),
        "conv1_b": u(ks[1], (c1,), 1 * 9),
        "conv2_w": u(ks[2], (c2, c1, 3, 3), c1 * 9),
        "conv2_b": u(ks[3], (c2,), c1 * 9),
        "fc1_w":   u(ks[4], (f1, flat), flat),
        "fc1_b":   u(ks[5], (f1,), flat),
        "fc2_w":   u(ks[6], (f2, f1), f1),
        "fc2_b":   u(ks[7], (f2,), f1),
        "head_w":  u(ks[8], (output_num, f2), f2),
        "head_b":  u(ks[9], (output_num,), f2),
    }


# ----------------------------------------------------------------------------
# Init-time lowering: fold Conv2d(k=3, s=1, p=1) into a dense matmul acting on
# the NCHW flatten.  Columns of the dense matrix are conv(e_i) for unit inputs.
# ----------------------------------------------------------------------------
def _conv3x3_to_dense(w, b, H, W):
    """w: (C_out, C_in, 3, 3), b: (C_out,) ->
       W_dense: (C_in*H*W, C_out*H*W), b_dense: (C_out*H*W,)."""
    C_out, C_in, _, _ = w.shape
    eye = jnp.eye(C_in * H * W, dtype=jnp.float32).reshape(C_in * H * W, C_in, H, W)
    cols = jax.lax.conv_general_dilated(
        eye, w.astype(jnp.float32), window_strides=(1, 1),
        padding=((1, 1), (1, 1)),
        dimension_numbers=("NCHW", "OIHW", "NCHW"))
    w_dense = cols.reshape(C_in * H * W, C_out * H * W)   # rows: (ci,h,w), cols: (co,h,w)
    b_dense = jnp.repeat(b.astype(jnp.float32), H * W)
    return w_dense, b_dense


def prepare_fused_params(params, input_len, output_num, compute_dtype=jnp.bfloat16):
    """Pre-materialize all five layers as (K, N) matmul operands for the fused kernel.

    compute_dtype defaults to bf16: native MXU dtype on all TPU generations,
    f32 accumulation in-kernel.  Pass jnp.float32 for an exact-reference path.
    """
    L = input_len
    w1, b1 = _conv3x3_to_dense(params["conv1_w"], params["conv1_b"], L, L)
    w2, b2 = _conv3x3_to_dense(params["conv2_w"], params["conv2_b"], L, L)
    w3, b3 = params["fc1_w"].T, params["fc1_b"]
    w4, b4 = params["fc2_w"].T, params["fc2_b"]
    f2 = params["head_w"].shape[1]
    n_pad = max(128, _round_up(output_num, 128))          # lane-dense head output
    w5 = jnp.zeros((f2, n_pad), jnp.float32).at[:, :output_num].set(params["head_w"].T)
    b5 = jnp.zeros((n_pad,), jnp.float32).at[:output_num].set(params["head_b"])

    weights = tuple(w.astype(compute_dtype) for w in (w1, w2, w3, w4, w5))
    biases = tuple(b.astype(jnp.float32).reshape(1, -1) for b in (b1, b2, b3, b4, b5))
    return {"weights": weights, "biases": biases, "n_pad": n_pad,
            "output_num": output_num, "input_len": input_len}


# ----------------------------------------------------------------------------
# Fused Pallas kernel: conv1(dense) -> conv2(dense) -> fc1 -> fc2 -> head
# ----------------------------------------------------------------------------
def _fused_forward_kernel(x_ref, w1_ref, b1_ref, w2_ref, b2_ref, w3_ref, b3_ref,
                          w4_ref, b4_ref, w5_ref, b5_ref, o_ref, *,
                          out_softmax, output_num):
    def dense(a, w_ref, b_ref, relu):
        acc = jnp.dot(a.astype(w_ref.dtype), w_ref[...],
                      preferred_element_type=jnp.float32)   # MXU, f32 accumulate
        acc = acc + b_ref[...]                               # (1, N) f32 bias broadcast
        if relu:
            acc = jnp.maximum(acc, 0.0)                      # f32 VPU (v5e-safe)
        return acc

    h = x_ref[...].astype(jnp.float32)
    h = dense(h, w1_ref, b1_ref, relu=True)    # conv1 folded to dense matmul + ReLU
    h = dense(h, w2_ref, b2_ref, relu=True)    # conv2 folded to dense matmul + ReLU
    h = dense(h, w3_ref, b3_ref, relu=True)    # fc1 + ReLU
    h = dense(h, w4_ref, b4_ref, relu=True)    # fc2 + ReLU
    acc = dense(h, w5_ref, b5_ref, relu=False) # head, lane-padded to 128 columns

    if out_softmax:
        cols = jax.lax.broadcasted_iota(jnp.int32, acc.shape, 1)
        logits = jnp.where(cols < output_num, acc, jnp.float32(-1e30))  # mask padded lanes
        m = jnp.max(logits, axis=1, keepdims=True)
        e = jnp.exp(logits - m)
        acc = e * pl.reciprocal(jnp.sum(e, axis=1, keepdims=True), approx=True)

    o_ref[...] = acc.astype(o_ref.dtype)


def _resident_spec(shape):
    """Constant-index, VMEM-resident block; single-buffered (never re-fetched)."""
    idx = lambda i: tuple(0 for _ in shape)
    try:
        return pl.BlockSpec(shape, idx, pipeline_mode=pl.Buffered(1))
    except TypeError:  # older BlockSpec signature without pipeline_mode
        return pl.BlockSpec(shape, idx)


def _pick_tiling(B, tile_m):
    """Balanced batch tiling: <8 padded rows per step, >=2 steps when B>8
    (so the 'parallel' grid axis shards across both v7x TensorCores)."""
    max_tm = max(8, min(tile_m, _round_up(B, 8)))
    steps = pl.cdiv(B, max_tm)
    if B > 8:
        steps = max(steps, 2)
    tm = _round_up(pl.cdiv(B, steps), 8)
    return steps, tm, steps * tm


def _vmem_limit_bytes(weights, biases, tm, in_k, n_pad):
    """Right-sized VMEM request (never ask for the whole physical VMEM on v7x)."""
    w_bytes = sum(int(w.size) * w.dtype.itemsize for w in weights)          # single-buffered
    b_bytes = sum(8 * _round_up(int(b.shape[1]), 128) * 4 for b in biases)  # tile-padded f32
    io_bytes = 2 * tm * (_round_up(in_k, 128) + n_pad) * 4                  # double-buffered x/out
    inter_bytes = tm * sum(_round_up(int(w.shape[1]), 128) for w in weights) * 4  # f32 chain
    total = w_bytes + b_bytes + io_bytes + inter_bytes + (4 << 20)          # Mosaic scratch headroom
    return int(min(_round_up(total, 1 << 20), 32 * 1024 * 1024))


def cnn_net_forward(fused, x, out_softmax=False, tile_m=512):
    """x: anything that flattens to (-1, input_len*input_len), like torch's reshape."""
    L = fused["input_len"]
    n_pad = fused["n_pad"]
    output_num = fused["output_num"]
    weights, biases = fused["weights"], fused["biases"]

    x2 = x.reshape(-1, L * L).astype(jnp.float32)
    B = x2.shape[0]
    steps, tm, Bp = _pick_tiling(B, tile_m)
    if Bp != B:
        x2 = jnp.pad(x2, ((0, Bp - B), (0, 0)))

    operands = [x2]
    in_specs = [pl.BlockSpec((tm, L * L), lambda i: (i, 0))]
    for w, b in zip(weights, biases):
        operands += [w, b]
        in_specs += [_resident_spec(w.shape), _resident_spec(b.shape)]

    flops = 2 * Bp * sum(int(w.shape[0]) * int(w.shape[1]) for w in weights)
    bytes_accessed = (x2.size * 4 + Bp * n_pad * 4
                      + sum(int(w.size) * w.dtype.itemsize for w in weights)
                      + sum(int(b.size) * 4 for b in biases))
    cost = pl.CostEstimate(flops=flops,
                           transcendentals=Bp * n_pad if out_softmax else 0,
                           bytes_accessed=bytes_accessed)

    kernel = functools.partial(_fused_forward_kernel,
                               out_softmax=out_softmax, output_num=output_num)
    out = pl.pallas_call(
        kernel,
        out_shape=jax.ShapeDtypeStruct((Bp, n_pad), jnp.float32),
        grid_spec=pltpu.PrefetchScalarGridSpec(
            num_scalar_prefetch=0,
            grid=(steps,),                                     # M-tiled batch axis
            in_specs=in_specs,
            out_specs=pl.BlockSpec((tm, n_pad), lambda i: (i, 0)),
        ),
        compiler_params=pltpu.CompilerParams(
            dimension_semantics=("parallel",),                 # megacore shard on v7x
            vmem_limit_bytes=_vmem_limit_bytes(weights, biases, tm, L * L, n_pad)),
        cost_estimate=cost,
    )(*operands)
    return out[:B, :output_num]


# ----------------------------------------------------------------------------
# Pure-JAX reference (mirrors the PyTorch module) for correctness checks
# ----------------------------------------------------------------------------
def reference_forward(params, x, input_len, out_softmax=False):
    x = x.reshape(-1, 1, input_len, input_len).astype(jnp.float32)

    def conv(x, w, b):
        y = jax.lax.conv_general_dilated(
            x, w, window_strides=(1, 1), padding=((1, 1), (1, 1)),
            dimension_numbers=("NCHW", "OIHW", "NCHW"))
        return jax.nn.relu(y + b[None, :, None, None])

    x = conv(x, params["conv1_w"], params["conv1_b"])
    x = conv(x, params["conv2_w"], params["conv2_b"])
    x = x.reshape(x.shape[0], -1)
    x = jax.nn.relu(x @ params["fc1_w"].T + params["fc1_b"])
    x = jax.nn.relu(x @ params["fc2_w"].T + params["fc2_b"])
    out = x @ params["head_w"].T + params["head_b"]
    if out_softmax:
        out = jax.nn.softmax(out, axis=1)
    return out


if __name__ == "__main__":
    # 2048 board: 4x4 input, 4 actions.
    INPUT_LEN = 4
    OUTPUT_NUM = 4
    BATCH = 2

    key = jax.random.PRNGKey(0)
    pkey, xkey, xkey2 = jax.random.split(key, 3)
    params = init_params(pkey, INPUT_LEN, OUTPUT_NUM)
    x = jax.random.uniform(xkey, (BATCH, INPUT_LEN * INPUT_LEN), jnp.float32)
    ref = jax.block_until_ready(reference_forward(params, x, INPUT_LEN, False))

    # --- f32 exact path (reference check), no softmax -------------------------
    fused_f32 = prepare_fused_params(params, INPUT_LEN, OUTPUT_NUM, jnp.float32)
    out = jax.block_until_ready(cnn_net_forward(fused_f32, x, out_softmax=False))
    assert out.shape == (BATCH, OUTPUT_NUM)
    assert jnp.allclose(out, ref, atol=1e-3, rtol=1e-3), (out, ref)

    # --- f32 path, softmax head (approx reciprocal -> slightly looser tol) ----
    out_sm = jax.block_until_ready(cnn_net_forward(fused_f32, x, out_softmax=True))
    ref_sm = jax.block_until_ready(reference_forward(params, x, INPUT_LEN, True))
    assert jnp.allclose(out_sm, ref_sm, atol=5e-3, rtol=5e-3), (out_sm, ref_sm)

    # --- default bf16 MXU operands (f32 accumulation), loose tolerance --------
    fused_bf16 = prepare_fused_params(params, INPUT_LEN, OUTPUT_NUM)   # bf16 default
    out_bf = jax.block_until_ready(cnn_net_forward(fused_bf16, x, out_softmax=False))
    assert out_bf.shape == (BATCH, OUTPUT_NUM)
    assert float(jnp.max(jnp.abs(out_bf - ref))) < 0.15

    # --- larger batch: balanced multi-step grid (>=2 steps, <8 pad rows/step) -
    xb = jax.random.uniform(xkey2, (300, INPUT_LEN * INPUT_LEN), jnp.float32)
    out_b = jax.block_until_ready(cnn_net_forward(fused_f32, xb, out_softmax=False))
    ref_b = jax.block_until_ready(reference_forward(params, xb, INPUT_LEN, False))
    assert out_b.shape == (300, OUTPUT_NUM)
    assert jnp.allclose(out_b, ref_b, atol=1e-3, rtol=1e-3)

    out_bb = jax.block_until_ready(cnn_net_forward(fused_bf16, xb, out_softmax=True))
    assert out_bb.shape == (300, OUTPUT_NUM)

    print("KERNEL_OK")
</pallas_src>

<mosaic_0001>
module attributes {stable_mosaic.version = 11 : i64} {
  func.func @_fused_forward_kernel(%arg0: i32, %arg1: memref<8x16xf32, #tpu.memory_space<vmem>>, %arg2: memref<16x512xf32, #tpu.memory_space<vmem>>, %arg3: memref<1x512xf32, #tpu.memory_space<vmem>>, %arg4: memref<512x1024xf32, #tpu.memory_space<vmem>>, %arg5: memref<1x1024xf32, #tpu.memory_space<vmem>>, %arg6: memref<1024x1024xf32, #tpu.memory_space<vmem>>, %arg7: memref<1x1024xf32, #tpu.memory_space<vmem>>, %arg8: memref<1024x128xf32, #tpu.memory_space<vmem>>, %arg9: memref<1x128xf32, #tpu.memory_space<vmem>>, %arg10: memref<128x128xf32, #tpu.memory_space<vmem>>, %arg11: memref<1x128xf32, #tpu.memory_space<vmem>>, %arg12: memref<8x128xf32, #tpu.memory_space<vmem>>) attributes {dimension_semantics = [#tpu.dimension_semantics<parallel>], iteration_bounds = array<i64: 1>, scalar_prefetch = 0 : i64, scratch_operands = 0 : i64, tpu.core_type = #tpu.core_type<tc>, window_params = [{transform_indices = @transform_0, window_bounds = array<i64: 8, 16>}, {pipeline_mode = #tpu.pipeline_mode<synchronous>, transform_indices = @transform_1, window_bounds = array<i64: 16, 512>}, {pipeline_mode = #tpu.pipeline_mode<synchronous>, transform_indices = @transform_2, window_bounds = array<i64: 1, 512>}, {pipeline_mode = #tpu.pipeline_mode<synchronous>, transform_indices = @transform_3, window_bounds = array<i64: 512, 1024>}, {pipeline_mode = #tpu.pipeline_mode<synchronous>, transform_indices = @transform_4, window_bounds = array<i64: 1, 1024>}, {pipeline_mode = #tpu.pipeline_mode<synchronous>, transform_indices = @transform_5, window_bounds = array<i64: 1024, 1024>}, {pipeline_mode = #tpu.pipeline_mode<synchronous>, transform_indices = @transform_6, window_bounds = array<i64: 1, 1024>}, {pipeline_mode = #tpu.pipeline_mode<synchronous>, transform_indices = @transform_7, window_bounds = array<i64: 1024, 128>}, {pipeline_mode = #tpu.pipeline_mode<synchronous>, transform_indices = @transform_8, window_bounds = array<i64: 1, 128>}, {pipeline_mode = #tpu.pipeline_mode<synchronous>, transform_indices = @transform_9, window_bounds = array<i64: 128, 128>}, {pipeline_mode = #tpu.pipeline_mode<synchronous>, transform_indices = @transform_10, window_bounds = array<i64: 1, 128>}, {transform_indices = @transform_11, window_bounds = array<i64: 8, 128>}]} {
    %c0 = arith.constant 0 : index
    %c0_0 = arith.constant 0 : index
    %0 = vector.load %arg1[%c0, %c0_0] : memref<8x16xf32, #tpu.memory_space<vmem>>, vector<8x16xf32>
    %c0_1 = arith.constant 0 : index
    %c0_2 = arith.constant 0 : index
    %1 = vector.load %arg2[%c0_1, %c0_2] : memref<16x512xf32, #tpu.memory_space<vmem>>, vector<16x512xf32>
    %cst = arith.constant dense<0.000000e+00> : vector<8x512xf32>
    %2 = tpu.matmul %0, %1, %cst {dimension_numbers = #tpu.dot_dimension_numbers<[1], [0], [0], [1], [0, 0, 1, 1], [], []>} : vector<8x16xf32>, vector<16x512xf32>, vector<8x512xf32> -> vector<8x512xf32>
    %c0_3 = arith.constant 0 : index
    %c0_4 = arith.constant 0 : index
    %3 = vector.load %arg3[%c0_3, %c0_4] : memref<1x512xf32, #tpu.memory_space<vmem>>, vector<1x512xf32>
    %4 = vector.broadcast %3 : vector<1x512xf32> to vector<8x512xf32>
    %5 = arith.addf %2, %4 : vector<8x512xf32>
    %cst_5 = arith.constant 0.000000e+00 : f32
    %6 = vector.broadcast %cst_5 : f32 to vector<8x512xf32>
    %7 = arith.maximumf %5, %6 : vector<8x512xf32>
    %c0_6 = arith.constant 0 : index
    %c0_7 = arith.constant 0 : index
    %8 = vector.load %arg4[%c0_6, %c0_7] : memref<512x1024xf32, #tpu.memory_space<vmem>>, vector<512x1024xf32>
    %cst_8 = arith.constant dense<0.000000e+00> : vector<8x1024xf32>
    %9 = tpu.matmul %7, %8, %cst_8 {dimension_numbers = #tpu.dot_dimension_numbers<[1], [0], [0], [1], [0, 0, 1, 1], [], []>} : vector<8x512xf32>, vector<512x1024xf32>, vector<8x1024xf32> -> vector<8x1024xf32>
    %c0_9 = arith.constant 0 : index
    %c0_10 = arith.constant 0 : index
    %10 = vector.load %arg5[%c0_9, %c0_10] : memref<1x1024xf32, #tpu.memory_space<vmem>>, vector<1x1024xf32>
    %11 = vector.broadcast %10 : vector<1x1024xf32> to vector<8x1024xf32>
    %12 = arith.addf %9, %11 : vector<8x1024xf32>
    %cst_11 = arith.constant 0.000000e+00 : f32
    %13 = vector.broadcast %cst_11 : f32 to vector<8x1024xf32>
    %14 = arith.maximumf %12, %13 : vector<8x1024xf32>
    %c0_12 = arith.constant 0 : index
    %c0_13 = arith.constant 0 : index
    %15 = vector.load %arg6[%c0_12, %c0_13] : memref<1024x1024xf32, #tpu.memory_space<vmem>>, vector<1024x1024xf32>
    %cst_14 = arith.constant dense<0.000000e+00> : vector<8x1024xf32>
    %16 = tpu.matmul %14, %15, %cst_14 {dimension_numbers = #tpu.dot_dimension_numbers<[1], [0], [0], [1], [0, 0, 1, 1], [], []>} : vector<8x1024xf32>, vector<1024x1024xf32>, vector<8x1024xf32> -> vector<8x1024xf32>
    %c0_15 = arith.constant 0 : index
    %c0_16 = arith.constant 0 : index
    %17 = vector.load %arg7[%c0_15, %c0_16] : memref<1x1024xf32, #tpu.memory_space<vmem>>, vector<1x1024xf32>
    %18 = vector.broadcast %17 : vector<1x1024xf32> to vector<8x1024xf32>
    %19 = arith.addf %16, %18 : vector<8x1024xf32>
    %cst_17 = arith.constant 0.000000e+00 : f32
    %20 = vector.broadcast %cst_17 : f32 to vector<8x1024xf32>
    %21 = arith.maximumf %19, %20 : vector<8x1024xf32>
    %c0_18 = arith.constant 0 : index
    %c0_19 = arith.constant 0 : index
    %22 = vector.load %arg8[%c0_18, %c0_19] : memref<1024x128xf32, #tpu.memory_space<vmem>>, vector<1024x128xf32>
    %cst_20 = arith.constant dense<0.000000e+00> : vector<8x128xf32>
    %23 = tpu.matmul %21, %22, %cst_20 {dimension_numbers = #tpu.dot_dimension_numbers<[1], [0], [0], [1], [0, 0, 1, 1], [], []>} : vector<8x1024xf32>, vector<1024x128xf32>, vector<8x128xf32> -> vector<8x128xf32>
    %c0_21 = arith.constant 0 : index
    %c0_22 = arith.constant 0 : index
    %24 = vector.load %arg9[%c0_21, %c0_22] : memref<1x128xf32, #tpu.memory_space<vmem>>, vector<1x128xf32>
    %25 = vector.broadcast %24 : vector<1x128xf32> to vector<8x128xf32>
    %26 = arith.addf %23, %25 : vector<8x128xf32>
    %cst_23 = arith.constant 0.000000e+00 : f32
    %27 = vector.broadcast %cst_23 : f32 to vector<8x128xf32>
    %28 = arith.maximumf %26, %27 : vector<8x128xf32>
    %c0_24 = arith.constant 0 : index
    %c0_25 = arith.constant 0 : index
    %29 = vector.load %arg10[%c0_24, %c0_25] : memref<128x128xf32, #tpu.memory_space<vmem>>, vector<128x128xf32>
    %cst_26 = arith.constant dense<0.000000e+00> : vector<8x128xf32>
    %30 = tpu.matmul %28, %29, %cst_26 {dimension_numbers = #tpu.dot_dimension_numbers<[1], [0], [0], [1], [0, 0, 1, 1], [], []>} : vector<8x128xf32>, vector<128x128xf32>, vector<8x128xf32> -> vector<8x128xf32>
    %c0_27 = arith.constant 0 : index
    %c0_28 = arith.constant 0 : index
    %31 = vector.load %arg11[%c0_27, %c0_28] : memref<1x128xf32, #tpu.memory_space<vmem>>, vector<1x128xf32>
    %32 = vector.broadcast %31 : vector<1x128xf32> to vector<8x128xf32>
    %33 = arith.addf %30, %32 : vector<8x128xf32>
    %c0_29 = arith.constant 0 : index
    %c0_30 = arith.constant 0 : index
    %34 = vector.load %arg12[%c0_29, %c0_30] : memref<8x128xf32, #tpu.memory_space<vmem>>, vector<8x128xf32>
    tpu.vector_store %arg12[%c0_29, %c0_30], %33 {strides = array<i32>} : memref<8x128xf32, #tpu.memory_space<vmem>>, vector<8x128xf32>,
    return
  }
  func.func @transform_0(%arg0: i32) -> (i32, i32) {
    %c0_i32 = arith.constant 0 : i32
    %c0_i32_0 = arith.constant 0 : i32
    return %arg0, %c0_i32 : i32, i32
  }
  func.func @transform_1(%arg0: i32) -> (i32, i32) {
    %c0_i32 = arith.constant 0 : i32
    %c0_i32_0 = arith.constant 0 : i32
    %c0_i32_1 = arith.constant 0 : i32
    return %c0_i32, %c0_i32_0 : i32, i32
  }
  func.func @transform_2(%arg0: i32) -> (i32, i32) {
    %c0_i32 = arith.constant 0 : i32
    %c0_i32_0 = arith.constant 0 : i32
    %c0_i32_1 = arith.constant 0 : i32
    return %c0_i32, %c0_i32_0 : i32, i32
  }
  func.func @transform_3(%arg0: i32) -> (i32, i32) {
    %c0_i32 = arith.constant 0 : i32
    %c0_i32_0 = arith.constant 0 : i32
    %c0_i32_1 = arith.constant 0 : i32
    return %c0_i32, %c0_i32_0 : i32, i32
  }
  func.func @transform_4(%arg0: i32) -> (i32, i32) {
    %c0_i32 = arith.constant 0 : i32
    %c0_i32_0 = arith.constant 0 : i32
    %c0_i32_1 = arith.constant 0 : i32
    return %c0_i32, %c0_i32_0 : i32, i32
  }
  func.func @transform_5(%arg0: i32) -> (i32, i32) {
    %c0_i32 = arith.constant 0 : i32
    %c0_i32_0 = arith.constant 0 : i32
    %c0_i32_1 = arith.constant 0 : i32
    return %c0_i32, %c0_i32_0 : i32, i32
  }
  func.func @transform_6(%arg0: i32) -> (i32, i32) {
    %c0_i32 = arith.constant 0 : i32
    %c0_i32_0 = arith.constant 0 : i32
    %c0_i32_1 = arith.constant 0 : i32
    return %c0_i32, %c0_i32_0 : i32, i32
  }
  func.func @transform_7(%arg0: i32) -> (i32, i32) {
    %c0_i32 = arith.constant 0 : i32
    %c0_i32_0 = arith.constant 0 : i32
    %c0_i32_1 = arith.constant 0 : i32
    return %c0_i32, %c0_i32_0 : i32, i32
  }
  func.func @transform_8(%arg0: i32) -> (i32, i32) {
    %c0_i32 = arith.constant 0 : i32
    %c0_i32_0 = arith.constant 0 : i32
    %c0_i32_1 = arith.constant 0 : i32
    return %c0_i32, %c0_i32_0 : i32, i32
  }
  func.func @transform_9(%arg0: i32) -> (i32, i32) {
    %c0_i32 = arith.constant 0 : i32
    %c0_i32_0 = arith.constant 0 : i32
    %c0_i32_1 = arith.constant 0 : i32
    return %c0_i32, %c0_i32_0 : i32, i32
  }
  func.func @transform_10(%arg0: i32) -> (i32, i32) {
    %c0_i32 = arith.constant 0 : i32
    %c0_i32_0 = arith.constant 0 : i32
    %c0_i32_1 = arith.constant 0 : i32
    return %c0_i32, %c0_i32_0 : i32, i32
  }
  func.func @transform_11(%arg0: i32) -> (i32, i32) {
    %c0_i32 = arith.constant 0 : i32
    %c0_i32_0 = arith.constant 0 : i32
    return %arg0, %c0_i32 : i32, i32
  }
}

</mosaic_0001>

<llo_original>
// kernel: tpu_custom_call.1
$region0: #{tpu_custom_call.1}
  #allocation0 [shape = 'u32[]', space=smem, size = 0x4, offset = 0x4, fixed_abs, tag = 'smem constant byte address 0x4 - core index']
  #allocation1 [shape = 'u32[72,128]{1,0:T(1,128)}', space=vmem, size = 0x9000, scoped, tag = 'internal scratch']
  %s0 = inlined_call_operand.hbm [shape: f32[8,16], index: 0, kind: input, shape index: {}]
  %s1 = inlined_call_operand.hbm [shape: f32[16,512], index: 1, kind: input, shape index: {}]
  %s2 = inlined_call_operand.hbm [shape: f32[1,512], index: 2, kind: input, shape index: {}]
  %s3 = inlined_call_operand.hbm [shape: f32[512,1024], index: 3, kind: input, shape index: {}]
  %s4 = inlined_call_operand.hbm [shape: f32[1,1024], index: 4, kind: input, shape index: {}]
  %s5 = inlined_call_operand.hbm [shape: f32[1024,1024], index: 5, kind: input, shape index: {}]
  %s6 = inlined_call_operand.hbm [shape: f32[1,1024], index: 6, kind: input, shape index: {}]
  %s7 = inlined_call_operand.hbm [shape: f32[1024,128], index: 7, kind: input, shape index: {}]
  %s8 = inlined_call_operand.hbm [shape: f32[1,128], index: 8, kind: input, shape index: {}]
  %s9 = inlined_call_operand.hbm [shape: f32[128,128], index: 9, kind: input, shape index: {}]
  %s10 = inlined_call_operand.hbm [shape: f32[1,128], index: 10, kind: input, shape index: {}]
  %s11 = inlined_call_operand.hbm [shape: f32[8,128], index: 11, kind: output, shape index: {}]
  %s12 = sld [smem:[#allocation0]]
  $region98: #{tpu_custom_call.1} parent=0
    _
  %s14 = ssub.s32 1, %s12
  %s15 = scalar_select 0, %s14, %s12
  $region1: #{tpu_custom_call.1} parent=0
    #allocation2 [shape = 'u8[4096]{0}', space=vmem, size = 0x1000, scoped, tag = 'input window, operand 0, single buffered']
    #allocation3 [shape = 's32[1]{0}', space=sflag, size = 0x4, scoped, tag = 'scoped memory for tpu_custom_call.1']
    #allocation4 [shape = 's32[1]{0}', space=sflag, size = 0x4, scoped, tag = 'scoped memory for tpu_custom_call.1']
    #allocation5 [shape = 'u8[32768]{0}', space=vmem, size = 0x8000, scoped, tag = 'input window, operand 1, single buffered']
    #allocation6 [shape = 's32[1]{0}', space=sflag, size = 0x4, scoped, tag = 'scoped memory for tpu_custom_call.1']
    #allocation7 [shape = 'u8[2048]{0}', space=vmem, size = 0x800, scoped, tag = 'input window, operand 2, single buffered']
    #allocation8 [shape = 'u8[2097152]{0}', space=vmem, size = 0x200000, scoped, tag = 'input window, operand 3, single buffered']
    #allocation9 [shape = 's32[1]{0}', space=sflag, size = 0x4, scoped, tag = 'scoped memory for tpu_custom_call.1']
    #allocation10 [shape = 'u8[4096]{0}', space=vmem, size = 0x1000, scoped, tag = 'input window, operand 4, single buffered']
    #allocation11 [shape = 'u8[4194304]{0}', space=vmem, size = 0x400000, scoped, tag = 'input window, operand 5, single buffered']
    #allocation12 [shape = 's32[1]{0}', space=sflag, size = 0x4, scoped, tag = 'scoped memory for tpu_custom_call.1']
    #allocation13 [shape = 'u8[4096]{0}', space=vmem, size = 0x1000, scoped, tag = 'input window, operand 6, single buffered']
    #allocation14 [shape = 'u8[524288]{0}', space=vmem, size = 0x80000, scoped, tag = 'input window, operand 7, single buffered']
    #allocation15 [shape = 's32[1]{0}', space=sflag, size = 0x4, scoped, tag = 'scoped memory for tpu_custom_call.1']
    #allocation16 [shape = 'u8[512]{0}', space=vmem, size = 0x400, scoped, tag = 'input window, operand 8, single buffered']
    #allocation17 [shape = 'u8[65536]{0}', space=vmem, size = 0x10000, scoped, tag = 'input window, operand 9, single buffered']
    #allocation18 [shape = 's32[1]{0}', space=sflag, size = 0x4, scoped, tag = 'scoped memory for tpu_custom_call.1']
    #allocation19 [shape = 'u8[512]{0}', space=vmem, size = 0x400, scoped, tag = 'input window, operand 10, single buffered']
    #allocation20 [shape = 'u8[4096]{0}', space=vmem, size = 0x1000, scoped, tag = 'output window, operand 0, single buffered']
    %16 = vsyncpa [#allocation3], 0
    %17 = vsyncpa [#allocation6], 0
    %18 = vsyncpa [#allocation9], 0
    %19 = vsyncpa [#allocation12], 0
    %20 = vsyncpa [#allocation15], 0
    %21 = vsyncpa [#allocation18], 0
    %22 = vsyncpa [#allocation4], 0
    // Predicated region
    $region2: #{tpu_custom_call.1} parent=1 // pred_check
      _
    $region3: #{tpu_custom_call.1} parent=1 // pred_check_branch
      %24 = sbr.rel (0) target = $region5
    $region4: #{tpu_custom_call.1} parent=1 // pred_region
      %26 = vsyncadd [#allocation3], 0
      %s28 = sshll.u32 %s0, 4
      %s29 = int_to_ptr.hbm [resolvable:$true] %s28
      %s30 = sshll.u32 [#allocation2], 4
      %s31 = int_to_ptr.vmem [resolvable:$true] %s30
      %33 = dma.hbm_to_vmem [thread:$0]  %s29, 128, %s31, [#allocation3]
    $region5: #{tpu_custom_call.1} parent=1 // pred_fallthru
      _
    // Predicated region
    $region6: #{tpu_custom_call.1} parent=1 // pred_check
      _
    $region7: #{tpu_custom_call.1} parent=1 // pred_check_branch
      %35 = sbr.rel (0) target = $region9
    $region8: #{tpu_custom_call.1} parent=1 // pred_region
      %37 = vsyncadd [#allocation6], 0
      %s38 = sshll.u32 %s1, 4
      %s39 = int_to_ptr.hbm [resolvable:$true] %s38
      %s40 = sshll.u32 [#allocation5], 4
      %s41 = int_to_ptr.vmem [resolvable:$true] %s40
      %46 = dma.hbm_to_vmem [thread:$0]  %s39, 1024, %s41, [#allocation6], 512, 512, 32
    $region9: #{tpu_custom_call.1} parent=1 // pred_fallthru
      _
    // Predicated region
    $region10: #{tpu_custom_call.1} parent=1 // pred_check
      _
    $region11: #{tpu_custom_call.1} parent=1 // pred_check_branch
      %48 = sbr.rel (0) target = $region13
    $region12: #{tpu_custom_call.1} parent=1 // pred_region
      %50 = vsyncadd [#allocation6], 0
      %s52 = sshll.u32 %s2, 4
      %s53 = int_to_ptr.hbm [resolvable:$true] %s52
      %s54 = sshll.u32 [#allocation7], 4
      %s55 = int_to_ptr.vmem [resolvable:$true] %s54
      %57 = dma.hbm_to_vmem [thread:$0]  %s53, 64, %s55, [#allocation6]
    $region13: #{tpu_custom_call.1} parent=1 // pred_fallthru
      _
    // Predicated region
    $region14: #{tpu_custom_call.1} parent=1 // pred_check
      _
    $region15: #{tpu_custom_call.1} parent=1 // pred_check_branch
      %59 = sbr.rel (0) target = $region17
    $region16: #{tpu_custom_call.1} parent=1 // pred_region
      %61 = vsyncadd [#allocation9], 0
      %s62 = sshll.u32 %s3, 4
      %s63 = int_to_ptr.hbm [resolvable:$true] %s62
      %s64 = sshll.u32 [#allocation8], 4
      %s65 = int_to_ptr.vmem [resolvable:$true] %s64
      %70 = dma.hbm_to_vmem [thread:$0]  %s63, 65536, %s65, [#allocation9], 1024, 1024, 64
    $region17: #{tpu_custom_call.1} parent=1 // pred_fallthru
      _
    // Predicated region
    $region18: #{tpu_custom_call.1} parent=1 // pred_check
      _
    $region19: #{tpu_custom_call.1} parent=1 // pred_check_branch
      %72 = sbr.rel (0) target = $region21
    $region20: #{tpu_custom_call.1} parent=1 // pred_region
      %74 = vsyncadd [#allocation9], 0
      %s76 = sshll.u32 %s4, 4
      %s77 = int_to_ptr.hbm [resolvable:$true] %s76
      %s78 = sshll.u32 [#allocation10], 4
      %s79 = int_to_ptr.vmem [resolvable:$true] %s78
      %81 = dma.hbm_to_vmem [thread:$0]  %s77, 128, %s79, [#allocation9]
    $region21: #{tpu_custom_call.1} parent=1 // pred_fallthru
      _
    // Predicated region
    $region22: #{tpu_custom_call.1} parent=1 // pred_check
      _
    $region23: #{tpu_custom_call.1} parent=1 // pred_check_branch
      %83 = sbr.rel (0) target = $region25
    $region24: #{tpu_custom_call.1} parent=1 // pred_region
      %85 = vsyncadd [#allocation12], 0
      %s86 = sshll.u32 %s5, 4
      %s87 = int_to_ptr.hbm [resolvable:$true] %s86
      %s88 = sshll.u32 [#allocation11], 4
      %s89 = int_to_ptr.vmem [resolvable:$true] %s88
      %94 = dma.hbm_to_vmem [thread:$0]  %s87, 131072, %s89, [#allocation12], 1024, 1024, 64
    $region25: #{tpu_custom_call.1} parent=1 // pred_fallthru
      _
    // Predicated region
    $region26: #{tpu_custom_call.1} parent=1 // pred_check
      _
    $region27: #{tpu_custom_call.1} parent=1 // pred_check_branch
      %96 = sbr.rel (0) target = $region29
    $region28: #{tpu_custom_call.1} parent=1 // pred_region
      %98 = vsyncadd [#allocation12], 0
      %s100 = sshll.u32 %s6, 4
      %s101 = int_to_ptr.hbm [resolvable:$true] %s100
      %s102 = sshll.u32 [#allocation13], 4
      %s103 = int_to_ptr.vmem [resolvable:$true] %s102
      %105 = dma.hbm_to_vmem [thread:$0]  %s101, 128, %s103, [#allocation12]
    $region29: #{tpu_custom_call.1} parent=1 // pred_fallthru
      _
    // Predicated region
    $region30: #{tpu_custom_call.1} parent=1 // pred_check
      _
    $region31: #{tpu_custom_call.1} parent=1 // pred_check_branch
      %107 = sbr.rel (0) target = $region33
    $region32: #{tpu_custom_call.1} parent=1 // pred_region
      %109 = vsyncadd [#allocation15], 0
      %s110 = sshll.u32 %s7, 4
      %s111 = int_to_ptr.hbm [resolvable:$true] %s110
      %s112 = sshll.u32 [#allocation14], 4
      %s113 = int_to_ptr.vmem [resolvable:$true] %s112
      %118 = dma.hbm_to_vmem [thread:$0]  %s111, 16384, %s113, [#allocation15], 128, 128, 8
    $region33: #{tpu_custom_call.1} parent=1 // pred_fallthru
      _
    // Predicated region
    $region34: #{tpu_custom_call.1} parent=1 // pred_check
      _
    $region35: #{tpu_custom_call.1} parent=1 // pred_check_branch
      %120 = sbr.rel (0) target = $region37
    $region36: #{tpu_custom_call.1} parent=1 // pred_region
      %122 = vsyncadd [#allocation15], 0
      %s124 = sshll.u32 %s8, 4
      %s125 = int_to_ptr.hbm [resolvable:$true] %s124
      %s126 = sshll.u32 [#allocation16], 4
      %s127 = int_to_ptr.vmem [resolvable:$true] %s126
      %129 = dma.hbm_to_vmem [thread:$0]  %s125, 16, %s127, [#allocation15]
    $region37: #{tpu_custom_call.1} parent=1 // pred_fallthru
      _
    // Predicated region
    $region38: #{tpu_custom_call.1} parent=1 // pred_check
      _
    $region39: #{tpu_custom_call.1} parent=1 // pred_check_branch
      %131 = sbr.rel (0) target = $region41
    $region40: #{tpu_custom_call.1} parent=1 // pred_region
      %133 = vsyncadd [#allocation18], 0
      %s134 = sshll.u32 %s9, 4
      %s135 = int_to_ptr.hbm [resolvable:$true] %s134
      %s136 = sshll.u32 [#allocation17], 4
      %s137 = int_to_ptr.vmem [resolvable:$true] %s136
      %142 = dma.hbm_to_vmem [thread:$0]  %s135, 2048, %s137, [#allocation18], 128, 128, 8
    $region41: #{tpu_custom_call.1} parent=1 // pred_fallthru
      _
    // Predicated region
    $region42: #{tpu_custom_call.1} parent=1 // pred_check
      _
    $region43: #{tpu_custom_call.1} parent=1 // pred_check_branch
      %144 = sbr.rel (0) target = $region45
    $region44: #{tpu_custom_call.1} parent=1 // pred_region
      %146 = vsyncadd [#allocation18], 0
      %s148 = sshll.u32 %s10, 4
      %s149 = int_to_ptr.hbm [resolvable:$true] %s148
      %s150 = sshll.u32 [#allocation19], 4
      %s151 = int_to_ptr.vmem [resolvable:$true] %s150
      %153 = dma.hbm_to_vmem [thread:$0]  %s149, 16, %s151, [#allocation18]
    $region45: #{tpu_custom_call.1} parent=1 // pred_fallthru
      _
    // Predicated region
    $region46: #{tpu_custom_call.1} parent=1 // pred_check
      _
    $region47: #{tpu_custom_call.1} parent=1 // pred_check_branch
      %155 = sbr.rel (0) target = $region49
    $region48: #{tpu_custom_call.1} parent=1 // pred_region
      %157 = dma.done [#allocation3], 128
    $region49: #{tpu_custom_call.1} parent=1 // pred_fallthru
      _
    // Predicated region
    $region50: #{tpu_custom_call.1} parent=1 // pred_check
      _
    $region51: #{tpu_custom_call.1} parent=1 // pred_check_branch
      %159 = sbr.rel (0) target = $region53
    $region52: #{tpu_custom_call.1} parent=1 // pred_region
      %161 = dma.done [#allocation6], 1024
    $region53: #{tpu_custom_call.1} parent=1 // pred_fallthru
      _
    // Predicated region
    $region54: #{tpu_custom_call.1} parent=1 // pred_check
      _
    $region55: #{tpu_custom_call.1} parent=1 // pred_check_branch
      %163 = sbr.rel (0) target = $region57
    $region56: #{tpu_custom_call.1} parent=1 // pred_region
      %165 = dma.done [#allocation6], 64
    $region57: #{tpu_custom_call.1} parent=1 // pred_fallthru
      _
    // Predicated region
    $region58: #{tpu_custom_call.1} parent=1 // pred_check
      _
    $region59: #{tpu_custom_call.1} parent=1 // pred_check_branch
      %167 = sbr.rel (0) target = $region61
    $region60: #{tpu_custom_call.1} parent=1 // pred_region
      %169 = dma.done [#allocation9], 65536
    $region61: #{tpu_custom_call.1} parent=1 // pred_fallthru
      _
    // Predicated region
    $region62: #{tpu_custom_call.1} parent=1 // pred_check
      _
    $region63: #{tpu_custom_call.1} parent=1 // pred_check_branch
      %171 = sbr.rel (0) target = $region65
    $region64: #{tpu_custom_call.1} parent=1 // pred_region
      %173 = dma.done [#allocation9], 128
    $region65: #{tpu_custom_call.1} parent=1 // pred_fallthru
      _
    // Predicated region
    $region66: #{tpu_custom_call.1} parent=1 // pred_check
      _
    $region67: #{tpu_custom_call.1} parent=1 // pred_check_branch
      %175 = sbr.rel (0) target = $region69
    $region68: #{tpu_custom_call.1} parent=1 // pred_region
      %177 = dma.done [#allocation12], 131072
    $region69: #{tpu_custom_call.1} parent=1 // pred_fallthru
      _
    // Predicated region
    $region70: #{tpu_custom_call.1} parent=1 // pred_check
      _
    $region71: #{tpu_custom_call.1} parent=1 // pred_check_branch
      %179 = sbr.rel (0) target = $region73
    $region72: #{tpu_custom_call.1} parent=1 // pred_region
      %181 = dma.done [#allocation12], 128
    $region73: #{tpu_custom_call.1} parent=1 // pred_fallthru
      _
    // Predicated region
    $region74: #{tpu_custom_call.1} parent=1 // pred_check
      _
    $region75: #{tpu_custom_call.1} parent=1 // pred_check_branch
      %183 = sbr.rel (0) target = $region77
    $region76: #{tpu_custom_call.1} parent=1 // pred_region
      %185 = dma.done [#allocation15], 16384
    $region77: #{tpu_custom_call.1} parent=1 // pred_fallthru
      _
    // Predicated region
    $region78: #{tpu_custom_call.1} parent=1 // pred_check
      _
    $region79: #{tpu_custom_call.1} parent=1 // pred_check_branch
      %187 = sbr.rel (0) target = $region81
    $region80: #{tpu_custom_call.1} parent=1 // pred_region
      %189 = dma.done [#allocation15], 16
    $region81: #{tpu_custom_call.1} parent=1 // pred_fallthru
      _
    // Predicated region
    $region82: #{tpu_custom_call.1} parent=1 // pred_check
      _
    $region83: #{tpu_custom_call.1} parent=1 // pred_check_branch
      %191 = sbr.rel (0) target = $region85
    $region84: #{tpu_custom_call.1} parent=1 // pred_region
      %193 = dma.done [#allocation18], 2048
    $region85: #{tpu_custom_call.1} parent=1 // pred_fallthru
      _
    // Predicated region
    $region86: #{tpu_custom_call.1} parent=1 // pred_check
      _
    $region87: #{tpu_custom_call.1} parent=1 // pred_check_branch
      %195 = sbr.rel (0) target = $region89
    $region88: #{tpu_custom_call.1} parent=1 // pred_region
      %197 = dma.done [#allocation18], 16
    $region89: #{tpu_custom_call.1} parent=1 // pred_fallthru
      _
    %v198 = vld [vmem:[#allocation2] sm:$0xff]
    %v199 = vld [vmem:[#allocation5] sm:$0xff]
    %v200 = vld [vmem:[#allocation5 + $0x8] sm:$0xff]
    %v201 = vld [vmem:[#allocation5 + $0x10] sm:$0xff]
    %v202 = vld [vmem:[#allocation5 + $0x18] sm:$0xff]
    %v203 = vld [vmem:[#allocation5 + $0x20] sm:$0xff]
    %v204 = vld [vmem:[#allocation5 + $0x28] sm:$0xff]
    %v205 = vld [vmem:[#allocation5 + $0x30] sm:$0xff]
    %v206 = vld [vmem:[#allocation5 + $0x38] sm:$0xff]
    %v207 = vld [vmem:[#allocation7] sm:$0xf]
    %v209 = vperm.slane %v207, 0
    %v210 = vperm.slane %v207, 1
    %v211 = vperm.slane %v207, 2
    %v212 = vperm.slane %v207, 3
    %vm217 = vcmask 130048
    %v219 = vsel %vm217, %v198, 0
    %221 = vmatpush.msra.mxu0 0.0
    %222 = vmatpush.msra.mxu0 0.0
    %223 = vmatpush.msra.mxu0 0.0
    %224 = vmatpush.msra.mxu0 0.0
    %225 = vmatpush.msra.mxu0 0.0
    %226 = vmatpush.msra.mxu0 0.0
    %227 = vmatpush.msra.mxu0 0.0
    %228 = vmatpush.msra.mxu0 0.0
    %229 = vmatpush.msra.mxu0 0.0
    %230 = vmatpush.msra.mxu0 0.0
    %231 = vmatpush.msra.mxu0 0.0
    %232 = vmatpush.msra.mxu0 0.0
    %233 = vmatpush.msra.mxu0 0.0
    %234 = vmatpush.msra.mxu0 0.0
    %235 = vmatpush.msra.mxu0 %v203
    %236 = vmatpush.msra.mxu0 %v199
    %237 = vmatmul.f32.gmra.mxu0 %v219
    %v238 = vpop.f32.mrf.mxu0
    %v239 = vadd.f32 %v209, %v238
    %240 = vdwg.mxu0
    %241 = vmatpush.msra.mxu0 0.0
    %242 = vmatpush.msra.mxu0 0.0
    %243 = vmatpush.msra.mxu0 0.0
    %244 = vmatpush.msra.mxu0 0.0
    %245 = vmatpush.msra.mxu0 0.0
    %246 = vmatpush.msra.mxu0 0.0
    %247 = vmatpush.msra.mxu0 0.0
    %248 = vmatpush.msra.mxu0 0.0
    %249 = vmatpush.msra.mxu0 0.0
    %250 = vmatpush.msra.mxu0 0.0
    %251 = vmatpush.msra.mxu0 0.0
    %252 = vmatpush.msra.mxu0 0.0
    %253 = vmatpush.msra.mxu0 0.0
    %254 = vmatpush.msra.mxu0 0.0
    %255 = vmatpush.msra.mxu0 %v204
    %256 = vmatpush.msra.mxu0 %v200
    %257 = vmatmul.f32.gmra.mxu0 %v219
    %v258 = vpop.f32.mrf.mxu0
    %v259 = vadd.f32 %v210, %v258
    %260 = vdwg.mxu0
    %261 = vmatpush.msra.mxu0 0.0
    %262 = vmatpush.msra.mxu0 0.0
    %263 = vmatpush.msra.mxu0 0.0
    %264 = vmatpush.msra.mxu0 0.0
    %265 = vmatpush.msra.mxu0 0.0
    %266 = vmatpush.msra.mxu0 0.0
    %267 = vmatpush.msra.mxu0 0.0
    %268 = vmatpush.msra.mxu0 0.0
    %269 = vmatpush.msra.mxu0 0.0
    %270 = vmatpush.msra.mxu0 0.0
    %271 = vmatpush.msra.mxu0 0.0
    %272 = vmatpush.msra.mxu0 0.0
    %273 = vmatpush.msra.mxu0 0.0
    %274 = vmatpush.msra.mxu0 0.0
    %275 = vmatpush.msra.mxu0 %v205
    %276 = vmatpush.msra.mxu0 %v201
    %277 = vmatmul.f32.gmra.mxu0 %v219
    %v278 = vpop.f32.mrf.mxu0
    %v279 = vadd.f32 %v211, %v278
    %280 = vdwg.mxu0
    %281 = vmatpush.msra.mxu0 0.0
    %282 = vmatpush.msra.mxu0 0.0
    %283 = vmatpush.msra.mxu0 0.0
    %284 = vmatpush.msra.mxu0 0.0
    %285 = vmatpush.msra.mxu0 0.0
    %286 = vmatpush.msra.mxu0 0.0
    %287 = vmatpush.msra.mxu0 0.0
    %288 = vmatpush.msra.mxu0 0.0
    %289 = vmatpush.msra.mxu0 0.0
    %290 = vmatpush.msra.mxu0 0.0
    %291 = vmatpush.msra.mxu0 0.0
    %292 = vmatpush.msra.mxu0 0.0
    %293 = vmatpush.msra.mxu0 0.0
    %294 = vmatpush.msra.mxu0 0.0
    %295 = vmatpush.msra.mxu0 %v206
    %296 = vmatpush.msra.mxu0 %v202
    %297 = vmatmul.f32.gmra.mxu0 %v219
    %v298 = vpop.f32.mrf.mxu0
    %v299 = vadd.f32 %v212, %v298
    %300 = vdwg.mxu0
    %v301 = vmax.f32 %v239, 0.0
    %v302 = vmax.f32 %v259, 0.0
    %v303 = vmax.f32 %v279, 0.0
    %v304 = vmax.f32 %v299, 0.0
    %v305 = vld [vmem:[#allocation8] sm:$0xff]
    %v306 = vld [vmem:[#allocation8 + $0x8] sm:$0xff]
    %v307 = vld [vmem:[#allocation8 + $0x10] sm:$0xff]
    %v308 = vld [vmem:[#allocation8 + $0x18] sm:$0xff]
    %v309 = vld [vmem:[#allocation8 + $0x20] sm:$0xff]
    %v310 = vld [vmem:[#allocation8 + $0x28] sm:$0xff]
    %v311 = vld [vmem:[#allocation8 + $0x30] sm:$0xff]
    %v312 = vld [vmem:[#allocation8 + $0x38] sm:$0xff]
    %v313 = vld [vmem:[#allocation8 + $0x40] sm:$0xff]
    %v314 = vld [vmem:[#allocation8 + $0x48] sm:$0xff]
    %v315 = vld [vmem:[#allocation8 + $0x50] sm:$0xff]
    %v316 = vld [vmem:[#allocation8 + $0x58] sm:$0xff]
    %v317 = vld [vmem:[#allocation8 + $0x60] sm:$0xff]
    %v318 = vld [vmem:[#allocation8 + $0x68] sm:$0xff]
    %v319 = vld [vmem:[#allocation8 + $0x70] sm:$0xff]
    %v320 = vld [vmem:[#allocation8 + $0x78] sm:$0xff]
    %v321 = vld [vmem:[#allocation8 + $0x80] sm:$0xff]
    %v322 = vld [vmem:[#allocation8 + $0x88] sm:$0xff]
    %v323 = vld [vmem:[#allocation8 + $0x90] sm:$0xff]
    %v324 = vld [vmem:[#allocation8 + $0x98] sm:$0xff]
    %v325 = vld [vmem:[#allocation8 + $0xa0] sm:$0xff]
    %v326 = vld [vmem:[#allocation8 + $0xa8] sm:$0xff]
    %v327 = vld [vmem:[#allocation8 + $0xb0] sm:$0xff]
    %v328 = vld [vmem:[#allocation8 + $0xb8] sm:$0xff]
    %v329 = vld [vmem:[#allocation8 + $0xc0] sm:$0xff]
    %v330 = vld [vmem:[#allocation8 + $0xc8] sm:$0xff]
    %v331 = vld [vmem:[#allocation8 + $0xd0] sm:$0xff]
    %v332 = vld [vmem:[#allocation8 + $0xd8] sm:$0xff]
    %v333 = vld [vmem:[#allocation8 + $0xe0] sm:$0xff]
    %v334 = vld [vmem:[#allocation8 + $0xe8] sm:$0xff]
    %v335 = vld [vmem:[#allocation8 + $0xf0] sm:$0xff]
    %v336 = vld [vmem:[#allocation8 + $0xf8] sm:$0xff]
    %v337 = vld [vmem:[#allocation8 + $0x100] sm:$0xff]
    %v338 = vld [vmem:[#allocation8 + $0x108] sm:$0xff]
    %v339 = vld [vmem:[#allocation8 + $0x110] sm:$0xff]
    %v340 = vld [vmem:[#allocation8 + $0x118] sm:$0xff]
    %v341 = vld [vmem:[#allocation8 + $0x120] sm:$0xff]
    %v342 = vld [vmem:[#allocation8 + $0x128] sm:$0xff]
    %v343 = vld [vmem:[#allocation8 + $0x130] sm:$0xff]
    %v344 = vld [vmem:[#allocation8 + $0x138] sm:$0xff]
    %v345 = vld [vmem:[#allocation8 + $0x140] sm:$0xff]
    %v346 = vld [vmem:[#allocation8 + $0x148] sm:$0xff]
    %v347 = vld [vmem:[#allocation8 + $0x150] sm:$0xff]
    %v348 = vld [vmem:[#allocation8 + $0x158] sm:$0xff]
    %v349 = vld [vmem:[#allocation8 + $0x160] sm:$0xff]
    %v350 = vld [vmem:[#allocation8 + $0x168] sm:$0xff]
    %v351 = vld [vmem:[#allocation8 + $0x170] sm:$0xff]
    %v352 = vld [vmem:[#allocation8 + $0x178] sm:$0xff]
    %v353 = vld [vmem:[#allocation8 + $0x180] sm:$0xff]
    %v354 = vld [vmem:[#allocation8 + $0x188] sm:$0xff]
    %v355 = vld [vmem:[#allocation8 + $0x190] sm:$0xff]
    %v356 = vld [vmem:[#allocation8 + $0x198] sm:$0xff]
    %v357 = vld [vmem:[#allocation8 + $0x1a0] sm:$0xff]
    %v358 = vld [vmem:[#allocation8 + $0x1a8] sm:$0xff]
    %v359 = vld [vmem:[#allocation8 + $0x1b0] sm:$0xff]
    %v360 = vld [vmem:[#allocation8 + $0x1b8] sm:$0xff]
    %v361 = vld [vmem:[#allocation8 + $0x1c0] sm:$0xff]
    %v362 = vld [vmem:[#allocation8 + $0x1c8] sm:$0xff]
    %v363 = vld [vmem:[#allocation8 + $0x1d0] sm:$0xff]
    %v364 = vld [vmem:[#allocation8 + $0x1d8] sm:$0xff]
    %v365 = vld [vmem:[#allocation8 + $0x1e0] sm:$0xff]
    %v366 = vld [vmem:[#allocation8 + $0x1e8] sm:$0xff]
    %v367 = vld [vmem:[#allocation8 + $0x1f0] sm:$0xff]
    %v368 = vld [vmem:[#allocation8 + $0x1f8] sm:$0xff]
    %v369 = vld [vmem:[#allocation8 + $0x200] sm:$0xff]
    %v370 = vld [vmem:[#allocation8 + $0x208] sm:$0xff]
    %v371 = vld [vmem:[#allocation8 + $0x210] sm:$0xff]
    %v372 = vld [vmem:[#allocation8 + $0x218] sm:$0xff]
    %v373 = vld [vmem:[#allocation8 + $0x220] sm:$0xff]
    %v374 = vld [vmem:[#allocation8 + $0x228] sm:$0xff]
    %v375 = vld [vmem:[#allocation8 + $0x230] sm:$0xff]
    %v376 = vld [vmem:[#allocation8 + $0x238] sm:$0xff]
    %v377 = vld [vmem:[#allocation8 + $0x240] sm:$0xff]
    %v378 = vld [vmem:[#allocation8 + $0x248] sm:$0xff]
    %v379 = vld [vmem:[#allocation8 + $0x250] sm:$0xff]
    %v380 = vld [vmem:[#allocation8 + $0x258] sm:$0xff]
    %v381 = vld [vmem:[#allocation8 + $0x260] sm:$0xff]
    %v382 = vld [vmem:[#allocation8 + $0x268] sm:$0xff]
    %v383 = vld [vmem:[#allocation8 + $0x270] sm:$0xff]
    %v384 = vld [vmem:[#allocation8 + $0x278] sm:$0xff]
    %v385 = vld [vmem:[#allocation8 + $0x280] sm:$0xff]
    %v386 = vld [vmem:[#allocation8 + $0x288] sm:$0xff]
    %v387 = vld [vmem:[#allocation8 + $0x290] sm:$0xff]
    %v388 = vld [vmem:[#allocation8 + $0x298] sm:$0xff]
    %v389 = vld [vmem:[#allocation8 + $0x2a0] sm:$0xff]
    %v390 = vld [vmem:[#allocation8 + $0x2a8] sm:$0xff]
    %v391 = vld [vmem:[#allocation8 + $0x2b0] sm:$0xff]
    %v392 = vld [vmem:[#allocation8 + $0x2b8] sm:$0xff]
    %v393 = vld [vmem:[#allocation8 + $0x2c0] sm:$0xff]
    %v394 = vld [vmem:[#allocation8 + $0x2c8] sm:$0xff]
    %v395 = vld [vmem:[#allocation8 + $0x2d0] sm:$0xff]
    %v396 = vld [vmem:[#allocation8 + $0x2d8] sm:$0xff]
    %v397 = vld [vmem:[#allocation8 + $0x2e0] sm:$0xff]
    %v398 = vld [vmem:[#allocation8 + $0x2e8] sm:$0xff]
    %v399 = vld [vmem:[#allocation8 + $0x2f0] sm:$0xff]
    %v400 = vld [vmem:[#allocation8 + $0x2f8] sm:$0xff]
    %v401 = vld [vmem:[#allocation8 + $0x300] sm:$0xff]
    %v402 = vld [vmem:[#allocation8 + $0x308] sm:$0xff]
    %v403 = vld [vmem:[#allocation8 + $0x310] sm:$0xff]
    %v404 = vld [vmem:[#allocation8 + $0x318] sm:$0xff]
    %v405 = vld [vmem:[#allocation8 + $0x320] sm:$0xff]
    %v406 = vld [vmem:[#allocation8 + $0x328] sm:$0xff]
    %v407 = vld [vmem:[#allocation8 + $0x330] sm:$0xff]
    %v408 = vld [vmem:[#allocation8 + $0x338] sm:$0xff]
    %v409 = vld [vmem:[#allocation8 + $0x340] sm:$0xff]
    %v410 = vld [vmem:[#allocation8 + $0x348] sm:$0xff]
    %v411 = vld [vmem:[#allocation8 + $0x350] sm:$0xff]
    %v412 = vld [vmem:[#allocation8 + $0x358] sm:$0xff]
    %v413 = vld [vmem:[#allocation8 + $0x360] sm:$0xff]
    %v414 = vld [vmem:[#allocation8 + $0x368] sm:$0xff]
    %v415 = vld [vmem:[#allocation8 + $0x370] sm:$0xff]
    %v416 = vld [vmem:[#allocation8 + $0x378] sm:$0xff]
    %v417 = vld [vmem:[#allocation8 + $0x380] sm:$0xff]
    %v418 = vld [vmem:[#allocation8 + $0x388] sm:$0xff]
    %v419 = vld [vmem:[#allocation8 + $0x390] sm:$0xff]
    %v420 = vld [vmem:[#allocation8 + $0x398] sm:$0xff]
    %v421 = vld [vmem:[#allocation8 + $0x3a0] sm:$0xff]
    %v422 = vld [vmem:[#allocation8 + $0x3a8] sm:$0xff]
    %v423 = vld [vmem:[#allocation8 + $0x3b0] sm:$0xff]
    %v424 = vld [vmem:[#allocation8 + $0x3b8] sm:$0xff]
    %v425 = vld [vmem:[#allocation8 + $0x3c0] sm:$0xff]
    %v426 = vld [vmem:[#allocation8 + $0x3c8] sm:$0xff]
    %v427 = vld [vmem:[#allocation8 + $0x3d0] sm:$0xff]
    %v428 = vld [vmem:[#allocation8 + $0x3d8] sm:$0xff]
    %v429 = vld [vmem:[#allocation8 + $0x3e0] sm:$0xff]
    %v430 = vld [vmem:[#allocation8 + $0x3e8] sm:$0xff]
    %v431 = vld [vmem:[#allocation8 + $0x3f0] sm:$0xff]
    %v432 = vld [vmem:[#allocation8 + $0x3f8] sm:$0xff]
    %v433 = vld [vmem:[#allocation8 + $0x400] sm:$0xff]
    %v434 = vld [vmem:[#allocation8 + $0x408] sm:$0xff]
    %v435 = vld [vmem:[#allocation8 + $0x410] sm:$0xff]
    %v436 = vld [vmem:[#allocation8 + $0x418] sm:$0xff]
    %v437 = vld [vmem:[#allocation8 + $0x420] sm:$0xff]
    %v438 = vld [vmem:[#allocation8 + $0x428] sm:$0xff]
    %v439 = vld [vmem:[#allocation8 + $0x430] sm:$0xff]
    %v440 = vld [vmem:[#allocation8 + $0x438] sm:$0xff]
    %v441 = vld [vmem:[#allocation8 + $0x440] sm:$0xff]
    %v442 = vld [vmem:[#allocation8 + $0x448] sm:$0xff]
    %v443 = vld [vmem:[#allocation8 + $0x450] sm:$0xff]
    %v444 = vld [vmem:[#allocation8 + $0x458] sm:$0xff]
    %v445 = vld [vmem:[#allocation8 + $0x460] sm:$0xff]
    %v446 = vld [vmem:[#allocation8 + $0x468] sm:$0xff]
    %v447 = vld [vmem:[#allocation8 + $0x470] sm:$0xff]
    %v448 = vld [vmem:[#allocation8 + $0x478] sm:$0xff]
    %v449 = vld [vmem:[#allocation8 + $0x480] sm:$0xff]
    %v450 = vld [vmem:[#allocation8 + $0x488] sm:$0xff]
    %v451 = vld [vmem:[#allocation8 + $0x490] sm:$0xff]
    %v452 = vld [vmem:[#allocation8 + $0x498] sm:$0xff]
    %v453 = vld [vmem:[#allocation8 + $0x4a0] sm:$0xff]
    %v454 = vld [vmem:[#allocation8 + $0x4a8] sm:$0xff]
    %v455 = vld [vmem:[#allocation8 + $0x4b0] sm:$0xff]
    %v456 = vld [vmem:[#allocation8 + $0x4b8] sm:$0xff]
    %v457 = vld [vmem:[#allocation8 + $0x4c0] sm:$0xff]
    %v458 = vld [vmem:[#allocation8 + $0x4c8] sm:$0xff]
    %v459 = vld [vmem:[#allocation8 + $0x4d0] sm:$0xff]
    %v460 = vld [vmem:[#allocation8 + $0x4d8] sm:$0xff]
    %v461 = vld [vmem:[#allocation8 + $0x4e0] sm:$0xff]
    %v462 = vld [vmem:[#allocation8 + $0x4e8] sm:$0xff]
    %v463 = vld [vmem:[#allocation8 + $0x4f0] sm:$0xff]
    %v464 = vld [vmem:[#allocation8 + $0x4f8] sm:$0xff]
    %v465 = vld [vmem:[#allocation8 + $0x500] sm:$0xff]
    %v466 = vld [vmem:[#allocation8 + $0x508] sm:$0xff]
    %v467 = vld [vmem:[#allocation8 + $0x510] sm:$0xff]
    %v468 = vld [vmem:[#allocation8 + $0x518] sm:$0xff]
    %v469 = vld [vmem:[#allocation8 + $0x520] sm:$0xff]
    %v470 = vld [vmem:[#allocation8 + $0x528] sm:$0xff]
    %v471 = vld [vmem:[#allocation8 + $0x530] sm:$0xff]
    %v472 = vld [vmem:[#allocation8 + $0x538] sm:$0xff]
    %v473 = vld [vmem:[#allocation8 + $0x540] sm:$0xff]
    %v474 = vld [vmem:[#allocation8 + $0x548] sm:$0xff]
    %v475 = vld [vmem:[#allocation8 + $0x550] sm:$0xff]
    %v476 = vld [vmem:[#allocation8 + $0x558] sm:$0xff]
    %v477 = vld [vmem:[#allocation8 + $0x560] sm:$0xff]
    %v478 = vld [vmem:[#allocation8 + $0x568] sm:$0xff]
    %v479 = vld [vmem:[#allocation8 + $0x570] sm:$0xff]
    %v480 = vld [vmem:[#allocation8 + $0x578] sm:$0xff]
    %v481 = vld [vmem:[#allocation8 + $0x580] sm:$0xff]
    %v482 = vld [vmem:[#allocation8 + $0x588] sm:$0xff]
    %v483 = vld [vmem:[#allocation8 + $0x590] sm:$0xff]
    %v484 = vld [vmem:[#allocation8 + $0x598] sm:$0xff]
    %v485 = vld [vmem:[#allocation8 + $0x5a0] sm:$0xff]
    %v486 = vld [vmem:[#allocation8 + $0x5a8] sm:$0xff]
    %v487 = vld [vmem:[#allocation8 + $0x5b0] sm:$0xff]
    %v488 = vld [vmem:[#allocation8 + $0x5b8] sm:$0xff]
    %v489 = vld [vmem:[#allocation8 + $0x5c0] sm:$0xff]
    %v490 = vld [vmem:[#allocation8 + $0x5c8] sm:$0xff]
    %v491 = vld [vmem:[#allocation8 + $0x5d0] sm:$0xff]
    %v492 = vld [vmem:[#allocation8 + $0x5d8] sm:$0xff]
    %v493 = vld [vmem:[#allocation8 + $0x5e0] sm:$0xff]
    %v494 = vld [vmem:[#allocation8 + $0x5e8] sm:$0xff]
    %v495 = vld [vmem:[#allocation8 + $0x5f0] sm:$0xff]
    %v496 = vld [vmem:[#allocation8 + $0x5f8] sm:$0xff]
    %v497 = vld [vmem:[#allocation8 + $0x600] sm:$0xff]
    %v498 = vld [vmem:[#allocation8 + $0x608] sm:$0xff]
    %v499 = vld [vmem:[#allocation8 + $0x610] sm:$0xff]
    %v500 = vld [vmem:[#allocation8 + $0x618] sm:$0xff]
    %v501 = vld [vmem:[#allocation8 + $0x620] sm:$0xff]
    %v502 = vld [vmem:[#allocation8 + $0x628] sm:$0xff]
    %v503 = vld [vmem:[#allocation8 + $0x630] sm:$0xff]
    %v504 = vld [vmem:[#allocation8 + $0x638] sm:$0xff]
    %v505 = vld [vmem:[#allocation8 + $0x640] sm:$0xff]
    %v506 = vld [vmem:[#allocation8 + $0x648] sm:$0xff]
    %v507 = vld [vmem:[#allocation8 + $0x650] sm:$0xff]
    %v508 = vld [vmem:[#allocation8 + $0x658] sm:$0xff]
    %v509 = vld [vmem:[#allocation8 + $0x660] sm:$0xff]
    %v510 = vld [vmem:[#allocation8 + $0x668] sm:$0xff]
    %v511 = vld [vmem:[#allocation8 + $0x670] sm:$0xff]
    %v512 = vld [vmem:[#allocation8 + $0x678] sm:$0xff]
    %v513 = vld [vmem:[#allocation8 + $0x680] sm:$0xff]
    %v514 = vld [vmem:[#allocation8 + $0x688] sm:$0xff]
    %v515 = vld [vmem:[#allocation8 + $0x690] sm:$0xff]
    %v516 = vld [vmem:[#allocation8 + $0x698] sm:$0xff]
    %v517 = vld [vmem:[#allocation8 + $0x6a0] sm:$0xff]
    %v518 = vld [vmem:[#allocation8 + $0x6a8] sm:$0xff]
    %v519 = vld [vmem:[#allocation8 + $0x6b0] sm:$0xff]
    %v520 = vld [vmem:[#allocation8 + $0x6b8] sm:$0xff]
    %v521 = vld [vmem:[#allocation8 + $0x6c0] sm:$0xff]
    %v522 = vld [vmem:[#allocation8 + $0x6c8] sm:$0xff]
    %v523 = vld [vmem:[#allocation8 + $0x6d0] sm:$0xff]
    %v524 = vld [vmem:[#allocation8 + $0x6d8] sm:$0xff]
    %v525 = vld [vmem:[#allocation8 + $0x6e0] sm:$0xff]
    %v526 = vld [vmem:[#allocation8 + $0x6e8] sm:$0xff]
    %v527 = vld [vmem:[#allocation8 + $0x6f0] sm:$0xff]
    %v528 = vld [vmem:[#allocation8 + $0x6f8] sm:$0xff]
    %v529 = vld [vmem:[#allocation8 + $0x700] sm:$0xff]
    %v530 = vld [vmem:[#allocation8 + $0x708] sm:$0xff]
    %v531 = vld [vmem:[#allocation8 + $0x710] sm:$0xff]
    %v532 = vld [vmem:[#allocation8 + $0x718] sm:$0xff]
    %v533 = vld [vmem:[#allocation8 + $0x720] sm:$0xff]
    %v534 = vld [vmem:[#allocation8 + $0x728] sm:$0xff]
    %v535 = vld [vmem:[#allocation8 + $0x730] sm:$0xff]
    %v536 = vld [vmem:[#allocation8 + $0x738] sm:$0xff]
    %v537 = vld [vmem:[#allocation8 + $0x740] sm:$0xff]
    %v538 = vld [vmem:[#allocation8 + $0x748] sm:$0xff]
    %v539 = vld [vmem:[#allocation8 + $0x750] sm:$0xff]
    %v540 = vld [vmem:[#allocation8 + $0x758] sm:$0xff]
    %v541 = vld [vmem:[#allocation8 + $0x760] sm:$0xff]
    %v542 = vld [vmem:[#allocation8 + $0x768] sm:$0xff]
    %v543 = vld [vmem:[#allocation8 + $0x770] sm:$0xff]
    %v544 = vld [vmem:[#allocation8 + $0x778] sm:$0xff]
    %v545 = vld [vmem:[#allocation8 + $0x780] sm:$0xff]
    %v546 = vld [vmem:[#allocation8 + $0x788] sm:$0xff]
    %v547 = vld [vmem:[#allocation8 + $0x790] sm:$0xff]
    %v548 = vld [vmem:[#allocation8 + $0x798] sm:$0xff]
    %v549 = vld [vmem:[#allocation8 + $0x7a0] sm:$0xff]
    %v550 = vld [vmem:[#allocation8 + $0x7a8] sm:$0xff]
    %v551 = vld [vmem:[#allocation8 + $0x7b0] sm:$0xff]
    %v552 = vld [vmem:[#allocation8 + $0x7b8] sm:$0xff]
    %v553 = vld [vmem:[#allocation8 + $0x7c0] sm:$0xff]
    %v554 = vld [vmem:[#allocation8 + $0x7c8] sm:$0xff]
    %v555 = vld [vmem:[#allocation8 + $0x7d0] sm:$0xff]
    %v556 = vld [vmem:[#allocation8 + $0x7d8] sm:$0xff]
    %v557 = vld [vmem:[#allocation8 + $0x7e0] sm:$0xff]
    %v558 = vld [vmem:[#allocation8 + $0x7e8] sm:$0xff]
    %v559 = vld [vmem:[#allocation8 + $0x7f0] sm:$0xff]
    %v560 = vld [vmem:[#allocation8 + $0x7f8] sm:$0xff]
    %v561 = vld [vmem:[#allocation8 + $0x800] sm:$0xff]
    %v562 = vld [vmem:[#allocation8 + $0x808] sm:$0xff]
    %v563 = vld [vmem:[#allocation8 + $0x810] sm:$0xff]
    %v564 = vld [vmem:[#allocation8 + $0x818] sm:$0xff]
    %v565 = vld [vmem:[#allocation8 + $0x820] sm:$0xff]
    %v566 = vld [vmem:[#allocation8 + $0x828] sm:$0xff]
    %v567 = vld [vmem:[#allocation8 + $0x830] sm:$0xff]
    %v568 = vld [vmem:[#allocation8 + $0x838] sm:$0xff]
    %v569 = vld [vmem:[#allocation8 + $0x840] sm:$0xff]
    %v570 = vld [vmem:[#allocation8 + $0x848] sm:$0xff]
    %v571 = vld [vmem:[#allocation8 + $0x850] sm:$0xff]
    %v572 = vld [vmem:[#allocation8 + $0x858] sm:$0xff]
    %v573 = vld [vmem:[#allocation8 + $0x860] sm:$0xff]
    %v574 = vld [vmem:[#allocation8 + $0x868] sm:$0xff]
    %v575 = vld [vmem:[#allocation8 + $0x870] sm:$0xff]
    %v576 = vld [vmem:[#allocation8 + $0x878] sm:$0xff]
    %v577 = vld [vmem:[#allocation8 + $0x880] sm:$0xff]
    %v578 = vld [vmem:[#allocation8 + $0x888] sm:$0xff]
    %v579 = vld [vmem:[#allocation8 + $0x890] sm:$0xff]
    %v580 = vld [vmem:[#allocation8 + $0x898] sm:$0xff]
    %v581 = vld [vmem:[#allocation8 + $0x8a0] sm:$0xff]
    %v582 = vld [vmem:[#allocation8 + $0x8a8] sm:$0xff]
    %v583 = vld [vmem:[#allocation8 + $0x8b0] sm:$0xff]
    %v584 = vld [vmem:[#allocation8 + $0x8b8] sm:$0xff]
    %v585 = vld [vmem:[#allocation8 + $0x8c0] sm:$0xff]
    %v586 = vld [vmem:[#allocation8 + $0x8c8] sm:$0xff]
    %v587 = vld [vmem:[#allocation8 + $0x8d0] sm:$0xff]
    %v588 = vld [vmem:[#allocation8 + $0x8d8] sm:$0xff]
    %v589 = vld [vmem:[#allocation8 + $0x8e0] sm:$0xff]
    %v590 = vld [vmem:[#allocation8 + $0x8e8] sm:$0xff]
    %v591 = vld [vmem:[#allocation8 + $0x8f0] sm:$0xff]
    %v592 = vld [vmem:[#allocation8 + $0x8f8] sm:$0xff]
    %v593 = vld [vmem:[#allocation8 + $0x900] sm:$0xff]
    %v594 = vld [vmem:[#allocation8 + $0x908] sm:$0xff]
    %v595 = vld [vmem:[#allocation8 + $0x910] sm:$0xff]
    %v596 = vld [vmem:[#allocation8 + $0x918] sm:$0xff]
    %v597 = vld [vmem:[#allocation8 + $0x920] sm:$0xff]
    %v598 = vld [vmem:[#allocation8 + $0x928] sm:$0xff]
    %v599 = vld [vmem:[#allocation8 + $0x930] sm:$0xff]
    %v600 = vld [vmem:[#allocation8 + $0x938] sm:$0xff]
    %v601 = vld [vmem:[#allocation8 + $0x940] sm:$0xff]
    %v602 = vld [vmem:[#allocation8 + $0x948] sm:$0xff]
    %v603 = vld [vmem:[#allocation8 + $0x950] sm:$0xff]
    %v604 = vld [vmem:[#allocation8 + $0x958] sm:$0xff]
    %v605 = vld [vmem:[#allocation8 + $0x960] sm:$0xff]
    %v606 = vld [vmem:[#allocation8 + $0x968] sm:$0xff]
    %v607 = vld [vmem:[#allocation8 + $0x970] sm:$0xff]
    %v608 = vld [vmem:[#allocation8 + $0x978] sm:$0xff]
    %v609 = vld [vmem:[#allocation8 + $0x980] sm:$0xff]
    %v610 = vld [vmem:[#allocation8 + $0x988] sm:$0xff]
    %v611 = vld [vmem:[#allocation8 + $0x990] sm:$0xff]
    %v612 = vld [vmem:[#allocation8 + $0x998] sm:$0xff]
    %v613 = vld [vmem:[#allocation8 + $0x9a0] sm:$0xff]
    %v614 = vld [vmem:[#allocation8 + $0x9a8] sm:$0xff]
    %v615 = vld [vmem:[#allocation8 + $0x9b0] sm:$0xff]
    %v616 = vld [vmem:[#allocation8 + $0x9b8] sm:$0xff]
    %v617 = vld [vmem:[#allocation8 + $0x9c0] sm:$0xff]
    %v618 = vld [vmem:[#allocation8 + $0x9c8] sm:$0xff]
    %v619 = vld [vmem:[#allocation8 + $0x9d0] sm:$0xff]
    %v620 = vld [vmem:[#allocation8 + $0x9d8] sm:$0xff]
    %v621 = vld [vmem:[#allocation8 + $0x9e0] sm:$0xff]
    %v622 = vld [vmem:[#allocation8 + $0x9e8] sm:$0xff]
    %v623 = vld [vmem:[#allocation8 + $0x9f0] sm:$0xff]
    %v624 = vld [vmem:[#allocation8 + $0x9f8] sm:$0xff]
    %v625 = vld [vmem:[#allocation8 + $0xa00] sm:$0xff]
    %v626 = vld [vmem:[#allocation8 + $0xa08] sm:$0xff]
    %v627 = vld [vmem:[#allocation8 + $0xa10] sm:$0xff]
    %v628 = vld [vmem:[#allocation8 + $0xa18] sm:$0xff]
    %v629 = vld [vmem:[#allocation8 + $0xa20] sm:$0xff]
    %v630 = vld [vmem:[#allocation8 + $0xa28] sm:$0xff]
    %v631 = vld [vmem:[#allocation8 + $0xa30] sm:$0xff]
    %v632 = vld [vmem:[#allocation8 + $0xa38] sm:$0xff]
    %v633 = vld [vmem:[#allocation8 + $0xa40] sm:$0xff]
    %v634 = vld [vmem:[#allocation8 + $0xa48] sm:$0xff]
    %v635 = vld [vmem:[#allocation8 + $0xa50] sm:$0xff]
    %v636 = vld [vmem:[#allocation8 + $0xa58] sm:$0xff]
    %v637 = vld [vmem:[#allocation8 + $0xa60] sm:$0xff]
    %v638 = vld [vmem:[#allocation8 + $0xa68] sm:$0xff]
    %v639 = vld [vmem:[#allocation8 + $0xa70] sm:$0xff]
    %v640 = vld [vmem:[#allocation8 + $0xa78] sm:$0xff]
    %v641 = vld [vmem:[#allocation8 + $0xa80] sm:$0xff]
    %v642 = vld [vmem:[#allocation8 + $0xa88] sm:$0xff]
    %v643 = vld [vmem:[#allocation8 + $0xa90] sm:$0xff]
    %v644 = vld [vmem:[#allocation8 + $0xa98] sm:$0xff]
    %v645 = vld [vmem:[#allocation8 + $0xaa0] sm:$0xff]
    %v646 = vld [vmem:[#allocation8 + $0xaa8] sm:$0xff]
    %v647 = vld [vmem:[#allocation8 + $0xab0] sm:$0xff]
    %v648 = vld [vmem:[#allocation8 + $0xab8] sm:$0xff]
    %v649 = vld [vmem:[#allocation8 + $0xac0] sm:$0xff]
    %v650 = vld [vmem:[#allocation8 + $0xac8] sm:$0xff]
    %v651 = vld [vmem:[#allocation8 + $0xad0] sm:$0xff]
    %v652 = vld [vmem:[#allocation8 + $0xad8] sm:$0xff]
    %v653 = vld [vmem:[#allocation8 + $0xae0] sm:$0xff]
    %v654 = vld [vmem:[#allocation8 + $0xae8] sm:$0xff]
    %v655 = vld [vmem:[#allocation8 + $0xaf0] sm:$0xff]
    %v656 = vld [vmem:[#allocation8 + $0xaf8] sm:$0xff]
    %v657 = vld [vmem:[#allocation8 + $0xb00] sm:$0xff]
    %v658 = vld [vmem:[#allocation8 + $0xb08] sm:$0xff]
    %v659 = vld [vmem:[#allocation8 + $0xb10] sm:$0xff]
    %v660 = vld [vmem:[#allocation8 + $0xb18] sm:$0xff]
    %v661 = vld [vmem:[#allocation8 + $0xb20] sm:$0xff]
    %v662 = vld [vmem:[#allocation8 + $0xb28] sm:$0xff]
    %v663 = vld [vmem:[#allocation8 + $0xb30] sm:$0xff]
    %v664 = vld [vmem:[#allocation8 + $0xb38] sm:$0xff]
    %v665 = vld [vmem:[#allocation8 + $0xb40] sm:$0xff]
    %v666 = vld [vmem:[#allocation8 + $0xb48] sm:$0xff]
    %v667 = vld [vmem:[#allocation8 + $0xb50] sm:$0xff]
    %v668 = vld [vmem:[#allocation8 + $0xb58] sm:$0xff]
    %v669 = vld [vmem:[#allocation8 + $0xb60] sm:$0xff]
    %v670 = vld [vmem:[#allocation8 + $0xb68] sm:$0xff]
    %v671 = vld [vmem:[#allocation8 + $0xb70] sm:$0xff]
    %v672 = vld [vmem:[#allocation8 + $0xb78] sm:$0xff]
    %v673 = vld [vmem:[#allocation8 + $0xb80] sm:$0xff]
    %v674 = vld [vmem:[#allocation8 + $0xb88] sm:$0xff]
    %v675 = vld [vmem:[#allocation8 + $0xb90] sm:$0xff]
    %v676 = vld [vmem:[#allocation8 + $0xb98] sm:$0xff]
    %v677 = vld [vmem:[#allocation8 + $0xba0] sm:$0xff]
    %v678 = vld [vmem:[#allocation8 + $0xba8] sm:$0xff]
    %v679 = vld [vmem:[#allocation8 + $0xbb0] sm:$0xff]
    %v680 = vld [vmem:[#allocation8 + $0xbb8] sm:$0xff]
    %v681 = vld [vmem:[#allocation8 + $0xbc0] sm:$0xff]
    %v682 = vld [vmem:[#allocation8 + $0xbc8] sm:$0xff]
    %v683 = vld [vmem:[#allocation8 + $0xbd0] sm:$0xff]
    %v684 = vld [vmem:[#allocation8 + $0xbd8] sm:$0xff]
    %v685 = vld [vmem:[#allocation8 + $0xbe0] sm:$0xff]
    %v686 = vld [vmem:[#allocation8 + $0xbe8] sm:$0xff]
    %v687 = vld [vmem:[#allocation8 + $0xbf0] sm:$0xff]
    %v688 = vld [vmem:[#allocation8 + $0xbf8] sm:$0xff]
    %v689 = vld [vmem:[#allocation8 + $0xc00] sm:$0xff]
    %v690 = vld [vmem:[#allocation8 + $0xc08] sm:$0xff]
    %v691 = vld [vmem:[#allocation8 + $0xc10] sm:$0xff]
    %v692 = vld [vmem:[#allocation8 + $0xc18] sm:$0xff]
    %v693 = vld [vmem:[#allocation8 + $0xc20] sm:$0xff]
    %v694 = vld [vmem:[#allocation8 + $0xc28] sm:$0xff]
    %v695 = vld [vmem:[#allocation8 + $0xc30] sm:$0xff]
    %v696 = vld [vmem:[#allocation8 + $0xc38] sm:$0xff]
    %v697 = vld [vmem:[#allocation8 + $0xc40] sm:$0xff]
    %v698 = vld [vmem:[#allocation8 + $0xc48] sm:$0xff]
    %v699 = vld [vmem:[#allocation8 + $0xc50] sm:$0xff]
    %v700 = vld [vmem:[#allocation8 + $0xc58] sm:$0xff]
    %v701 = vld [vmem:[#allocation8 + $0xc60] sm:$0xff]
    %v702 = vld [vmem:[#allocation8 + $0xc68] sm:$0xff]
    %v703 = vld [vmem:[#allocation8 + $0xc70] sm:$0xff]
    %v704 = vld [vmem:[#allocation8 + $0xc78] sm:$0xff]
    %v705 = vld [vmem:[#allocation8 + $0xc80] sm:$0xff]
    %v706 = vld [vmem:[#allocation8 + $0xc88] sm:$0xff]
    %v707 = vld [vmem:[#allocation8 + $0xc90] sm:$0xff]
    %v708 = vld [vmem:[#allocation8 + $0xc98] sm:$0xff]
    %v709 = vld [vmem:[#allocation8 + $0xca0] sm:$0xff]
    %v710 = vld [vmem:[#allocation8 + $0xca8] sm:$0xff]
    %v711 = vld [vmem:[#allocation8 + $0xcb0] sm:$0xff]
    %v712 = vld [vmem:[#allocation8 + $0xcb8] sm:$0xff]
    %v713 = vld [vmem:[#allocation8 + $0xcc0] sm:$0xff]
    %v714 = vld [vmem:[#allocation8 + $0xcc8] sm:$0xff]
    %v715 = vld [vmem:[#allocation8 + $0xcd0] sm:$0xff]
    %v716 = vld [vmem:[#allocation8 + $0xcd8] sm:$0xff]
    %v717 = vld [vmem:[#allocation8 + $0xce0] sm:$0xff]
    %v718 = vld [vmem:[#allocation8 + $0xce8] sm:$0xff]
    %v719 = vld [vmem:[#allocation8 + $0xcf0] sm:$0xff]
    %v720 = vld [vmem:[#allocation8 + $0xcf8] sm:$0xff]
    %v721 = vld [vmem:[#allocation8 + $0xd00] sm:$0xff]
    %v722 = vld [vmem:[#allocation8 + $0xd08] sm:$0xff]
    %v723 = vld [vmem:[#allocation8 + $0xd10] sm:$0xff]
    %v724 = vld [vmem:[#allocation8 + $0xd18] sm:$0xff]
    %v725 = vld [vmem:[#allocation8 + $0xd20] sm:$0xff]
    %v726 = vld [vmem:[#allocation8 + $0xd28] sm:$0xff]
    %v727 = vld [vmem:[#allocation8 + $0xd30] sm:$0xff]
    %v728 = vld [vmem:[#allocation8 + $0xd38] sm:$0xff]
    %v729 = vld [vmem:[#allocation8 + $0xd40] sm:$0xff]
    %v730 = vld [vmem:[#allocation8 + $0xd48] sm:$0xff]
    %v731 = vld [vmem:[#allocation8 + $0xd50] sm:$0xff]
    %v732 = vld [vmem:[#allocation8 + $0xd58] sm:$0xff]
    %v733 = vld [vmem:[#allocation8 + $0xd60] sm:$0xff]
    %v734 = vld [vmem:[#allocation8 + $0xd68] sm:$0xff]
    %v735 = vld [vmem:[#allocation8 + $0xd70] sm:$0xff]
    %v736 = vld [vmem:[#allocation8 + $0xd78] sm:$0xff]
    %v737 = vld [vmem:[#allocation8 + $0xd80] sm:$0xff]
    %v738 = vld [vmem:[#allocation8 + $0xd88] sm:$0xff]
    %v739 = vld [vmem:[#allocation8 + $0xd90] sm:$0xff]
    %v740 = vld [vmem:[#allocation8 + $0xd98] sm:$0xff]
    %v741 = vld [vmem:[#allocation8 + $0xda0] sm:$0xff]
    %v742 = vld [vmem:[#allocation8 + $0xda8] sm:$0xff]
    %v743 = vld [vmem:[#allocation8 + $0xdb0] sm:$0xff]
    %v744 = vld [vmem:[#allocation8 + $0xdb8] sm:$0xff]
    %v745 = vld [vmem:[#allocation8 + $0xdc0] sm:$0xff]
    %v746 = vld [vmem:[#allocation8 + $0xdc8] sm:$0xff]
    %v747 = vld [vmem:[#allocation8 + $0xdd0] sm:$0xff]
    %v748 = vld [vmem:[#allocation8 + $0xdd8] sm:$0xff]
    %v749 = vld [vmem:[#allocation8 + $0xde0] sm:$0xff]
    %v750 = vld [vmem:[#allocation8 + $0xde8] sm:$0xff]
    %v751 = vld [vmem:[#allocation8 + $0xdf0] sm:$0xff]
    %v752 = vld [vmem:[#allocation8 + $0xdf8] sm:$0xff]
    %v753 = vld [vmem:[#allocation8 + $0xe00] sm:$0xff]
    %v754 = vld [vmem:[#allocation8 + $0xe08] sm:$0xff]
    %v755 = vld [vmem:[#allocation8 + $0xe10] sm:$0xff]
    %v756 = vld [vmem:[#allocation8 + $0xe18] sm:$0xff]
    %v757 = vld [vmem:[#allocation8 + $0xe20] sm:$0xff]
    %v758 = vld [vmem:[#allocation8 + $0xe28] sm:$0xff]
    %v759 = vld [vmem:[#allocation8 + $0xe30] sm:$0xff]
    %v760 = vld [vmem:[#allocation8 + $0xe38] sm:$0xff]
    %v761 = vld [vmem:[#allocation8 + $0xe40] sm:$0xff]
    %v762 = vld [vmem:[#allocation8 + $0xe48] sm:$0xff]
    %v763 = vld [vmem:[#allocation8 + $0xe50] sm:$0xff]
    %v764 = vld [vmem:[#allocation8 + $0xe58] sm:$0xff]
    %v765 = vld [vmem:[#allocation8 + $0xe60] sm:$0xff]
    %v766 = vld [vmem:[#allocation8 + $0xe68] sm:$0xff]
    %v767 = vld [vmem:[#allocation8 + $0xe70] sm:$0xff]
    %v768 = vld [vmem:[#allocation8 + $0xe78] sm:$0xff]
    %v769 = vld [vmem:[#allocation8 + $0xe80] sm:$0xff]
    %v770 = vld [vmem:[#allocation8 + $0xe88] sm:$0xff]
    %v771 = vld [vmem:[#allocation8 + $0xe90] sm:$0xff]
    %v772 = vld [vmem:[#allocation8 + $0xe98] sm:$0xff]
    %v773 = vld [vmem:[#allocation8 + $0xea0] sm:$0xff]
    %v774 = vld [vmem:[#allocation8 + $0xea8] sm:$0xff]
    %v775 = vld [vmem:[#allocation8 + $0xeb0] sm:$0xff]
    %v776 = vld [vmem:[#allocation8 + $0xeb8] sm:$0xff]
    %v777 = vld [vmem:[#allocation8 + $0xec0] sm:$0xff]
    %v778 = vld [vmem:[#allocation8 + $0xec8] sm:$0xff]
    %v779 = vld [vmem:[#allocation8 + $0xed0] sm:$0xff]
    %v780 = vld [vmem:[#allocation8 + $0xed8] sm:$0xff]
    %v781 = vld [vmem:[#allocation8 + $0xee0] sm:$0xff]
    %v782 = vld [vmem:[#allocation8 + $0xee8] sm:$0xff]
    %v783 = vld [vmem:[#allocation8 + $0xef0] sm:$0xff]
    %v784 = vld [vmem:[#allocation8 + $0xef8] sm:$0xff]
    %v785 = vld [vmem:[#allocation8 + $0xf00] sm:$0xff]
    %v786 = vld [vmem:[#allocation8 + $0xf08] sm:$0xff]
    %v787 = vld [vmem:[#allocation8 + $0xf10] sm:$0xff]
    %v788 = vld [vmem:[#allocation8 + $0xf18] sm:$0xff]
    %v789 = vld [vmem:[#allocation8 + $0xf20] sm:$0xff]
    %v790 = vld [vmem:[#allocation8 + $0xf28] sm:$0xff]
    %v791 = vld [vmem:[#allocation8 + $0xf30] sm:$0xff]
    %v792 = vld [vmem:[#allocation8 + $0xf38] sm:$0xff]
    %v793 = vld [vmem:[#allocation8 + $0xf40] sm:$0xff]
    %v794 = vld [vmem:[#allocation8 + $0xf48] sm:$0xff]
    %v795 = vld [vmem:[#allocation8 + $0xf50] sm:$0xff]
    %v796 = vld [vmem:[#allocation8 + $0xf58] sm:$0xff]
    %v797 = vld [vmem:[#allocation8 + $0xf60] sm:$0xff]
    %v798 = vld [vmem:[#allocation8 + $0xf68] sm:$0xff]
    %v799 = vld [vmem:[#allocation8 + $0xf70] sm:$0xff]
    %v800 = vld [vmem:[#allocation8 + $0xf78] sm:$0xff]
    %v801 = vld [vmem:[#allocation8 + $0xf80] sm:$0xff]
    %v802 = vld [vmem:[#allocation8 + $0xf88] sm:$0xff]
    %v803 = vld [vmem:[#allocation8 + $0xf90] sm:$0xff]
    %v804 = vld [vmem:[#allocation8 + $0xf98] sm:$0xff]
    %v805 = vld [vmem:[#allocation8 + $0xfa0] sm:$0xff]
    %v806 = vld [vmem:[#allocation8 + $0xfa8] sm:$0xff]
    %v807 = vld [vmem:[#allocation8 + $0xfb0] sm:$0xff]
    %v808 = vld [vmem:[#allocation8 + $0xfb8] sm:$0xff]
    %v809 = vld [vmem:[#allocation8 + $0xfc0] sm:$0xff]
    %v810 = vld [vmem:[#allocation8 + $0xfc8] sm:$0xff]
    %v811 = vld [vmem:[#allocation8 + $0xfd0] sm:$0xff]
    %v812 = vld [vmem:[#allocation8 + $0xfd8] sm:$0xff]
    %v813 = vld [vmem:[#allocation8 + $0xfe0] sm:$0xff]
    %v814 = vld [vmem:[#allocation8 + $0xfe8] sm:$0xff]
    %v815 = vld [vmem:[#allocation8 + $0xff0] sm:$0xff]
    %v816 = vld [vmem:[#allocation8 + $0xff8] sm:$0xff]
    %v817 = vld [vmem:[#allocation10] sm:$0xff]
    %v819 = vperm.slane %v817, 0
    %v820 = vperm.slane %v817, 1
    %v821 = vperm.slane %v817, 2
    %v822 = vperm.slane %v817, 3
    %v823 = vperm.slane %v817, 4
    %v824 = vperm.slane %v817, 5
    %v825 = vperm.slane %v817, 6
    %v826 = vperm.slane %v817, 7
    %835 = vmatpush.msra.mxu0 %v425
    %836 = vmatpush.msra.mxu0 %v417
    %837 = vmatpush.msra.mxu0 %v409
    %838 = vmatpush.msra.mxu0 %v401
    %839 = vmatpush.msra.mxu0 %v393
    %840 = vmatpush.msra.mxu0 %v385
    %841 = vmatpush.msra.mxu0 %v377
    %842 = vmatpush.msra.mxu0 %v369
    %843 = vmatpush.msra.mxu0 %v361
    %844 = vmatpush.msra.mxu0 %v353
    %845 = vmatpush.msra.mxu0 %v345
    %846 = vmatpush.msra.mxu0 %v337
    %847 = vmatpush.msra.mxu0 %v329
    %848 = vmatpush.msra.mxu0 %v321
    %849 = vmatpush.msra.mxu0 %v313
    %850 = vmatpush.msra.mxu0 %v305
    %851 = vmatmul.f32.gmra.mxu0 %v301
    %v852 = vpop.f32.mrf.mxu0
    %v853 = vadd.f32 %v819, %v852
    %854 = vdwg.mxu0
    %855 = vmatpush.msra.mxu0 %v553
    %856 = vmatpush.msra.mxu0 %v545
    %857 = vmatpush.msra.mxu0 %v537
    %858 = vmatpush.msra.mxu0 %v529
    %859 = vmatpush.msra.mxu0 %v521
    %860 = vmatpush.msra.mxu0 %v513
    %861 = vmatpush.msra.mxu0 %v505
    %862 = vmatpush.msra.mxu0 %v497
    %863 = vmatpush.msra.mxu0 %v489
    %864 = vmatpush.msra.mxu0 %v481
    %865 = vmatpush.msra.mxu0 %v473
    %866 = vmatpush.msra.mxu0 %v465
    %867 = vmatpush.msra.mxu0 %v457
    %868 = vmatpush.msra.mxu0 %v449
    %869 = vmatpush.msra.mxu0 %v441
    %870 = vmatpush.msra.mxu0 %v433
    %871 = vmatmul.f32.gmra.mxu0 %v302
    %v872 = vpop.f32.mrf.mxu0
    %v873 = vadd.f32 %v853, %v872
    %874 = vdwg.mxu0
    %875 = vmatpush.msra.mxu0 %v681
    %876 = vmatpush.msra.mxu0 %v673
    %877 = vmatpush.msra.mxu0 %v665
    %878 = vmatpush.msra.mxu0 %v657
    %879 = vmatpush.msra.mxu0 %v649
    %880 = vmatpush.msra.mxu0 %v641
    %881 = vmatpush.msra.mxu0 %v633
    %882 = vmatpush.msra.mxu0 %v625
    %883 = vmatpush.msra.mxu0 %v617
    %884 = vmatpush.msra.mxu0 %v609
    %885 = vmatpush.msra.mxu0 %v601
    %886 = vmatpush.msra.mxu0 %v593
    %887 = vmatpush.msra.mxu0 %v585
    %888 = vmatpush.msra.mxu0 %v577
    %889 = vmatpush.msra.mxu0 %v569
    %890 = vmatpush.msra.mxu0 %v561
    %891 = vmatmul.f32.gmra.mxu0 %v303
    %v892 = vpop.f32.mrf.mxu0
    %v893 = vadd.f32 %v873, %v892
    %894 = vdwg.mxu0
    %895 = vmatpush.msra.mxu0 %v809
    %896 = vmatpush.msra.mxu0 %v801
    %897 = vmatpush.msra.mxu0 %v793
    %898 = vmatpush.msra.mxu0 %v785
    %899 = vmatpush.msra.mxu0 %v777
    %900 = vmatpush.msra.mxu0 %v769
    %901 = vmatpush.msra.mxu0 %v761
    %902 = vmatpush.msra.mxu0 %v753
    %903 = vmatpush.msra.mxu0 %v745
    %904 = vmatpush.msra.mxu0 %v737
    %905 = vmatpush.msra.mxu0 %v729
    %906 = vmatpush.msra.mxu0 %v721
    %907 = vmatpush.msra.mxu0 %v713
    %908 = vmatpush.msra.mxu0 %v705
    %909 = vmatpush.msra.mxu0 %v697
    %910 = vmatpush.msra.mxu0 %v689
    %911 = vmatmul.f32.gmra.mxu0 %v304
    %v912 = vpop.f32.mrf.mxu0
    %v913 = vadd.f32 %v893, %v912
    %914 = vdwg.mxu0
    %915 = vmatpush.msra.mxu0 %v426
    %916 = vmatpush.msra.mxu0 %v418
    %917 = vmatpush.msra.mxu0 %v410
    %918 = vmatpush.msra.mxu0 %v402
    %919 = vmatpush.msra.mxu0 %v394
    %920 = vmatpush.msra.mxu0 %v386
    %921 = vmatpush.msra.mxu0 %v378
    %922 = vmatpush.msra.mxu0 %v370
    %923 = vmatpush.msra.mxu0 %v362
    %924 = vmatpush.msra.mxu0 %v354
    %925 = vmatpush.msra.mxu0 %v346
    %926 = vmatpush.msra.mxu0 %v338
    %927 = vmatpush.msra.mxu0 %v330
    %928 = vmatpush.msra.mxu0 %v322
    %929 = vmatpush.msra.mxu0 %v314
    %930 = vmatpush.msra.mxu0 %v306
    %931 = vmatmul.f32.gmra.mxu0 %v301
    %v932 = vpop.f32.mrf.mxu0
    %v933 = vadd.f32 %v820, %v932
    %934 = vdwg.mxu0
    %935 = vmatpush.msra.mxu0 %v554
    %936 = vmatpush.msra.mxu0 %v546
    %937 = vmatpush.msra.mxu0 %v538
    %938 = vmatpush.msra.mxu0 %v530
    %939 = vmatpush.msra.mxu0 %v522
    %940 = vmatpush.msra.mxu0 %v514
    %941 = vmatpush.msra.mxu0 %v506
    %942 = vmatpush.msra.mxu0 %v498
    %943 = vmatpush.msra.mxu0 %v490
    %944 = vmatpush.msra.mxu0 %v482
    %945 = vmatpush.msra.mxu0 %v474
    %946 = vmatpush.msra.mxu0 %v466
    %947 = vmatpush.msra.mxu0 %v458
    %948 = vmatpush.msra.mxu0 %v450
    %949 = vmatpush.msra.mxu0 %v442
    %950 = vmatpush.msra.mxu0 %v434
    %951 = vmatmul.f32.gmra.mxu0 %v302
    %v952 = vpop.f32.mrf.mxu0
    %v953 = vadd.f32 %v933, %v952
    %954 = vdwg.mxu0
    %955 = vmatpush.msra.mxu0 %v682
    %956 = vmatpush.msra.mxu0 %v674
    %957 = vmatpush.msra.mxu0 %v666
    %958 = vmatpush.msra.mxu0 %v658
    %959 = vmatpush.msra.mxu0 %v650
    %960 = vmatpush.msra.mxu0 %v642
    %961 = vmatpush.msra.mxu0 %v634
    %962 = vmatpush.msra.mxu0 %v626
    %963 = vmatpush.msra.mxu0 %v618
    %964 = vmatpush.msra.mxu0 %v610
    %965 = vmatpush.msra.mxu0 %v602
    %966 = vmatpush.msra.mxu0 %v594
    %967 = vmatpush.msra.mxu0 %v586
    %968 = vmatpush.msra.mxu0 %v578
    %969 = vmatpush.msra.mxu0 %v570
    %970 = vmatpush.msra.mxu0 %v562
    %971 = vmatmul.f32.gmra.mxu0 %v303
    %v972 = vpop.f32.mrf.mxu0
    %v973 = vadd.f32 %v953, %v972
    %974 = vdwg.mxu0
    %975 = vmatpush.msra.mxu0 %v810
    %976 = vmatpush.msra.mxu0 %v802
    %977 = vmatpush.msra.mxu0 %v794
    %978 = vmatpush.msra.mxu0 %v786
    %979 = vmatpush.msra.mxu0 %v778
    %980 = vmatpush.msra.mxu0 %v770
    %981 = vmatpush.msra.mxu0 %v762
    %982 = vmatpush.msra.mxu0 %v754
    %983 = vmatpush.msra.mxu0 %v746
    %984 = vmatpush.msra.mxu0 %v738
    %985 = vmatpush.msra.mxu0 %v730
    %986 = vmatpush.msra.mxu0 %v722
    %987 = vmatpush.msra.mxu0 %v714
    %988 = vmatpush.msra.mxu0 %v706
    %989 = vmatpush.msra.mxu0 %v698
    %990 = vmatpush.msra.mxu0 %v690
    %991 = vmatmul.f32.gmra.mxu0 %v304
    %v992 = vpop.f32.mrf.mxu0
    %v993 = vadd.f32 %v973, %v992
    %994 = vdwg.mxu0
    %995 = vmatpush.msra.mxu0 %v427
    %996 = vmatpush.msra.mxu0 %v419
    %997 = vmatpush.msra.mxu0 %v411
    %998 = vmatpush.msra.mxu0 %v403
    %999 = vmatpush.msra.mxu0 %v395
    %1000 = vmatpush.msra.mxu0 %v387
    %1001 = vmatpush.msra.mxu0 %v379
    %1002 = vmatpush.msra.mxu0 %v371
    %1003 = vmatpush.msra.mxu0 %v363
    %1004 = vmatpush.msra.mxu0 %v355
    %1005 = vmatpush.msra.mxu0 %v347
    %1006 = vmatpush.msra.mxu0 %v339
    %1007 = vmatpush.msra.mxu0 %v331
    %1008 = vmatpush.msra.mxu0 %v323
    %1009 = vmatpush.msra.mxu0 %v315
    %1010 = vmatpush.msra.mxu0 %v307
    %1011 = vmatmul.f32.gmra.mxu0 %v301
    %v1012 = vpop.f32.mrf.mxu0
    %v1013 = vadd.f32 %v821, %v1012
    %1014 = vdwg.mxu0
    %1015 = vmatpush.msra.mxu0 %v555
    %1016 = vmatpush.msra.mxu0 %v547
    %1017 = vmatpush.msra.mxu0 %v539
    %1018 = vmatpush.msra.mxu0 %v531
    %1019 = vmatpush.msra.mxu0 %v523
    %1020 = vmatpush.msra.mxu0 %v515
    %1021 = vmatpush.msra.mxu0 %v507
    %1022 = vmatpush.msra.mxu0 %v499
    %1023 = vmatpush.msra.mxu0 %v491
    %1024 = vmatpush.msra.mxu0 %v483
    %1025 = vmatpush.msra.mxu0 %v475
    %1026 = vmatpush.msra.mxu0 %v467
    %1027 = vmatpush.msra.mxu0 %v459
    %1028 = vmatpush.msra.mxu0 %v451
    %1029 = vmatpush.msra.mxu0 %v443
    %1030 = vmatpush.msra.mxu0 %v435
    %1031 = vmatmul.f32.gmra.mxu0 %v302
    %v1032 = vpop.f32.mrf.mxu0
    %v1033 = vadd.f32 %v1013, %v1032
    %1034 = vdwg.mxu0
    %1035 = vmatpush.msra.mxu0 %v683
    %1036 = vmatpush.msra.mxu0 %v675
    %1037 = vmatpush.msra.mxu0 %v667
    %1038 = vmatpush.msra.mxu0 %v659
    %1039 = vmatpush.msra.mxu0 %v651
    %1040 = vmatpush.msra.mxu0 %v643
    %1041 = vmatpush.msra.mxu0 %v635
    %1042 = vmatpush.msra.mxu0 %v627
    %1043 = vmatpush.msra.mxu0 %v619
    %1044 = vmatpush.msra.mxu0 %v611
    %1045 = vmatpush.msra.mxu0 %v603
    %1046 = vmatpush.msra.mxu0 %v595
    %1047 = vmatpush.msra.mxu0 %v587
    %1048 = vmatpush.msra.mxu0 %v579
    %1049 = vmatpush.msra.mxu0 %v571
    %1050 = vmatpush.msra.mxu0 %v563
    %1051 = vmatmul.f32.gmra.mxu0 %v303
    %v1052 = vpop.f32.mrf.mxu0
    %v1053 = vadd.f32 %v1033, %v1052
    %1054 = vdwg.mxu0
    %1055 = vmatpush.msra.mxu0 %v811
    %1056 = vmatpush.msra.mxu0 %v803
    %1057 = vmatpush.msra.mxu0 %v795
    %1058 = vmatpush.msra.mxu0 %v787
    %1059 = vmatpush.msra.mxu0 %v779
    %1060 = vmatpush.msra.mxu0 %v771
    %1061 = vmatpush.msra.mxu0 %v763
    %1062 = vmatpush.msra.mxu0 %v755
    %1063 = vmatpush.msra.mxu0 %v747
    %1064 = vmatpush.msra.mxu0 %v739
    %1065 = vmatpush.msra.mxu0 %v731
    %1066 = vmatpush.msra.mxu0 %v723
    %1067 = vmatpush.msra.mxu0 %v715
    %1068 = vmatpush.msra.mxu0 %v707
    %1069 = vmatpush.msra.mxu0 %v699
    %1070 = vmatpush.msra.mxu0 %v691
    %1071 = vmatmul.f32.gmra.mxu0 %v304
    %v1072 = vpop.f32.mrf.mxu0
    %v1073 = vadd.f32 %v1053, %v1072
    %1074 = vdwg.mxu0
    %1075 = vmatpush.msra.mxu0 %v428
    %1076 = vmatpush.msra.mxu0 %v420
    %1077 = vmatpush.msra.mxu0 %v412
    %1078 = vmatpush.msra.mxu0 %v404
    %1079 = vmatpush.msra.mxu0 %v396
    %1080 = vmatpush.msra.mxu0 %v388
    %1081 = vmatpush.msra.mxu0 %v380
    %1082 = vmatpush.msra.mxu0 %v372
    %1083 = vmatpush.msra.mxu0 %v364
    %1084 = vmatpush.msra.mxu0 %v356
    %1085 = vmatpush.msra.mxu0 %v348
    %1086 = vmatpush.msra.mxu0 %v340
    %1087 = vmatpush.msra.mxu0 %v332
    %1088 = vmatpush.msra.mxu0 %v324
    %1089 = vmatpush.msra.mxu0 %v316
    %1090 = vmatpush.msra.mxu0 %v308
    %1091 = vmatmul.f32.gmra.mxu0 %v301
    %v1092 = vpop.f32.mrf.mxu0
    %v1093 = vadd.f32 %v822, %v1092
    %1094 = vdwg.mxu0
    %1095 = vmatpush.msra.mxu0 %v556
    %1096 = vmatpush.msra.mxu0 %v548
    %1097 = vmatpush.msra.mxu0 %v540
    %1098 = vmatpush.msra.mxu0 %v532
    %1099 = vmatpush.msra.mxu0 %v524
    %1100 = vmatpush.msra.mxu0 %v516
    %1101 = vmatpush.msra.mxu0 %v508
    %1102 = vmatpush.msra.mxu0 %v500
    %1103 = vmatpush.msra.mxu0 %v492
    %1104 = vmatpush.msra.mxu0 %v484
    %1105 = vmatpush.msra.mxu0 %v476
    %1106 = vmatpush.msra.mxu0 %v468
    %1107 = vmatpush.msra.mxu0 %v460
    %1108 = vmatpush.msra.mxu0 %v452
    %1109 = vmatpush.msra.mxu0 %v444
    %1110 = vmatpush.msra.mxu0 %v436
    %1111 = vmatmul.f32.gmra.mxu0 %v302
    %v1112 = vpop.f32.mrf.mxu0
    %v1113 = vadd.f32 %v1093, %v1112
    %1114 = vdwg.mxu0
    %1115 = vmatpush.msra.mxu0 %v684
    %1116 = vmatpush.msra.mxu0 %v676
    %1117 = vmatpush.msra.mxu0 %v668
    %1118 = vmatpush.msra.mxu0 %v660
    %1119 = vmatpush.msra.mxu0 %v652
    %1120 = vmatpush.msra.mxu0 %v644
    %1121 = vmatpush.msra.mxu0 %v636
    %1122 = vmatpush.msra.mxu0 %v628
    %1123 = vmatpush.msra.mxu0 %v620
    %1124 = vmatpush.msra.mxu0 %v612
    %1125 = vmatpush.msra.mxu0 %v604
    %1126 = vmatpush.msra.mxu0 %v596
    %1127 = vmatpush.msra.mxu0 %v588
    %1128 = vmatpush.msra.mxu0 %v580
    %1129 = vmatpush.msra.mxu0 %v572
    %1130 = vmatpush.msra.mxu0 %v564
    %1131 = vmatmul.f32.gmra.mxu0 %v303
    %v1132 = vpop.f32.mrf.mxu0
    %v1133 = vadd.f32 %v1113, %v1132
    %1134 = vdwg.mxu0
    %1135 = vmatpush.msra.mxu0 %v812
    %1136 = vmatpush.msra.mxu0 %v804
    %1137 = vmatpush.msra.mxu0 %v796
    %1138 = vmatpush.msra.mxu0 %v788
    %1139 = vmatpush.msra.mxu0 %v780
    %1140 = vmatpush.msra.mxu0 %v772
    %1141 = vmatpush.msra.mxu0 %v764
    %1142 = vmatpush.msra.mxu0 %v756
    %1143 = vmatpush.msra.mxu0 %v748
    %1144 = vmatpush.msra.mxu0 %v740
    %1145 = vmatpush.msra.mxu0 %v732
    %1146 = vmatpush.msra.mxu0 %v724
    %1147 = vmatpush.msra.mxu0 %v716
    %1148 = vmatpush.msra.mxu0 %v708
    %1149 = vmatpush.msra.mxu0 %v700
    %1150 = vmatpush.msra.mxu0 %v692
    %1151 = vmatmul.f32.gmra.mxu0 %v304
    %v1152 = vpop.f32.mrf.mxu0
    %v1153 = vadd.f32 %v1133, %v1152
    %1154 = vdwg.mxu0
    %1155 = vmatpush.msra.mxu0 %v429
    %1156 = vmatpush.msra.mxu0 %v421
    %1157 = vmatpush.msra.mxu0 %v413
    %1158 = vmatpush.msra.mxu0 %v405
    %1159 = vmatpush.msra.mxu0 %v397
    %1160 = vmatpush.msra.mxu0 %v389
    %1161 = vmatpush.msra.mxu0 %v381
    %1162 = vmatpush.msra.mxu0 %v373
    %1163 = vmatpush.msra.mxu0 %v365
    %1164 = vmatpush.msra.mxu0 %v357
    %1165 = vmatpush.msra.mxu0 %v349
    %1166 = vmatpush.msra.mxu0 %v341
    %1167 = vmatpush.msra.mxu0 %v333
    %1168 = vmatpush.msra.mxu0 %v325
    %1169 = vmatpush.msra.mxu0 %v317
    %1170 = vmatpush.msra.mxu0 %v309
    %1171 = vmatmul.f32.gmra.mxu0 %v301
    %v1172 = vpop.f32.mrf.mxu0
    %v1173 = vadd.f32 %v823, %v1172
    %1174 = vdwg.mxu0
    %1175 = vmatpush.msra.mxu0 %v557
    %1176 = vmatpush.msra.mxu0 %v549
    %1177 = vmatpush.msra.mxu0 %v541
    %1178 = vmatpush.msra.mxu0 %v533
    %1179 = vmatpush.msra.mxu0 %v525
    %1180 = vmatpush.msra.mxu0 %v517
    %1181 = vmatpush.msra.mxu0 %v509
    %1182 = vmatpush.msra.mxu0 %v501
    %1183 = vmatpush.msra.mxu0 %v493
    %1184 = vmatpush.msra.mxu0 %v485
    %1185 = vmatpush.msra.mxu0 %v477
    %1186 = vmatpush.msra.mxu0 %v469
    %1187 = vmatpush.msra.mxu0 %v461
    %1188 = vmatpush.msra.mxu0 %v453
    %1189 = vmatpush.msra.mxu0 %v445
    %1190 = vmatpush.msra.mxu0 %v437
    %1191 = vmatmul.f32.gmra.mxu0 %v302
    %v1192 = vpop.f32.mrf.mxu0
    %v1193 = vadd.f32 %v1173, %v1192
    %1194 = vdwg.mxu0
    %1195 = vmatpush.msra.mxu0 %v685
    %1196 = vmatpush.msra.mxu0 %v677
    %1197 = vmatpush.msra.mxu0 %v669
    %1198 = vmatpush.msra.mxu0 %v661
    %1199 = vmatpush.msra.mxu0 %v653
    %1200 = vmatpush.msra.mxu0 %v645
    %1201 = vmatpush.msra.mxu0 %v637
    %1202 = vmatpush.msra.mxu0 %v629
    %1203 = vmatpush.msra.mxu0 %v621
    %1204 = vmatpush.msra.mxu0 %v613
    %1205 = vmatpush.msra.mxu0 %v605
    %1206 = vmatpush.msra.mxu0 %v597
    %1207 = vmatpush.msra.mxu0 %v589
    %1208 = vmatpush.msra.mxu0 %v581
    %1209 = vmatpush.msra.mxu0 %v573
    %1210 = vmatpush.msra.mxu0 %v565
    %1211 = vmatmul.f32.gmra.mxu0 %v303
    %v1212 = vpop.f32.mrf.mxu0
    %v1213 = vadd.f32 %v1193, %v1212
    %1214 = vdwg.mxu0
    %1215 = vmatpush.msra.mxu0 %v813
    %1216 = vmatpush.msra.mxu0 %v805
    %1217 = vmatpush.msra.mxu0 %v797
    %1218 = vmatpush.msra.mxu0 %v789
    %1219 = vmatpush.msra.mxu0 %v781
    %1220 = vmatpush.msra.mxu0 %v773
    %1221 = vmatpush.msra.mxu0 %v765
    %1222 = vmatpush.msra.mxu0 %v757
    %1223 = vmatpush.msra.mxu0 %v749
    %1224 = vmatpush.msra.mxu0 %v741
    %1225 = vmatpush.msra.mxu0 %v733
    %1226 = vmatpush.msra.mxu0 %v725
    %1227 = vmatpush.msra.mxu0 %v717
    %1228 = vmatpush.msra.mxu0 %v709
    %1229 = vmatpush.msra.mxu0 %v701
    %1230 = vmatpush.msra.mxu0 %v693
    %1231 = vmatmul.f32.gmra.mxu0 %v304
    %v1232 = vpop.f32.mrf.mxu0
    %v1233 = vadd.f32 %v1213, %v1232
    %1234 = vdwg.mxu0
    %1235 = vmatpush.msra.mxu0 %v430
    %1236 = vmatpush.msra.mxu0 %v422
    %1237 = vmatpush.msra.mxu0 %v414
    %1238 = vmatpush.msra.mxu0 %v406
    %1239 = vmatpush.msra.mxu0 %v398
    %1240 = vmatpush.msra.mxu0 %v390
    %1241 = vmatpush.msra.mxu0 %v382
    %1242 = vmatpush.msra.mxu0 %v374
    %1243 = vmatpush.msra.mxu0 %v366
    %1244 = vmatpush.msra.mxu0 %v358
    %1245 = vmatpush.msra.mxu0 %v350
    %1246 = vmatpush.msra.mxu0 %v342
    %1247 = vmatpush.msra.mxu0 %v334
    %1248 = vmatpush.msra.mxu0 %v326
    %1249 = vmatpush.msra.mxu0 %v318
    %1250 = vmatpush.msra.mxu0 %v310
    %1251 = vmatmul.f32.gmra.mxu0 %v301
    %v1252 = vpop.f32.mrf.mxu0
    %v1253 = vadd.f32 %v824, %v1252
    %1254 = vdwg.mxu0
    %1255 = vmatpush.msra.mxu0 %v558
    %1256 = vmatpush.msra.mxu0 %v550
    %1257 = vmatpush.msra.mxu0 %v542
    %1258 = vmatpush.msra.mxu0 %v534
    %1259 = vmatpush.msra.mxu0 %v526
    %1260 = vmatpush.msra.mxu0 %v518
    %1261 = vmatpush.msra.mxu0 %v510
    %1262 = vmatpush.msra.mxu0 %v502
    %1263 = vmatpush.msra.mxu0 %v494
    %1264 = vmatpush.msra.mxu0 %v486
    %1265 = vmatpush.msra.mxu0 %v478
    %1266 = vmatpush.msra.mxu0 %v470
    %1267 = vmatpush.msra.mxu0 %v462
    %1268 = vmatpush.msra.mxu0 %v454
    %1269 = vmatpush.msra.mxu0 %v446
    %1270 = vmatpush.msra.mxu0 %v438
    %1271 = vmatmul.f32.gmra.mxu0 %v302
    %v1272 = vpop.f32.mrf.mxu0
    %v1273 = vadd.f32 %v1253, %v1272
    %1274 = vdwg.mxu0
    %1275 = vmatpush.msra.mxu0 %v686
    %1276 = vmatpush.msra.mxu0 %v678
    %1277 = vmatpush.msra.mxu0 %v670
    %1278 = vmatpush.msra.mxu0 %v662
    %1279 = vmatpush.msra.mxu0 %v654
    %1280 = vmatpush.msra.mxu0 %v646
    %1281 = vmatpush.msra.mxu0 %v638
    %1282 = vmatpush.msra.mxu0 %v630
    %1283 = vmatpush.msra.mxu0 %v622
    %1284 = vmatpush.msra.mxu0 %v614
    %1285 = vmatpush.msra.mxu0 %v606
    %1286 = vmatpush.msra.mxu0 %v598
    %1287 = vmatpush.msra.mxu0 %v590
    %1288 = vmatpush.msra.mxu0 %v582
    %1289 = vmatpush.msra.mxu0 %v574
    %1290 = vmatpush.msra.mxu0 %v566
    %1291 = vmatmul.f32.gmra.mxu0 %v303
    %v1292 = vpop.f32.mrf.mxu0
    %v1293 = vadd.f32 %v1273, %v1292
    %1294 = vdwg.mxu0
    %1295 = vmatpush.msra.mxu0 %v814
    %1296 = vmatpush.msra.mxu0 %v806
    %1297 = vmatpush.msra.mxu0 %v798
    %1298 = vmatpush.msra.mxu0 %v790
    %1299 = vmatpush.msra.mxu0 %v782
    %1300 = vmatpush.msra.mxu0 %v774
    %1301 = vmatpush.msra.mxu0 %v766
    %1302 = vmatpush.msra.mxu0 %v758
    %1303 = vmatpush.msra.mxu0 %v750
    %1304 = vmatpush.msra.mxu0 %v742
    %1305 = vmatpush.msra.mxu0 %v734
    %1306 = vmatpush.msra.mxu0 %v726
    %1307 = vmatpush.msra.mxu0 %v718
    %1308 = vmatpush.msra.mxu0 %v710
    %1309 = vmatpush.msra.mxu0 %v702
    %1310 = vmatpush.msra.mxu0 %v694
    %1311 = vmatmul.f32.gmra.mxu0 %v304
    %v1312 = vpop.f32.mrf.mxu0
    %v1313 = vadd.f32 %v1293, %v1312
    %1314 = vdwg.mxu0
    %1315 = vmatpush.msra.mxu0 %v431
    %1316 = vmatpush.msra.mxu0 %v423
    %1317 = vmatpush.msra.mxu0 %v415
    %1318 = vmatpush.msra.mxu0 %v407
    %1319 = vmatpush.msra.mxu0 %v399
    %1320 = vmatpush.msra.mxu0 %v391
    %1321 = vmatpush.msra.mxu0 %v383
    %1322 = vmatpush.msra.mxu0 %v375
    %1323 = vmatpush.msra.mxu0 %v367
    %1324 = vmatpush.msra.mxu0 %v359
    %1325 = vmatpush.msra.mxu0 %v351
    %1326 = vmatpush.msra.mxu0 %v343
    %1327 = vmatpush.msra.mxu0 %v335
    %1328 = vmatpush.msra.mxu0 %v327
    %1329 = vmatpush.msra.mxu0 %v319
    %1330 = vmatpush.msra.mxu0 %v311
    %1331 = vmatmul.f32.gmra.mxu0 %v301
    %v1332 = vpop.f32.mrf.mxu0
    %v1333 = vadd.f32 %v825, %v1332
    %1334 = vdwg.mxu0
    %1335 = vmatpush.msra.mxu0 %v559
    %1336 = vmatpush.msra.mxu0 %v551
    %1337 = vmatpush.msra.mxu0 %v543
    %1338 = vmatpush.msra.mxu0 %v535
    %1339 = vmatpush.msra.mxu0 %v527
    %1340 = vmatpush.msra.mxu0 %v519
    %1341 = vmatpush.msra.mxu0 %v511
    %1342 = vmatpush.msra.mxu0 %v503
    %1343 = vmatpush.msra.mxu0 %v495
    %1344 = vmatpush.msra.mxu0 %v487
    %1345 = vmatpush.msra.mxu0 %v479
    %1346 = vmatpush.msra.mxu0 %v471
    %1347 = vmatpush.msra.mxu0 %v463
    %1348 = vmatpush.msra.mxu0 %v455
    %1349 = vmatpush.msra.mxu0 %v447
    %1350 = vmatpush.msra.mxu0 %v439
    %1351 = vmatmul.f32.gmra.mxu0 %v302
    %v1352 = vpop.f32.mrf.mxu0
    %v1353 = vadd.f32 %v1333, %v1352
    %1354 = vdwg.mxu0
    %1355 = vmatpush.msra.mxu0 %v687
    %1356 = vmatpush.msra.mxu0 %v679
    %1357 = vmatpush.msra.mxu0 %v671
    %1358 = vmatpush.msra.mxu0 %v663
    %1359 = vmatpush.msra.mxu0 %v655
    %1360 = vmatpush.msra.mxu0 %v647
    %1361 = vmatpush.msra.mxu0 %v639
    %1362 = vmatpush.msra.mxu0 %v631
    %1363 = vmatpush.msra.mxu0 %v623
    %1364 = vmatpush.msra.mxu0 %v615
    %1365 = vmatpush.msra.mxu0 %v607
    %1366 = vmatpush.msra.mxu0 %v599
    %1367 = vmatpush.msra.mxu0 %v591
    %1368 = vmatpush.msra.mxu0 %v583
    %1369 = vmatpush.msra.mxu0 %v575
    %1370 = vmatpush.msra.mxu0 %v567
    %1371 = vmatmul.f32.gmra.mxu0 %v303
    %v1372 = vpop.f32.mrf.mxu0
    %v1373 = vadd.f32 %v1353, %v1372
    %1374 = vdwg.mxu0
    %1375 = vmatpush.msra.mxu0 %v815
    %1376 = vmatpush.msra.mxu0 %v807
    %1377 = vmatpush.msra.mxu0 %v799
    %1378 = vmatpush.msra.mxu0 %v791
    %1379 = vmatpush.msra.mxu0 %v783
    %1380 = vmatpush.msra.mxu0 %v775
    %1381 = vmatpush.msra.mxu0 %v767
    %1382 = vmatpush.msra.mxu0 %v759
    %1383 = vmatpush.msra.mxu0 %v751
    %1384 = vmatpush.msra.mxu0 %v743
    %1385 = vmatpush.msra.mxu0 %v735
    %1386 = vmatpush.msra.mxu0 %v727
    %1387 = vmatpush.msra.mxu0 %v719
    %1388 = vmatpush.msra.mxu0 %v711
    %1389 = vmatpush.msra.mxu0 %v703
    %1390 = vmatpush.msra.mxu0 %v695
    %1391 = vmatmul.f32.gmra.mxu0 %v304
    %v1392 = vpop.f32.mrf.mxu0
    %v1393 = vadd.f32 %v1373, %v1392
    %1394 = vdwg.mxu0
    %1395 = vmatpush.msra.mxu0 %v432
    %1396 = vmatpush.msra.mxu0 %v424
    %1397 = vmatpush.msra.mxu0 %v416
    %1398 = vmatpush.msra.mxu0 %v408
    %1399 = vmatpush.msra.mxu0 %v400
    %1400 = vmatpush.msra.mxu0 %v392
    %1401 = vmatpush.msra.mxu0 %v384
    %1402 = vmatpush.msra.mxu0 %v376
    %1403 = vmatpush.msra.mxu0 %v368
    %1404 = vmatpush.msra.mxu0 %v360
    %1405 = vmatpush.msra.mxu0 %v352
    %1406 = vmatpush.msra.mxu0 %v344
    %1407 = vmatpush.msra.mxu0 %v336
    %1408 = vmatpush.msra.mxu0 %v328
    %1409 = vmatpush.msra.mxu0 %v320
    %1410 = vmatpush.msra.mxu0 %v312
    %1411 = vmatmul.f32.gmra.mxu0 %v301
    %v1412 = vpop.f32.mrf.mxu0
    %v1413 = vadd.f32 %v826, %v1412
    %1414 = vdwg.mxu0
    %1415 = vmatpush.msra.mxu0 %v560
    %1416 = vmatpush.msra.mxu0 %v552
    %1417 = vmatpush.msra.mxu0 %v544
    %1418 = vmatpush.msra.mxu0 %v536
    %1419 = vmatpush.msra.mxu0 %v528
    %1420 = vmatpush.msra.mxu0 %v520
    %1421 = vmatpush.msra.mxu0 %v512
    %1422 = vmatpush.msra.mxu0 %v504
    %1423 = vmatpush.msra.mxu0 %v496
    %1424 = vmatpush.msra.mxu0 %v488
    %1425 = vmatpush.msra.mxu0 %v480
    %1426 = vmatpush.msra.mxu0 %v472
    %1427 = vmatpush.msra.mxu0 %v464
    %1428 = vmatpush.msra.mxu0 %v456
    %1429 = vmatpush.msra.mxu0 %v448
    %1430 = vmatpush.msra.mxu0 %v440
    %1431 = vmatmul.f32.gmra.mxu0 %v302
    %v1432 = vpop.f32.mrf.mxu0
    %v1433 = vadd.f32 %v1413, %v1432
    %1434 = vdwg.mxu0
    %1435 = vmatpush.msra.mxu0 %v688
    %1436 = vmatpush.msra.mxu0 %v680
    %1437 = vmatpush.msra.mxu0 %v672
    %1438 = vmatpush.msra.mxu0 %v664
    %1439 = vmatpush.msra.mxu0 %v656
    %1440 = vmatpush.msra.mxu0 %v648
    %1441 = vmatpush.msra.mxu0 %v640
    %1442 = vmatpush.msra.mxu0 %v632
    %1443 = vmatpush.msra.mxu0 %v624
    %1444 = vmatpush.msra.mxu0 %v616
    %1445 = vmatpush.msra.mxu0 %v608
    %1446 = vmatpush.msra.mxu0 %v600
    %1447 = vmatpush.msra.mxu0 %v592
    %1448 = vmatpush.msra.mxu0 %v584
    %1449 = vmatpush.msra.mxu0 %v576
    %1450 = vmatpush.msra.mxu0 %v568
    %1451 = vmatmul.f32.gmra.mxu0 %v303
    %v1452 = vpop.f32.mrf.mxu0
    %v1453 = vadd.f32 %v1433, %v1452
    %1454 = vdwg.mxu0
    %1455 = vmatpush.msra.mxu0 %v816
    %1456 = vmatpush.msra.mxu0 %v808
    %1457 = vmatpush.msra.mxu0 %v800
    %1458 = vmatpush.msra.mxu0 %v792
    %1459 = vmatpush.msra.mxu0 %v784
    %1460 = vmatpush.msra.mxu0 %v776
    %1461 = vmatpush.msra.mxu0 %v768
    %1462 = vmatpush.msra.mxu0 %v760
    %1463 = vmatpush.msra.mxu0 %v752
    %1464 = vmatpush.msra.mxu0 %v744
    %1465 = vmatpush.msra.mxu0 %v736
    %1466 = vmatpush.msra.mxu0 %v728
    %1467 = vmatpush.msra.mxu0 %v720
    %1468 = vmatpush.msra.mxu0 %v712
    %1469 = vmatpush.msra.mxu0 %v704
    %1470 = vmatpush.msra.mxu0 %v696
    %1471 = vmatmul.f32.gmra.mxu0 %v304
    %v1472 = vpop.f32.mrf.mxu0
    %v1473 = vadd.f32 %v1453, %v1472
    %1474 = vdwg.mxu0
    %v1475 = vmax.f32 %v913, 0.0
    %v1476 = vmax.f32 %v993, 0.0
    %v1477 = vmax.f32 %v1073, 0.0
    %v1478 = vmax.f32 %v1153, 0.0
    %v1479 = vmax.f32 %v1233, 0.0
    %v1480 = vmax.f32 %v1313, 0.0
    %v1481 = vmax.f32 %v1393, 0.0
    %v1482 = vmax.f32 %v1473, 0.0
    %v1483 = vld [vmem:[#allocation11] sm:$0xff]
    %v1484 = vld [vmem:[#allocation11 + $0x8] sm:$0xff]
    %v1485 = vld [vmem:[#allocation11 + $0x10] sm:$0xff]
    %v1486 = vld [vmem:[#allocation11 + $0x18] sm:$0xff]
    %v1487 = vld [vmem:[#allocation11 + $0x20] sm:$0xff]
    %v1488 = vld [vmem:[#allocation11 + $0x28] sm:$0xff]
    %v1489 = vld [vmem:[#allocation11 + $0x30] sm:$0xff]
    %v1490 = vld [vmem:[#allocation11 + $0x38] sm:$0xff]
    %v1491 = vld [vmem:[#allocation11 + $0x40] sm:$0xff]
    %v1492 = vld [vmem:[#allocation11 + $0x48] sm:$0xff]
    %v1493 = vld [vmem:[#allocation11 + $0x50] sm:$0xff]
    %v1494 = vld [vmem:[#allocation11 + $0x58] sm:$0xff]
    %v1495 = vld [vmem:[#allocation11 + $0x60] sm:$0xff]
    %v1496 = vld [vmem:[#allocation11 + $0x68] sm:$0xff]
    %v1497 = vld [vmem:[#allocation11 + $0x70] sm:$0xff]
    %v1498 = vld [vmem:[#allocation11 + $0x78] sm:$0xff]
    %v1499 = vld [vmem:[#allocation11 + $0x80] sm:$0xff]
    %v1500 = vld [vmem:[#allocation11 + $0x88] sm:$0xff]
    %v1501 = vld [vmem:[#allocation11 + $0x90] sm:$0xff]
    %v1502 = vld [vmem:[#allocation11 + $0x98] sm:$0xff]
    %v1503 = vld [vmem:[#allocation11 + $0xa0] sm:$0xff]
    %v1504 = vld [vmem:[#allocation11 + $0xa8] sm:$0xff]
    %v1505 = vld [vmem:[#allocation11 + $0xb0] sm:$0xff]
    %v1506 = vld [vmem:[#allocation11 + $0xb8] sm:$0xff]
    %v1507 = vld [vmem:[#allocation11 + $0xc0] sm:$0xff]
    %v1508 = vld [vmem:[#allocation11 + $0xc8] sm:$0xff]
    %v1509 = vld [vmem:[#allocation11 + $0xd0] sm:$0xff]
    %v1510 = vld [vmem:[#allocation11 + $0xd8] sm:$0xff]
    %v1511 = vld [vmem:[#allocation11 + $0xe0] sm:$0xff]
    %v1512 = vld [vmem:[#allocation11 + $0xe8] sm:$0xff]
    %v1513 = vld [vmem:[#allocation11 + $0xf0] sm:$0xff]
    %v1514 = vld [vmem:[#allocation11 + $0xf8] sm:$0xff]
    %v1515 = vld [vmem:[#allocation11 + $0x100] sm:$0xff]
    %v1516 = vld [vmem:[#allocation11 + $0x108] sm:$0xff]
    %v1517 = vld [vmem:[#allocation11 + $0x110] sm:$0xff]
    %v1518 = vld [vmem:[#allocation11 + $0x118] sm:$0xff]
    %v1519 = vld [vmem:[#allocation11 + $0x120] sm:$0xff]
    %v1520 = vld [vmem:[#allocation11 + $0x128] sm:$0xff]
    %v1521 = vld [vmem:[#allocation11 + $0x130] sm:$0xff]
    %v1522 = vld [vmem:[#allocation11 + $0x138] sm:$0xff]
    %v1523 = vld [vmem:[#allocation11 + $0x140] sm:$0xff]
    %v1524 = vld [vmem:[#allocation11 + $0x148] sm:$0xff]
    %v1525 = vld [vmem:[#allocation11 + $0x150] sm:$0xff]
    %v1526 = vld [vmem:[#allocation11 + $0x158] sm:$0xff]
    %v1527 = vld [vmem:[#allocation11 + $0x160] sm:$0xff]
    %v1528 = vld [vmem:[#allocation11 + $0x168] sm:$0xff]
    %v1529 = vld [vmem:[#allocation11 + $0x170] sm:$0xff]
    %v1530 = vld [vmem:[#allocation11 + $0x178] sm:$0xff]
    %v1531 = vld [vmem:[#allocation11 + $0x180] sm:$0xff]
    %v1532 = vld [vmem:[#allocation11 + $0x188] sm:$0xff]
    %v1533 = vld [vmem:[#allocation11 + $0x190] sm:$0xff]
    %v1534 = vld [vmem:[#allocation11 + $0x198] sm:$0xff]
    %v1535 = vld [vmem:[#allocation11 + $0x1a0] sm:$0xff]
    %v1536 = vld [vmem:[#allocation11 + $0x1a8] sm:$0xff]
    %v1537 = vld [vmem:[#allocation11 + $0x1b0] sm:$0xff]
    %v1538 = vld [vmem:[#allocation11 + $0x1b8] sm:$0xff]
    %v1539 = vld [vmem:[#allocation11 + $0x1c0] sm:$0xff]
    %v1540 = vld [vmem:[#allocation11 + $0x1c8] sm:$0xff]
    %v1541 = vld [vmem:[#allocation11 + $0x1d0] sm:$0xff]
    %v1542 = vld [vmem:[#allocation11 + $0x1d8] sm:$0xff]
    %v1543 = vld [vmem:[#allocation11 + $0x1e0] sm:$0xff]
    %v1544 = vld [vmem:[#allocation11 + $0x1e8] sm:$0xff]
    %v1545 = vld [vmem:[#allocation11 + $0x1f0] sm:$0xff]
    %v1546 = vld [vmem:[#allocation11 + $0x1f8] sm:$0xff]
    %v1547 = vld [vmem:[#allocation11 + $0x200] sm:$0xff]
    %v1548 = vld [vmem:[#allocation11 + $0x208] sm:$0xff]
    %v1549 = vld [vmem:[#allocation11 + $0x210] sm:$0xff]
    %v1550 = vld [vmem:[#allocation11 + $0x218] sm:$0xff]
    %v1551 = vld [vmem:[#allocation11 + $0x220] sm:$0xff]
    %v1552 = vld [vmem:[#allocation11 + $0x228] sm:$0xff]
    %v1553 = vld [vmem:[#allocation11 + $0x230] sm:$0xff]
    %v1554 = vld [vmem:[#allocation11 + $0x238] sm:$0xff]
    %v1555 = vld [vmem:[#allocation11 + $0x240] sm:$0xff]
    %v1556 = vld [vmem:[#allocation11 + $0x248] sm:$0xff]
    %v1557 = vld [vmem:[#allocation11 + $0x250] sm:$0xff]
    %v1558 = vld [vmem:[#allocation11 + $0x258] sm:$0xff]
    %v1559 = vld [vmem:[#allocation11 + $0x260] sm:$0xff]
    %v1560 = vld [vmem:[#allocation11 + $0x268] sm:$0xff]
    %v1561 = vld [vmem:[#allocation11 + $0x270] sm:$0xff]
    %v1562 = vld [vmem:[#allocation11 + $0x278] sm:$0xff]
    %v1563 = vld [vmem:[#allocation11 + $0x280] sm:$0xff]
    %v1564 = vld [vmem:[#allocation11 + $0x288] sm:$0xff]
    %v1565 = vld [vmem:[#allocation11 + $0x290] sm:$0xff]
    %v1566 = vld [vmem:[#allocation11 + $0x298] sm:$0xff]
    %v1567 = vld [vmem:[#allocation11 + $0x2a0] sm:$0xff]
    %v1568 = vld [vmem:[#allocation11 + $0x2a8] sm:$0xff]
    %v1569 = vld [vmem:[#allocation11 + $0x2b0] sm:$0xff]
    %v1570 = vld [vmem:[#allocation11 + $0x2b8] sm:$0xff]
    %v1571 = vld [vmem:[#allocation11 + $0x2c0] sm:$0xff]
    %v1572 = vld [vmem:[#allocation11 + $0x2c8] sm:$0xff]
    %v1573 = vld [vmem:[#allocation11 + $0x2d0] sm:$0xff]
    %v1574 = vld [vmem:[#allocation11 + $0x2d8] sm:$0xff]
    %v1575 = vld [vmem:[#allocation11 + $0x2e0] sm:$0xff]
    %v1576 = vld [vmem:[#allocation11 + $0x2e8] sm:$0xff]
    %v1577 = vld [vmem:[#allocation11 + $0x2f0] sm:$0xff]
    %v1578 = vld [vmem:[#allocation11 + $0x2f8] sm:$0xff]
    %v1579 = vld [vmem:[#allocation11 + $0x300] sm:$0xff]
    %v1580 = vld [vmem:[#allocation11 + $0x308] sm:$0xff]
    %v1581 = vld [vmem:[#allocation11 + $0x310] sm:$0xff]
    %v1582 = vld [vmem:[#allocation11 + $0x318] sm:$0xff]
    %v1583 = vld [vmem:[#allocation11 + $0x320] sm:$0xff]
    %v1584 = vld [vmem:[#allocation11 + $0x328] sm:$0xff]
    %v1585 = vld [vmem:[#allocation11 + $0x330] sm:$0xff]
    %v1586 = vld [vmem:[#allocation11 + $0x338] sm:$0xff]
    %v1587 = vld [vmem:[#allocation11 + $0x340] sm:$0xff]
    %v1588 = vld [vmem:[#allocation11 + $0x348] sm:$0xff]
    %v1589 = vld [vmem:[#allocation11 + $0x350] sm:$0xff]
    %v1590 = vld [vmem:[#allocation11 + $0x358] sm:$0xff]
    %v1591 = vld [vmem:[#allocation11 + $0x360] sm:$0xff]
    %v1592 = vld [vmem:[#allocation11 + $0x368] sm:$0xff]
    %v1593 = vld [vmem:[#allocation11 + $0x370] sm:$0xff]
    %v1594 = vld [vmem:[#allocation11 + $0x378] sm:$0xff]
    %v1595 = vld [vmem:[#allocation11 + $0x380] sm:$0xff]
    %v1596 = vld [vmem:[#allocation11 + $0x388] sm:$0xff]
    %v1597 = vld [vmem:[#allocation11 + $0x390] sm:$0xff]
    %v1598 = vld [vmem:[#allocation11 + $0x398] sm:$0xff]
    %v1599 = vld [vmem:[#allocation11 + $0x3a0] sm:$0xff]
    %v1600 = vld [vmem:[#allocation11 + $0x3a8] sm:$0xff]
    %v1601 = vld [vmem:[#allocation11 + $0x3b0] sm:$0xff]
    %v1602 = vld [vmem:[#allocation11 + $0x3b8] sm:$0xff]
    %v1603 = vld [vmem:[#allocation11 + $0x3c0] sm:$0xff]
    %v1604 = vld [vmem:[#allocation11 + $0x3c8] sm:$0xff]
    %v1605 = vld [vmem:[#allocation11 + $0x3d0] sm:$0xff]
    %v1606 = vld [vmem:[#allocation11 + $0x3d8] sm:$0xff]
    %v1607 = vld [vmem:[#allocation11 + $0x3e0] sm:$0xff]
    %v1608 = vld [vmem:[#allocation11 + $0x3e8] sm:$0xff]
    %v1609 = vld [vmem:[#allocation11 + $0x3f0] sm:$0xff]
    %v1610 = vld [vmem:[#allocation11 + $0x3f8] sm:$0xff]
    %v1611 = vld [vmem:[#allocation11 + $0x400] sm:$0xff]
    %v1612 = vld [vmem:[#allocation11 + $0x408] sm:$0xff]
    %v1613 = vld [vmem:[#allocation11 + $0x410] sm:$0xff]
    %v1614 = vld [vmem:[#allocation11 + $0x418] sm:$0xff]
    %v1615 = vld [vmem:[#allocation11 + $0x420] sm:$0xff]
    %v1616 = vld [vmem:[#allocation11 + $0x428] sm:$0xff]
    %v1617 = vld [vmem:[#allocation11 + $0x430] sm:$0xff]
    %v1618 = vld [vmem:[#allocation11 + $0x438] sm:$0xff]
    %v1619 = vld [vmem:[#allocation11 + $0x440] sm:$0xff]
    %v1620 = vld [vmem:[#allocation11 + $0x448] sm:$0xff]
    %v1621 = vld [vmem:[#allocation11 + $0x450] sm:$0xff]
    %v1622 = vld [vmem:[#allocation11 + $0x458] sm:$0xff]
    %v1623 = vld [vmem:[#allocation11 + $0x460] sm:$0xff]
    %v1624 = vld [vmem:[#allocation11 + $0x468] sm:$0xff]
    %v1625 = vld [vmem:[#allocation11 + $0x470] sm:$0xff]
    %v1626 = vld [vmem:[#allocation11 + $0x478] sm:$0xff]
    %v1627 = vld [vmem:[#allocation11 + $0x480] sm:$0xff]
    %v1628 = vld [vmem:[#allocation11 + $0x488] sm:$0xff]
    %v1629 = vld [vmem:[#allocation11 + $0x490] sm:$0xff]
    %v1630 = vld [vmem:[#allocation11 + $0x498] sm:$0xff]
    %v1631 = vld [vmem:[#allocation11 + $0x4a0] sm:$0xff]
    %v1632 = vld [vmem:[#allocation11 + $0x4a8] sm:$0xff]
    %v1633 = vld [vmem:[#allocation11 + $0x4b0] sm:$0xff]
    %v1634 = vld [vmem:[#allocation11 + $0x4b8] sm:$0xff]
    %v1635 = vld [vmem:[#allocation11 + $0x4c0] sm:$0xff]
    %v1636 = vld [vmem:[#allocation11 + $0x4c8] sm:$0xff]
    %v1637 = vld [vmem:[#allocation11 + $0x4d0] sm:$0xff]
    %v1638 = vld [vmem:[#allocation11 + $0x4d8] sm:$0xff]
    %v1639 = vld [vmem:[#allocation11 + $0x4e0] sm:$0xff]
    %v1640 = vld [vmem:[#allocation11 + $0x4e8] sm:$0xff]
    %v1641 = vld [vmem:[#allocation11 + $0x4f0] sm:$0xff]
    %v1642 = vld [vmem:[#allocation11 + $0x4f8] sm:$0xff]
    %v1643 = vld [vmem:[#allocation11 + $0x500] sm:$0xff]
    %v1644 = vld [vmem:[#allocation11 + $0x508] sm:$0xff]
    %v1645 = vld [vmem:[#allocation11 + $0x510] sm:$0xff]
    %v1646 = vld [vmem:[#allocation11 + $0x518] sm:$0xff]
    %v1647 = vld [vmem:[#allocation11 + $0x520] sm:$0xff]
    %v1648 = vld [vmem:[#allocation11 + $0x528] sm:$0xff]
    %v1649 = vld [vmem:[#allocation11 + $0x530] sm:$0xff]
    %v1650 = vld [vmem:[#allocation11 + $0x538] sm:$0xff]
    %v1651 = vld [vmem:[#allocation11 + $0x540] sm:$0xff]
    %v1652 = vld [vmem:[#allocation11 + $0x548] sm:$0xff]
    %v1653 = vld [vmem:[#allocation11 + $0x550] sm:$0xff]
    %v1654 = vld [vmem:[#allocation11 + $0x558] sm:$0xff]
    %v1655 = vld [vmem:[#allocation11 + $0x560] sm:$0xff]
    %v1656 = vld [vmem:[#allocation11 + $0x568] sm:$0xff]
    %v1657 = vld [vmem:[#allocation11 + $0x570] sm:$0xff]
    %v1658 = vld [vmem:[#allocation11 + $0x578] sm:$0xff]
    %v1659 = vld [vmem:[#allocation11 + $0x580] sm:$0xff]
    %v1660 = vld [vmem:[#allocation11 + $0x588] sm:$0xff]
    %v1661 = vld [vmem:[#allocation11 + $0x590] sm:$0xff]
    %v1662 = vld [vmem:[#allocation11 + $0x598] sm:$0xff]
    %v1663 = vld [vmem:[#allocation11 + $0x5a0] sm:$0xff]
    %v1664 = vld [vmem:[#allocation11 + $0x5a8] sm:$0xff]
    %v1665 = vld [vmem:[#allocation11 + $0x5b0] sm:$0xff]
    %v1666 = vld [vmem:[#allocation11 + $0x5b8] sm:$0xff]
    %v1667 = vld [vmem:[#allocation11 + $0x5c0] sm:$0xff]
    %v1668 = vld [vmem:[#allocation11 + $0x5c8] sm:$0xff]
    %v1669 = vld [vmem:[#allocation11 + $0x5d0] sm:$0xff]
    %v1670 = vld [vmem:[#allocation11 + $0x5d8] sm:$0xff]
    %v1671 = vld [vmem:[#allocation11 + $0x5e0] sm:$0xff]
    %v1672 = vld [vmem:[#allocation11 + $0x5e8] sm:$0xff]
    %v1673 = vld [vmem:[#allocation11 + $0x5f0] sm:$0xff]
    %v1674 = vld [vmem:[#allocation11 + $0x5f8] sm:$0xff]
    %v1675 = vld [vmem:[#allocation11 + $0x600] sm:$0xff]
    %v1676 = vld [vmem:[#allocation11 + $0x608] sm:$0xff]
    %v1677 = vld [vmem:[#allocation11 + $0x610] sm:$0xff]
    %v1678 = vld [vmem:[#allocation11 + $0x618] sm:$0xff]
    %v1679 = vld [vmem:[#allocation11 + $0x620] sm:$0xff]
    %v1680 = vld [vmem:[#allocation11 + $0x628] sm:$0xff]
    %v1681 = vld [vmem:[#allocation11 + $0x630] sm:$0xff]
    %v1682 = vld [vmem:[#allocation11 + $0x638] sm:$0xff]
    %v1683 = vld [vmem:[#allocation11 + $0x640] sm:$0xff]
    %v1684 = vld [vmem:[#allocation11 + $0x648] sm:$0xff]
    %v1685 = vld [vmem:[#allocation11 + $0x650] sm:$0xff]
    %v1686 = vld [vmem:[#allocation11 + $0x658] sm:$0xff]
    %v1687 = vld [vmem:[#allocation11 + $0x660] sm:$0xff]
    %v1688 = vld [vmem:[#allocation11 + $0x668] sm:$0xff]
    %v1689 = vld [vmem:[#allocation11 + $0x670] sm:$0xff]
    %v1690 = vld [vmem:[#allocation11 + $0x678] sm:$0xff]
    %v1691 = vld [vmem:[#allocation11 + $0x680] sm:$0xff]
    %v1692 = vld [vmem:[#allocation11 + $0x688] sm:$0xff]
    %v1693 = vld [vmem:[#allocation11 + $0x690] sm:$0xff]
    %v1694 = vld [vmem:[#allocation11 + $0x698] sm:$0xff]
    %v1695 = vld [vmem:[#allocation11 + $0x6a0] sm:$0xff]
    %v1696 = vld [vmem:[#allocation11 + $0x6a8] sm:$0xff]
    %v1697 = vld [vmem:[#allocation11 + $0x6b0] sm:$0xff]
    %v1698 = vld [vmem:[#allocation11 + $0x6b8] sm:$0xff]
    %v1699 = vld [vmem:[#allocation11 + $0x6c0] sm:$0xff]
    %v1700 = vld [vmem:[#allocation11 + $0x6c8] sm:$0xff]
    %v1701 = vld [vmem:[#allocation11 + $0x6d0] sm:$0xff]
    %v1702 = vld [vmem:[#allocation11 + $0x6d8] sm:$0xff]
    %v1703 = vld [vmem:[#allocation11 + $0x6e0] sm:$0xff]
    %v1704 = vld [vmem:[#allocation11 + $0x6e8] sm:$0xff]
    %v1705 = vld [vmem:[#allocation11 + $0x6f0] sm:$0xff]
    %v1706 = vld [vmem:[#allocation11 + $0x6f8] sm:$0xff]
    %v1707 = vld [vmem:[#allocation11 + $0x700] sm:$0xff]
    %v1708 = vld [vmem:[#allocation11 + $0x708] sm:$0xff]
    %v1709 = vld [vmem:[#allocation11 + $0x710] sm:$0xff]
    %v1710 = vld [vmem:[#allocation11 + $0x718] sm:$0xff]
    %v1711 = vld [vmem:[#allocation11 + $0x720] sm:$0xff]
    %v1712 = vld [vmem:[#allocation11 + $0x728] sm:$0xff]
    %v1713 = vld [vmem:[#allocation11 + $0x730] sm:$0xff]
    %v1714 = vld [vmem:[#allocation11 + $0x738] sm:$0xff]
    %v1715 = vld [vmem:[#allocation11 + $0x740] sm:$0xff]
    %v1716 = vld [vmem:[#allocation11 + $0x748] sm:$0xff]
    %v1717 = vld [vmem:[#allocation11 + $0x750] sm:$0xff]
    %v1718 = vld [vmem:[#allocation11 + $0x758] sm:$0xff]
    %v1719 = vld [vmem:[#allocation11 + $0x760] sm:$0xff]
    %v1720 = vld [vmem:[#allocation11 + $0x768] sm:$0xff]
    %v1721 = vld [vmem:[#allocation11 + $0x770] sm:$0xff]
    %v1722 = vld [vmem:[#allocation11 + $0x778] sm:$0xff]
    %v1723 = vld [vmem:[#allocation11 + $0x780] sm:$0xff]
    %v1724 = vld [vmem:[#allocation11 + $0x788] sm:$0xff]
    %v1725 = vld [vmem:[#allocation11 + $0x790] sm:$0xff]
    %v1726 = vld [vmem:[#allocation11 + $0x798] sm:$0xff]
    %v1727 = vld [vmem:[#allocation11 + $0x7a0] sm:$0xff]
    %v1728 = vld [vmem:[#allocation11 + $0x7a8] sm:$0xff]
    %v1729 = vld [vmem:[#allocation11 + $0x7b0] sm:$0xff]
    %v1730 = vld [vmem:[#allocation11 + $0x7b8] sm:$0xff]
    %v1731 = vld [vmem:[#allocation11 + $0x7c0] sm:$0xff]
    %v1732 = vld [vmem:[#allocation11 + $0x7c8] sm:$0xff]
    %v1733 = vld [vmem:[#allocation11 + $0x7d0] sm:$0xff]
    %v1734 = vld [vmem:[#allocation11 + $0x7d8] sm:$0xff]
    %v1735 = vld [vmem:[#allocation11 + $0x7e0] sm:$0xff]
    %v1736 = vld [vmem:[#allocation11 + $0x7e8] sm:$0xff]
    %v1737 = vld [vmem:[#allocation11 + $0x7f0] sm:$0xff]
    %v1738 = vld [vmem:[#allocation11 + $0x7f8] sm:$0xff]
    %v1739 = vld [vmem:[#allocation11 + $0x800] sm:$0xff]
    %v1740 = vld [vmem:[#allocation11 + $0x808] sm:$0xff]
    %v1741 = vld [vmem:[#allocation11 + $0x810] sm:$0xff]
    %v1742 = vld [vmem:[#allocation11 + $0x818] sm:$0xff]
    %v1743 = vld [vmem:[#allocation11 + $0x820] sm:$0xff]
    %v1744 = vld [vmem:[#allocation11 + $0x828] sm:$0xff]
    %v1745 = vld [vmem:[#allocation11 + $0x830] sm:$0xff]
    %v1746 = vld [vmem:[#allocation11 + $0x838] sm:$0xff]
    %v1747 = vld [vmem:[#allocation11 + $0x840] sm:$0xff]
    %v1748 = vld [vmem:[#allocation11 + $0x848] sm:$0xff]
    %v1749 = vld [vmem:[#allocation11 + $0x850] sm:$0xff]
    %v1750 = vld [vmem:[#allocation11 + $0x858] sm:$0xff]
    %v1751 = vld [vmem:[#allocation11 + $0x860] sm:$0xff]
    %v1752 = vld [vmem:[#allocation11 + $0x868] sm:$0xff]
    %v1753 = vld [vmem:[#allocation11 + $0x870] sm:$0xff]
    %v1754 = vld [vmem:[#allocation11 + $0x878] sm:$0xff]
    %v1755 = vld [vmem:[#allocation11 + $0x880] sm:$0xff]
    %v1756 = vld [vmem:[#allocation11 + $0x888] sm:$0xff]
    %v1757 = vld [vmem:[#allocation11 + $0x890] sm:$0xff]
    %v1758 = vld [vmem:[#allocation11 + $0x898] sm:$0xff]
    %v1759 = vld [vmem:[#allocation11 + $0x8a0] sm:$0xff]
    %v1760 = vld [vmem:[#allocation11 + $0x8a8] sm:$0xff]
    %v1761 = vld [vmem:[#allocation11 + $0x8b0] sm:$0xff]
    %v1762 = vld [vmem:[#allocation11 + $0x8b8] sm:$0xff]
    %v1763 = vld [vmem:[#allocation11 + $0x8c0] sm:$0xff]
    %v1764 = vld [vmem:[#allocation11 + $0x8c8] sm:$0xff]
    %v1765 = vld [vmem:[#allocation11 + $0x8d0] sm:$0xff]
    %v1766 = vld [vmem:[#allocation11 + $0x8d8] sm:$0xff]
    %v1767 = vld [vmem:[#allocation11 + $0x8e0] sm:$0xff]
    %v1768 = vld [vmem:[#allocation11 + $0x8e8] sm:$0xff]
    %v1769 = vld [vmem:[#allocation11 + $0x8f0] sm:$0xff]
    %v1770 = vld [vmem:[#allocation11 + $0x8f8] sm:$0xff]
    %v1771 = vld [vmem:[#allocation11 + $0x900] sm:$0xff]
    %v1772 = vld [vmem:[#allocation11 + $0x908] sm:$0xff]
    %v1773 = vld [vmem:[#allocation11 + $0x910] sm:$0xff]
    %v1774 = vld [vmem:[#allocation11 + $0x918] sm:$0xff]
    %v1775 = vld [vmem:[#allocation11 + $0x920] sm:$0xff]
    %v1776 = vld [vmem:[#allocation11 + $0x928] sm:$0xff]
    %v1777 = vld [vmem:[#allocation11 + $0x930] sm:$0xff]
    %v1778 = vld [vmem:[#allocation11 + $0x938] sm:$0xff]
    %v1779 = vld [vmem:[#allocation11 + $0x940] sm:$0xff]
    %v1780 = vld [vmem:[#allocation11 + $0x948] sm:$0xff]
    %v1781 = vld [vmem:[#allocation11 + $0x950] sm:$0xff]
    %v1782 = vld [vmem:[#allocation11 + $0x958] sm:$0xff]
    %v1783 = vld [vmem:[#allocation11 + $0x960] sm:$0xff]
    %v1784 = vld [vmem:[#allocation11 + $0x968] sm:$0xff]
    %v1785 = vld [vmem:[#allocation11 + $0x970] sm:$0xff]
    %v1786 = vld [vmem:[#allocation11 + $0x978] sm:$0xff]
    %v1787 = vld [vmem:[#allocation11 + $0x980] sm:$0xff]
    %v1788 = vld [vmem:[#allocation11 + $0x988] sm:$0xff]
    %v1789 = vld [vmem:[#allocation11 + $0x990] sm:$0xff]
    %v1790 = vld [vmem:[#allocation11 + $0x998] sm:$0xff]
    %v1791 = vld [vmem:[#allocation11 + $0x9a0] sm:$0xff]
    %v1792 = vld [vmem:[#allocation11 + $0x9a8] sm:$0xff]
    %v1793 = vld [vmem:[#allocation11 + $0x9b0] sm:$0xff]
    %v1794 = vld [vmem:[#allocation11 + $0x9b8] sm:$0xff]
    %v1795 = vld [vmem:[#allocation11 + $0x9c0] sm:$0xff]
    %v1796 = vld [vmem:[#allocation11 + $0x9c8] sm:$0xff]
    %v1797 = vld [vmem:[#allocation11 + $0x9d0] sm:$0xff]
    %v1798 = vld [vmem:[#allocation11 + $0x9d8] sm:$0xff]
    %v1799 = vld [vmem:[#allocation11 + $0x9e0] sm:$0xff]
    %v1800 = vld [vmem:[#allocation11 + $0x9e8] sm:$0xff]
    %v1801 = vld [vmem:[#allocation11 + $0x9f0] sm:$0xff]
    %v1802 = vld [vmem:[#allocation11 + $0x9f8] sm:$0xff]
    %v1803 = vld [vmem:[#allocation11 + $0xa00] sm:$0xff]
    %v1804 = vld [vmem:[#allocation11 + $0xa08] sm:$0xff]
    %v1805 = vld [vmem:[#allocation11 + $0xa10] sm:$0xff]
    %v1806 = vld [vmem:[#allocation11 + $0xa18] sm:$0xff]
    %v1807 = vld [vmem:[#allocation11 + $0xa20] sm:$0xff]
    %v1808 = vld [vmem:[#allocation11 + $0xa28] sm:$0xff]
    %v1809 = vld [vmem:[#allocation11 + $0xa30] sm:$0xff]
    %v1810 = vld [vmem:[#allocation11 + $0xa38] sm:$0xff]
    %v1811 = vld [vmem:[#allocation11 + $0xa40] sm:$0xff]
    %v1812 = vld [vmem:[#allocation11 + $0xa48] sm:$0xff]
    %v1813 = vld [vmem:[#allocation11 + $0xa50] sm:$0xff]
    %v1814 = vld [vmem:[#allocation11 + $0xa58] sm:$0xff]
    %v1815 = vld [vmem:[#allocation11 + $0xa60] sm:$0xff]
    %v1816 = vld [vmem:[#allocation11 + $0xa68] sm:$0xff]
    %v1817 = vld [vmem:[#allocation11 + $0xa70] sm:$0xff]
    %v1818 = vld [vmem:[#allocation11 + $0xa78] sm:$0xff]
    %v1819 = vld [vmem:[#allocation11 + $0xa80] sm:$0xff]
    %v1820 = vld [vmem:[#allocation11 + $0xa88] sm:$0xff]
    %v1821 = vld [vmem:[#allocation11 + $0xa90] sm:$0xff]
    %v1822 = vld [vmem:[#allocation11 + $0xa98] sm:$0xff]
    %v1823 = vld [vmem:[#allocation11 + $0xaa0] sm:$0xff]
    %v1824 = vld [vmem:[#allocation11 + $0xaa8] sm:$0xff]
    %v1825 = vld [vmem:[#allocation11 + $0xab0] sm:$0xff]
    %v1826 = vld [vmem:[#allocation11 + $0xab8] sm:$0xff]
    %v1827 = vld [vmem:[#allocation11 + $0xac0] sm:$0xff]
    %v1828 = vld [vmem:[#allocation11 + $0xac8] sm:$0xff]
    %v1829 = vld [vmem:[#allocation11 + $0xad0] sm:$0xff]
    %v1830 = vld [vmem:[#allocation11 + $0xad8] sm:$0xff]
    %v1831 = vld [vmem:[#allocation11 + $0xae0] sm:$0xff]
    %v1832 = vld [vmem:[#allocation11 + $0xae8] sm:$0xff]
    %v1833 = vld [vmem:[#allocation11 + $0xaf0] sm:$0xff]
    %v1834 = vld [vmem:[#allocation11 + $0xaf8] sm:$0xff]
    %v1835 = vld [vmem:[#allocation11 + $0xb00] sm:$0xff]
    %v1836 = vld [vmem:[#allocation11 + $0xb08] sm:$0xff]
    %v1837 = vld [vmem:[#allocation11 + $0xb10] sm:$0xff]
    %v1838 = vld [vmem:[#allocation11 + $0xb18] sm:$0xff]
    %v1839 = vld [vmem:[#allocation11 + $0xb20] sm:$0xff]
    %v1840 = vld [vmem:[#allocation11 + $0xb28] sm:$0xff]
    %v1841 = vld [vmem:[#allocation11 + $0xb30] sm:$0xff]
    %v1842 = vld [vmem:[#allocation11 + $0xb38] sm:$0xff]
    %v1843 = vld [vmem:[#allocation11 + $0xb40] sm:$0xff]
    %v1844 = vld [vmem:[#allocation11 + $0xb48] sm:$0xff]
    %v1845 = vld [vmem:[#allocation11 + $0xb50] sm:$0xff]
    %v1846 = vld [vmem:[#allocation11 + $0xb58] sm:$0xff]
    %v1847 = vld [vmem:[#allocation11 + $0xb60] sm:$0xff]
    %v1848 = vld [vmem:[#allocation11 + $0xb68] sm:$0xff]
    %v1849 = vld [vmem:[#allocation11 + $0xb70] sm:$0xff]
    %v1850 = vld [vmem:[#allocation11 + $0xb78] sm:$0xff]
    %v1851 = vld [vmem:[#allocation11 + $0xb80] sm:$0xff]
    %v1852 = vld [vmem:[#allocation11 + $0xb88] sm:$0xff]
    %v1853 = vld [vmem:[#allocation11 + $0xb90] sm:$0xff]
    %v1854 = vld [vmem:[#allocation11 + $0xb98] sm:$0xff]
    %v1855 = vld [vmem:[#allocation11 + $0xba0] sm:$0xff]
    %v1856 = vld [vmem:[#allocation11 + $0xba8] sm:$0xff]
    %v1857 = vld [vmem:[#allocation11 + $0xbb0] sm:$0xff]
    %v1858 = vld [vmem:[#allocation11 + $0xbb8] sm:$0xff]
    %v1859 = vld [vmem:[#allocation11 + $0xbc0] sm:$0xff]
    %v1860 = vld [vmem:[#allocation11 + $0xbc8] sm:$0xff]
    %v1861 = vld [vmem:[#allocation11 + $0xbd0] sm:$0xff]
    %v1862 = vld [vmem:[#allocation11 + $0xbd8] sm:$0xff]
    %v1863 = vld [vmem:[#allocation11 + $0xbe0] sm:$0xff]
    %v1864 = vld [vmem:[#allocation11 + $0xbe8] sm:$0xff]
    %v1865 = vld [vmem:[#allocation11 + $0xbf0] sm:$0xff]
    %v1866 = vld [vmem:[#allocation11 + $0xbf8] sm:$0xff]
    %v1867 = vld [vmem:[#allocation11 + $0xc00] sm:$0xff]
    %v1868 = vld [vmem:[#allocation11 + $0xc08] sm:$0xff]
    %v1869 = vld [vmem:[#allocation11 + $0xc10] sm:$0xff]
    %v1870 = vld [vmem:[#allocation11 + $0xc18] sm:$0xff]
    %v1871 = vld [vmem:[#allocation11 + $0xc20] sm:$0xff]
    %v1872 = vld [vmem:[#allocation11 + $0xc28] sm:$0xff]
    %v1873 = vld [vmem:[#allocation11 + $0xc30] sm:$0xff]
    %v1874 = vld [vmem:[#allocation11 + $0xc38] sm:$0xff]
    %v1875 = vld [vmem:[#allocation11 + $0xc40] sm:$0xff]
    %v1876 = vld [vmem:[#allocation11 + $0xc48] sm:$0xff]
    %v1877 = vld [vmem:[#allocation11 + $0xc50] sm:$0xff]
    %v1878 = vld [vmem:[#allocation11 + $0xc58] sm:$0xff]
    %v1879 = vld [vmem:[#allocation11 + $0xc60] sm:$0xff]
    %v1880 = vld [vmem:[#allocation11 + $0xc68] sm:$0xff]
    %v1881 = vld [vmem:[#allocation11 + $0xc70] sm:$0xff]
    %v1882 = vld [vmem:[#allocation11 + $0xc78] sm:$0xff]
    %v1883 = vld [vmem:[#allocation11 + $0xc80] sm:$0xff]
    %v1884 = vld [vmem:[#allocation11 + $0xc88] sm:$0xff]
    %v1885 = vld [vmem:[#allocation11 + $0xc90] sm:$0xff]
    %v1886 = vld [vmem:[#allocation11 + $0xc98] sm:$0xff]
    %v1887 = vld [vmem:[#allocation11 + $0xca0] sm:$0xff]
    %v1888 = vld [vmem:[#allocation11 + $0xca8] sm:$0xff]
    %v1889 = vld [vmem:[#allocation11 + $0xcb0] sm:$0xff]
    %v1890 = vld [vmem:[#allocation11 + $0xcb8] sm:$0xff]
    %v1891 = vld [vmem:[#allocation11 + $0xcc0] sm:$0xff]
    %v1892 = vld [vmem:[#allocation11 + $0xcc8] sm:$0xff]
    %v1893 = vld [vmem:[#allocation11 + $0xcd0] sm:$0xff]
    %v1894 = vld [vmem:[#allocation11 + $0xcd8] sm:$0xff]
    %v1895 = vld [vmem:[#allocation11 + $0xce0] sm:$0xff]
    %v1896 = vld [vmem:[#allocation11 + $0xce8] sm:$0xff]
    %v1897 = vld [vmem:[#allocation11 + $0xcf0] sm:$0xff]
    %v1898 = vld [vmem:[#allocation11 + $0xcf8] sm:$0xff]
    %v1899 = vld [vmem:[#allocation11 + $0xd00] sm:$0xff]
    %v1900 = vld [vmem:[#allocation11 + $0xd08] sm:$0xff]
    %v1901 = vld [vmem:[#allocation11 + $0xd10] sm:$0xff]
    %v1902 = vld [vmem:[#allocation11 + $0xd18] sm:$0xff]
    %v1903 = vld [vmem:[#allocation11 + $0xd20] sm:$0xff]
    %v1904 = vld [vmem:[#allocation11 + $0xd28] sm:$0xff]
    %v1905 = vld [vmem:[#allocation11 + $0xd30] sm:$0xff]
    %v1906 = vld [vmem:[#allocation11 + $0xd38] sm:$0xff]
    %v1907 = vld [vmem:[#allocation11 + $0xd40] sm:$0xff]
    %v1908 = vld [vmem:[#allocation11 + $0xd48] sm:$0xff]
    %v1909 = vld [vmem:[#allocation11 + $0xd50] sm:$0xff]
    %v1910 = vld [vmem:[#allocation11 + $0xd58] sm:$0xff]
    %v1911 = vld [vmem:[#allocation11 + $0xd60] sm:$0xff]
    %v1912 = vld [vmem:[#allocation11 + $0xd68] sm:$0xff]
    %v1913 = vld [vmem:[#allocation11 + $0xd70] sm:$0xff]
    %v1914 = vld [vmem:[#allocation11 + $0xd78] sm:$0xff]
    %v1915 = vld [vmem:[#allocation11 + $0xd80] sm:$0xff]
    %v1916 = vld [vmem:[#allocation11 + $0xd88] sm:$0xff]
    %v1917 = vld [vmem:[#allocation11 + $0xd90] sm:$0xff]
    %v1918 = vld [vmem:[#allocation11 + $0xd98] sm:$0xff]
    %v1919 = vld [vmem:[#allocation11 + $0xda0] sm:$0xff]
    %v1920 = vld [vmem:[#allocation11 + $0xda8] sm:$0xff]
    %v1921 = vld [vmem:[#allocation11 + $0xdb0] sm:$0xff]
    %v1922 = vld [vmem:[#allocation11 + $0xdb8] sm:$0xff]
    %v1923 = vld [vmem:[#allocation11 + $0xdc0] sm:$0xff]
    %v1924 = vld [vmem:[#allocation11 + $0xdc8] sm:$0xff]
    %v1925 = vld [vmem:[#allocation11 + $0xdd0] sm:$0xff]
    %v1926 = vld [vmem:[#allocation11 + $0xdd8] sm:$0xff]
    %v1927 = vld [vmem:[#allocation11 + $0xde0] sm:$0xff]
    %v1928 = vld [vmem:[#allocation11 + $0xde8] sm:$0xff]
    %v1929 = vld [vmem:[#allocation11 + $0xdf0] sm:$0xff]
    %v1930 = vld [vmem:[#allocation11 + $0xdf8] sm:$0xff]
    %v1931 = vld [vmem:[#allocation11 + $0xe00] sm:$0xff]
    %v1932 = vld [vmem:[#allocation11 + $0xe08] sm:$0xff]
    %v1933 = vld [vmem:[#allocation11 + $0xe10] sm:$0xff]
    %v1934 = vld [vmem:[#allocation11 + $0xe18] sm:$0xff]
    %v1935 = vld [vmem:[#allocation11 + $0xe20] sm:$0xff]
    %v1936 = vld [vmem:[#allocation11 + $0xe28] sm:$0xff]
    %v1937 = vld [vmem:[#allocation11 + $0xe30] sm:$0xff]
    %v1938 = vld [vmem:[#allocation11 + $0xe38] sm:$0xff]
    %v1939 = vld [vmem:[#allocation11 + $0xe40] sm:$0xff]
    %v1940 = vld [vmem:[#allocation11 + $0xe48] sm:$0xff]
    %v1941 = vld [vmem:[#allocation11 + $0xe50] sm:$0xff]
    %v1942 = vld [vmem:[#allocation11 + $0xe58] sm:$0xff]
    %v1943 = vld [vmem:[#allocation11 + $0xe60] sm:$0xff]
    %v1944 = vld [vmem:[#allocation11 + $0xe68] sm:$0xff]
    %v1945 = vld [vmem:[#allocation11 + $0xe70] sm:$0xff]
    %v1946 = vld [vmem:[#allocation11 + $0xe78] sm:$0xff]
    %v1947 = vld [vmem:[#allocation11 + $0xe80] sm:$0xff]
    %v1948 = vld [vmem:[#allocation11 + $0xe88] sm:$0xff]
    %v1949 = vld [vmem:[#allocation11 + $0xe90] sm:$0xff]
    %v1950 = vld [vmem:[#allocation11 + $0xe98] sm:$0xff]
    %v1951 = vld [vmem:[#allocation11 + $0xea0] sm:$0xff]
    %v1952 = vld [vmem:[#allocation11 + $0xea8] sm:$0xff]
    %v1953 = vld [vmem:[#allocation11 + $0xeb0] sm:$0xff]
    %v1954 = vld [vmem:[#allocation11 + $0xeb8] sm:$0xff]
    %v1955 = vld [vmem:[#allocation11 + $0xec0] sm:$0xff]
    %v1956 = vld [vmem:[#allocation11 + $0xec8] sm:$0xff]
    %v1957 = vld [vmem:[#allocation11 + $0xed0] sm:$0xff]
    %v1958 = vld [vmem:[#allocation11 + $0xed8] sm:$0xff]
    %v1959 = vld [vmem:[#allocation11 + $0xee0] sm:$0xff]
    %v1960 = vld [vmem:[#allocation11 + $0xee8] sm:$0xff]
    %v1961 = vld [vmem:[#allocation11 + $0xef0] sm:$0xff]
    %v1962 = vld [vmem:[#allocation11 + $0xef8] sm:$0xff]
    %v1963 = vld [vmem:[#allocation11 + $0xf00] sm:$0xff]
    %v1964 = vld [vmem:[#allocation11 + $0xf08] sm:$0xff]
    %v1965 = vld [vmem:[#allocation11 + $0xf10] sm:$0xff]
    %v1966 = vld [vmem:[#allocation11 + $0xf18] sm:$0xff]
    %v1967 = vld [vmem:[#allocation11 + $0xf20] sm:$0xff]
    %v1968 = vld [vmem:[#allocation11 + $0xf28] sm:$0xff]
    %v1969 = vld [vmem:[#allocation11 + $0xf30] sm:$0xff]
    %v1970 = vld [vmem:[#allocation11 + $0xf38] sm:$0xff]
    %v1971 = vld [vmem:[#allocation11 + $0xf40] sm:$0xff]
    %v1972 = vld [vmem:[#allocation11 + $0xf48] sm:$0xff]
    %v1973 = vld [vmem:[#allocation11 + $0xf50] sm:$0xff]
    %v1974 = vld [vmem:[#allocation11 + $0xf58] sm:$0xff]
    %v1975 = vld [vmem:[#allocation11 + $0xf60] sm:$0xff]
    %v1976 = vld [vmem:[#allocation11 + $0xf68] sm:$0xff]
    %v1977 = vld [vmem:[#allocation11 + $0xf70] sm:$0xff]
    %v1978 = vld [vmem:[#allocation11 + $0xf78] sm:$0xff]
    %v1979 = vld [vmem:[#allocation11 + $0xf80] sm:$0xff]
    %v1980 = vld [vmem:[#allocation11 + $0xf88] sm:$0xff]
    %v1981 = vld [vmem:[#allocation11 + $0xf90] sm:$0xff]
    %v1982 = vld [vmem:[#allocation11 + $0xf98] sm:$0xff]
    %v1983 = vld [vmem:[#allocation11 + $0xfa0] sm:$0xff]
    %v1984 = vld [vmem:[#allocation11 + $0xfa8] sm:$0xff]
    %v1985 = vld [vmem:[#allocation11 + $0xfb0] sm:$0xff]
    %v1986 = vld [vmem:[#allocation11 + $0xfb8] sm:$0xff]
    %v1987 = vld [vmem:[#allocation11 + $0xfc0] sm:$0xff]
    %v1988 = vld [vmem:[#allocation11 + $0xfc8] sm:$0xff]
    %v1989 = vld [vmem:[#allocation11 + $0xfd0] sm:$0xff]
    %v1990 = vld [vmem:[#allocation11 + $0xfd8] sm:$0xff]
    %v1991 = vld [vmem:[#allocation11 + $0xfe0] sm:$0xff]
    %v1992 = vld [vmem:[#allocation11 + $0xfe8] sm:$0xff]
    %v1993 = vld [vmem:[#allocation11 + $0xff0] sm:$0xff]
    %v1994 = vld [vmem:[#allocation11 + $0xff8] sm:$0xff]
    %v1995 = vld [vmem:[#allocation11 + $0x1000] sm:$0xff]
    %v1996 = vld [vmem:[#allocation11 + $0x1008] sm:$0xff]
    %v1997 = vld [vmem:[#allocation11 + $0x1010] sm:$0xff]
    %v1998 = vld [vmem:[#allocation11 + $0x1018] sm:$0xff]
    %v1999 = vld [vmem:[#allocation11 + $0x1020] sm:$0xff]
    %v2000 = vld [vmem:[#allocation11 + $0x1028] sm:$0xff]
    %v2001 = vld [vmem:[#allocation11 + $0x1030] sm:$0xff]
    %v2002 = vld [vmem:[#allocation11 + $0x1038] sm:$0xff]
    %v2003 = vld [vmem:[#allocation11 + $0x1040] sm:$0xff]
    %v2004 = vld [vmem:[#allocation11 + $0x1048] sm:$0xff]
    %v2005 = vld [vmem:[#allocation11 + $0x1050] sm:$0xff]
    %v2006 = vld [vmem:[#allocation11 + $0x1058] sm:$0xff]
    %v2007 = vld [vmem:[#allocation11 + $0x1060] sm:$0xff]
    %v2008 = vld [vmem:[#allocation11 + $0x1068] sm:$0xff]
    %v2009 = vld [vmem:[#allocation11 + $0x1070] sm:$0xff]
    %v2010 = vld [vmem:[#allocation11 + $0x1078] sm:$0xff]
    %v2011 = vld [vmem:[#allocation11 + $0x1080] sm:$0xff]
    %v2012 = vld [vmem:[#allocation11 + $0x1088] sm:$0xff]
    %v2013 = vld [vmem:[#allocation11 + $0x1090] sm:$0xff]
    %v2014 = vld [vmem:[#allocation11 + $0x1098] sm:$0xff]
    %v2015 = vld [vmem:[#allocation11 + $0x10a0] sm:$0xff]
    %v2016 = vld [vmem:[#allocation11 + $0x10a8] sm:$0xff]
    %v2017 = vld [vmem:[#allocation11 + $0x10b0] sm:$0xff]
    %v2018 = vld [vmem:[#allocation11 + $0x10b8] sm:$0xff]
    %v2019 = vld [vmem:[#allocation11 + $0x10c0] sm:$0xff]
    %v2020 = vld [vmem:[#allocation11 + $0x10c8] sm:$0xff]
    %v2021 = vld [vmem:[#allocation11 + $0x10d0] sm:$0xff]
    %v2022 = vld [vmem:[#allocation11 + $0x10d8] sm:$0xff]
    %v2023 = vld [vmem:[#allocation11 + $0x10e0] sm:$0xff]
    %v2024 = vld [vmem:[#allocation11 + $0x10e8] sm:$0xff]
    %v2025 = vld [vmem:[#allocation11 + $0x10f0] sm:$0xff]
    %v2026 = vld [vmem:[#allocation11 + $0x10f8] sm:$0xff]
    %v2027 = vld [vmem:[#allocation11 + $0x1100] sm:$0xff]
    %v2028 = vld [vmem:[#allocation11 + $0x1108] sm:$0xff]
    %v2029 = vld [vmem:[#allocation11 + $0x1110] sm:$0xff]
    %v2030 = vld [vmem:[#allocation11 + $0x1118] sm:$0xff]
    %v2031 = vld [vmem:[#allocation11 + $0x1120] sm:$0xff]
    %v2032 = vld [vmem:[#allocation11 + $0x1128] sm:$0xff]
    %v2033 = vld [vmem:[#allocation11 + $0x1130] sm:$0xff]
    %v2034 = vld [vmem:[#allocation11 + $0x1138] sm:$0xff]
    %v2035 = vld [vmem:[#allocation11 + $0x1140] sm:$0xff]
    %v2036 = vld [vmem:[#allocation11 + $0x1148] sm:$0xff]
    %v2037 = vld [vmem:[#allocation11 + $0x1150] sm:$0xff]
    %v2038 = vld [vmem:[#allocation11 + $0x1158] sm:$0xff]
    %v2039 = vld [vmem:[#allocation11 + $0x1160] sm:$0xff]
    %v2040 = vld [vmem:[#allocation11 + $0x1168] sm:$0xff]
    %v2041 = vld [vmem:[#allocation11 + $0x1170] sm:$0xff]
    %v2042 = vld [vmem:[#allocation11 + $0x1178] sm:$0xff]
    %v2043 = vld [vmem:[#allocation11 + $0x1180] sm:$0xff]
    %v2044 = vld [vmem:[#allocation11 + $0x1188] sm:$0xff]
    %v2045 = vld [vmem:[#allocation11 + $0x1190] sm:$0xff]
    %v2046 = vld [vmem:[#allocation11 + $0x1198] sm:$0xff]
    %v2047 = vld [vmem:[#allocation11 + $0x11a0] sm:$0xff]
    %v2048 = vld [vmem:[#allocation11 + $0x11a8] sm:$0xff]
    %v2049 = vld [vmem:[#allocation11 + $0x11b0] sm:$0xff]
    %v2050 = vld [vmem:[#allocation11 + $0x11b8] sm:$0xff]
    %v2051 = vld [vmem:[#allocation11 + $0x11c0] sm:$0xff]
    %v2052 = vld [vmem:[#allocation11 + $0x11c8] sm:$0xff]
    %v2053 = vld [vmem:[#allocation11 + $0x11d0] sm:$0xff]
    %v2054 = vld [vmem:[#allocation11 + $0x11d8] sm:$0xff]
    %v2055 = vld [vmem:[#allocation11 + $0x11e0] sm:$0xff]
    %v2056 = vld [vmem:[#allocation11 + $0x11e8] sm:$0xff]
    %v2057 = vld [vmem:[#allocation11 + $0x11f0] sm:$0xff]
    %v2058 = vld [vmem:[#allocation11 + $0x11f8] sm:$0xff]
    %v2059 = vld [vmem:[#allocation11 + $0x1200] sm:$0xff]
    %v2060 = vld [vmem:[#allocation11 + $0x1208] sm:$0xff]
    %v2061 = vld [vmem:[#allocation11 + $0x1210] sm:$0xff]
    %v2062 = vld [vmem:[#allocation11 + $0x1218] sm:$0xff]
    %v2063 = vld [vmem:[#allocation11 + $0x1220] sm:$0xff]
    %v2064 = vld [vmem:[#allocation11 + $0x1228] sm:$0xff]
    %v2065 = vld [vmem:[#allocation11 + $0x1230] sm:$0xff]
    %v2066 = vld [vmem:[#allocation11 + $0x1238] sm:$0xff]
    %v2067 = vld [vmem:[#allocation11 + $0x1240] sm:$0xff]
    %v2068 = vld [vmem:[#allocation11 + $0x1248] sm:$0xff]
    %v2069 = vld [vmem:[#allocation11 + $0x1250] sm:$0xff]
    %v2070 = vld [vmem:[#allocation11 + $0x1258] sm:$0xff]
    %v2071 = vld [vmem:[#allocation11 + $0x1260] sm:$0xff]
    %v2072 = vld [vmem:[#allocation11 + $0x1268] sm:$0xff]
    %v2073 = vld [vmem:[#allocation11 + $0x1270] sm:$0xff]
    %v2074 = vld [vmem:[#allocation11 + $0x1278] sm:$0xff]
    %v2075 = vld [vmem:[#allocation11 + $0x1280] sm:$0xff]
    %v2076 = vld [vmem:[#allocation11 + $0x1288] sm:$0xff]
    %v2077 = vld [vmem:[#allocation11 + $0x1290] sm:$0xff]
    %v2078 = vld [vmem:[#allocation11 + $0x1298] sm:$0xff]
    %v2079 = vld [vmem:[#allocation11 + $0x12a0] sm:$0xff]
    %v2080 = vld [vmem:[#allocation11 + $0x12a8] sm:$0xff]
    %v2081 = vld [vmem:[#allocation11 + $0x12b0] sm:$0xff]
    %v2082 = vld [vmem:[#allocation11 + $0x12b8] sm:$0xff]
    %v2083 = vld [vmem:[#allocation11 + $0x12c0] sm:$0xff]
    %v2084 = vld [vmem:[#allocation11 + $0x12c8] sm:$0xff]
    %v2085 = vld [vmem:[#allocation11 + $0x12d0] sm:$0xff]
    %v2086 = vld [vmem:[#allocation11 + $0x12d8] sm:$0xff]
    %v2087 = vld [vmem:[#allocation11 + $0x12e0] sm:$0xff]
    %v2088 = vld [vmem:[#allocation11 + $0x12e8] sm:$0xff]
    %v2089 = vld [vmem:[#allocation11 + $0x12f0] sm:$0xff]
    %v2090 = vld [vmem:[#allocation11 + $0x12f8] sm:$0xff]
    %v2091 = vld [vmem:[#allocation11 + $0x1300] sm:$0xff]
    %v2092 = vld [vmem:[#allocation11 + $0x1308] sm:$0xff]
    %v2093 = vld [vmem:[#allocation11 + $0x1310] sm:$0xff]
    %v2094 = vld [vmem:[#allocation11 + $0x1318] sm:$0xff]
    %v2095 = vld [vmem:[#allocation11 + $0x1320] sm:$0xff]
    %v2096 = vld [vmem:[#allocation11 + $0x1328] sm:$0xff]
    %v2097 = vld [vmem:[#allocation11 + $0x1330] sm:$0xff]
    %v2098 = vld [vmem:[#allocation11 + $0x1338] sm:$0xff]
    %v2099 = vld [vmem:[#allocation11 + $0x1340] sm:$0xff]
    %v2100 = vld [vmem:[#allocation11 + $0x1348] sm:$0xff]
    %v2101 = vld [vmem:[#allocation11 + $0x1350] sm:$0xff]
    %v2102 = vld [vmem:[#allocation11 + $0x1358] sm:$0xff]
    %v2103 = vld [vmem:[#allocation11 + $0x1360] sm:$0xff]
    %v2104 = vld [vmem:[#allocation11 + $0x1368] sm:$0xff]
    %v2105 = vld [vmem:[#allocation11 + $0x1370] sm:$0xff]
    %v2106 = vld [vmem:[#allocation11 + $0x1378] sm:$0xff]
    %v2107 = vld [vmem:[#allocation11 + $0x1380] sm:$0xff]
    %v2108 = vld [vmem:[#allocation11 + $0x1388] sm:$0xff]
    %v2109 = vld [vmem:[#allocation11 + $0x1390] sm:$0xff]
    %v2110 = vld [vmem:[#allocation11 + $0x1398] sm:$0xff]
    %v2111 = vld [vmem:[#allocation11 + $0x13a0] sm:$0xff]
    %v2112 = vld [vmem:[#allocation11 + $0x13a8] sm:$0xff]
    %v2113 = vld [vmem:[#allocation11 + $0x13b0] sm:$0xff]
    %v2114 = vld [vmem:[#allocation11 + $0x13b8] sm:$0xff]
    %v2115 = vld [vmem:[#allocation11 + $0x13c0] sm:$0xff]
    %v2116 = vld [vmem:[#allocation11 + $0x13c8] sm:$0xff]
    %v2117 = vld [vmem:[#allocation11 + $0x13d0] sm:$0xff]
    %v2118 = vld [vmem:[#allocation11 + $0x13d8] sm:$0xff]
    %v2119 = vld [vmem:[#allocation11 + $0x13e0] sm:$0xff]
    %v2120 = vld [vmem:[#allocation11 + $0x13e8] sm:$0xff]
    %v2121 = vld [vmem:[#allocation11 + $0x13f0] sm:$0xff]
    %v2122 = vld [vmem:[#allocation11 + $0x13f8] sm:$0xff]
    %v2123 = vld [vmem:[#allocation11 + $0x1400] sm:$0xff]
    %v2124 = vld [vmem:[#allocation11 + $0x1408] sm:$0xff]
    %v2125 = vld [vmem:[#allocation11 + $0x1410] sm:$0xff]
    %v2126 = vld [vmem:[#allocation11 + $0x1418] sm:$0xff]
    %v2127 = vld [vmem:[#allocation11 + $0x1420] sm:$0xff]
    %v2128 = vld [vmem:[#allocation11 + $0x1428] sm:$0xff]
    %v2129 = vld [vmem:[#allocation11 + $0x1430] sm:$0xff]
    %v2130 = vld [vmem:[#allocation11 + $0x1438] sm:$0xff]
    %v2131 = vld [vmem:[#allocation11 + $0x1440] sm:$0xff]
    %v2132 = vld [vmem:[#allocation11 + $0x1448] sm:$0xff]
    %v2133 = vld [vmem:[#allocation11 + $0x1450] sm:$0xff]
    %v2134 = vld [vmem:[#allocation11 + $0x1458] sm:$0xff]
    %v2135 = vld [vmem:[#allocation11 + $0x1460] sm:$0xff]
    %v2136 = vld [vmem:[#allocation11 + $0x1468] sm:$0xff]
    %v2137 = vld [vmem:[#allocation11 + $0x1470] sm:$0xff]
    %v2138 = vld [vmem:[#allocation11 + $0x1478] sm:$0xff]
    %v2139 = vld [vmem:[#allocation11 + $0x1480] sm:$0xff]
    %v2140 = vld [vmem:[#allocation11 + $0x1488] sm:$0xff]
    %v2141 = vld [vmem:[#allocation11 + $0x1490] sm:$0xff]
    %v2142 = vld [vmem:[#allocation11 + $0x1498] sm:$0xff]
    %v2143 = vld [vmem:[#allocation11 + $0x14a0] sm:$0xff]
    %v2144 = vld [vmem:[#allocation11 + $0x14a8] sm:$0xff]
    %v2145 = vld [vmem:[#allocation11 + $0x14b0] sm:$0xff]
    %v2146 = vld [vmem:[#allocation11 + $0x14b8] sm:$0xff]
    %v2147 = vld [vmem:[#allocation11 + $0x14c0] sm:$0xff]
    %v2148 = vld [vmem:[#allocation11 + $0x14c8] sm:$0xff]
    %v2149 = vld [vmem:[#allocation11 + $0x14d0] sm:$0xff]
    %v2150 = vld [vmem:[#allocation11 + $0x14d8] sm:$0xff]
    %v2151 = vld [vmem:[#allocation11 + $0x14e0] sm:$0xff]
    %v2152 = vld [vmem:[#allocation11 + $0x14e8] sm:$0xff]
    %v2153 = vld [vmem:[#allocation11 + $0x14f0] sm:$0xff]
    %v2154 = vld [vmem:[#allocation11 + $0x14f8] sm:$0xff]
    %v2155 = vld [vmem:[#allocation11 + $0x1500] sm:$0xff]
    %v2156 = vld [vmem:[#allocation11 + $0x1508] sm:$0xff]
    %v2157 = vld [vmem:[#allocation11 + $0x1510] sm:$0xff]
    %v2158 = vld [vmem:[#allocation11 + $0x1518] sm:$0xff]
    %v2159 = vld [vmem:[#allocation11 + $0x1520] sm:$0xff]
    %v2160 = vld [vmem:[#allocation11 + $0x1528] sm:$0xff]
    %v2161 = vld [vmem:[#allocation11 + $0x1530] sm:$0xff]
    %v2162 = vld [vmem:[#allocation11 + $0x1538] sm:$0xff]
    %v2163 = vld [vmem:[#allocation11 + $0x1540] sm:$0xff]
    %v2164 = vld [vmem:[#allocation11 + $0x1548] sm:$0xff]
    %v2165 = vld [vmem:[#allocation11 + $0x1550] sm:$0xff]
    %v2166 = vld [vmem:[#allocation11 + $0x1558] sm:$0xff]
    %v2167 = vld [vmem:[#allocation11 + $0x1560] sm:$0xff]
    %v2168 = vld [vmem:[#allocation11 + $0x1568] sm:$0xff]
    %v2169 = vld [vmem:[#allocation11 + $0x1570] sm:$0xff]
    %v2170 = vld [vmem:[#allocation11 + $0x1578] sm:$0xff]
    %v2171 = vld [vmem:[#allocation11 + $0x1580] sm:$0xff]
    %v2172 = vld [vmem:[#allocation11 + $0x1588] sm:$0xff]
    %v2173 = vld [vmem:[#allocation11 + $0x1590] sm:$0xff]
    %v2174 = vld [vmem:[#allocation11 + $0x1598] sm:$0xff]
    %v2175 = vld [vmem:[#allocation11 + $0x15a0] sm:$0xff]
    %v2176 = vld [vmem:[#allocation11 + $0x15a8] sm:$0xff]
    %v2177 = vld [vmem:[#allocation11 + $0x15b0] sm:$0xff]
    %v2178 = vld [vmem:[#allocation11 + $0x15b8] sm:$0xff]
    %v2179 = vld [vmem:[#allocation11 + $0x15c0] sm:$0xff]
    %v2180 = vld [vmem:[#allocation11 + $0x15c8] sm:$0xff]
    %v2181 = vld [vmem:[#allocation11 + $0x15d0] sm:$0xff]
    %v2182 = vld [vmem:[#allocation11 + $0x15d8] sm:$0xff]
    %v2183 = vld [vmem:[#allocation11 + $0x15e0] sm:$0xff]
    %v2184 = vld [vmem:[#allocation11 + $0x15e8] sm:$0xff]
    %v2185 = vld [vmem:[#allocation11 + $0x15f0] sm:$0xff]
    %v2186 = vld [vmem:[#allocation11 + $0x15f8] sm:$0xff]
    %v2187 = vld [vmem:[#allocation11 + $0x1600] sm:$0xff]
    %v2188 = vld [vmem:[#allocation11 + $0x1608] sm:$0xff]
    %v2189 = vld [vmem:[#allocation11 + $0x1610] sm:$0xff]
    %v2190 = vld [vmem:[#allocation11 + $0x1618] sm:$0xff]
    %v2191 = vld [vmem:[#allocation11 + $0x1620] sm:$0xff]
    %v2192 = vld [vmem:[#allocation11 + $0x1628] sm:$0xff]
    %v2193 = vld [vmem:[#allocation11 + $0x1630] sm:$0xff]
    %v2194 = vld [vmem:[#allocation11 + $0x1638] sm:$0xff]
    %v2195 = vld [vmem:[#allocation11 + $0x1640] sm:$0xff]
    %v2196 = vld [vmem:[#allocation11 + $0x1648] sm:$0xff]
    %v2197 = vld [vmem:[#allocation11 + $0x1650] sm:$0xff]
    %v2198 = vld [vmem:[#allocation11 + $0x1658] sm:$0xff]
    %v2199 = vld [vmem:[#allocation11 + $0x1660] sm:$0xff]
    %v2200 = vld [vmem:[#allocation11 + $0x1668] sm:$0xff]
    %v2201 = vld [vmem:[#allocation11 + $0x1670] sm:$0xff]
    %v2202 = vld [vmem:[#allocation11 + $0x1678] sm:$0xff]
    %v2203 = vld [vmem:[#allocation11 + $0x1680] sm:$0xff]
    %v2204 = vld [vmem:[#allocation11 + $0x1688] sm:$0xff]
    %v2205 = vld [vmem:[#allocation11 + $0x1690] sm:$0xff]
    %v2206 = vld [vmem:[#allocation11 + $0x1698] sm:$0xff]
    %v2207 = vld [vmem:[#allocation11 + $0x16a0] sm:$0xff]
    %v2208 = vld [vmem:[#allocation11 + $0x16a8] sm:$0xff]
    %v2209 = vld [vmem:[#allocation11 + $0x16b0] sm:$0xff]
    %v2210 = vld [vmem:[#allocation11 + $0x16b8] sm:$0xff]
    %v2211 = vld [vmem:[#allocation11 + $0x16c0] sm:$0xff]
    %v2212 = vld [vmem:[#allocation11 + $0x16c8] sm:$0xff]
    %v2213 = vld [vmem:[#allocation11 + $0x16d0] sm:$0xff]
    %v2214 = vld [vmem:[#allocation11 + $0x16d8] sm:$0xff]
    %v2215 = vld [vmem:[#allocation11 + $0x16e0] sm:$0xff]
    %v2216 = vld [vmem:[#allocation11 + $0x16e8] sm:$0xff]
    %v2217 = vld [vmem:[#allocation11 + $0x16f0] sm:$0xff]
    %v2218 = vld [vmem:[#allocation11 + $0x16f8] sm:$0xff]
    %v2219 = vld [vmem:[#allocation11 + $0x1700] sm:$0xff]
    %v2220 = vld [vmem:[#allocation11 + $0x1708] sm:$0xff]
    %v2221 = vld [vmem:[#allocation11 + $0x1710] sm:$0xff]
    %v2222 = vld [vmem:[#allocation11 + $0x1718] sm:$0xff]
    %v2223 = vld [vmem:[#allocation11 + $0x1720] sm:$0xff]
    %v2224 = vld [vmem:[#allocation11 + $0x1728] sm:$0xff]
    %v2225 = vld [vmem:[#allocation11 + $0x1730] sm:$0xff]
    %v2226 = vld [vmem:[#allocation11 + $0x1738] sm:$0xff]
    %v2227 = vld [vmem:[#allocation11 + $0x1740] sm:$0xff]
    %v2228 = vld [vmem:[#allocation11 + $0x1748] sm:$0xff]
    %v2229 = vld [vmem:[#allocation11 + $0x1750] sm:$0xff]
    %v2230 = vld [vmem:[#allocation11 + $0x1758] sm:$0xff]
    %v2231 = vld [vmem:[#allocation11 + $0x1760] sm:$0xff]
    %v2232 = vld [vmem:[#allocation11 + $0x1768] sm:$0xff]
    %v2233 = vld [vmem:[#allocation11 + $0x1770] sm:$0xff]
    %v2234 = vld [vmem:[#allocation11 + $0x1778] sm:$0xff]
    %v2235 = vld [vmem:[#allocation11 + $0x1780] sm:$0xff]
    %v2236 = vld [vmem:[#allocation11 + $0x1788] sm:$0xff]
    %v2237 = vld [vmem:[#allocation11 + $0x1790] sm:$0xff]
    %v2238 = vld [vmem:[#allocation11 + $0x1798] sm:$0xff]
    %v2239 = vld [vmem:[#allocation11 + $0x17a0] sm:$0xff]
    %v2240 = vld [vmem:[#allocation11 + $0x17a8] sm:$0xff]
    %v2241 = vld [vmem:[#allocation11 + $0x17b0] sm:$0xff]
    %v2242 = vld [vmem:[#allocation11 + $0x17b8] sm:$0xff]
    %v2243 = vld [vmem:[#allocation11 + $0x17c0] sm:$0xff]
    %v2244 = vld [vmem:[#allocation11 + $0x17c8] sm:$0xff]
    %v2245 = vld [vmem:[#allocation11 + $0x17d0] sm:$0xff]
    %v2246 = vld [vmem:[#allocation11 + $0x17d8] sm:$0xff]
    %v2247 = vld [vmem:[#allocation11 + $0x17e0] sm:$0xff]
    %v2248 = vld [vmem:[#allocation11 + $0x17e8] sm:$0xff]
    %v2249 = vld [vmem:[#allocation11 + $0x17f0] sm:$0xff]
    %v2250 = vld [vmem:[#allocation11 + $0x17f8] sm:$0xff]
    %v2251 = vld [vmem:[#allocation11 + $0x1800] sm:$0xff]
    %v2252 = vld [vmem:[#allocation11 + $0x1808] sm:$0xff]
    %v2253 = vld [vmem:[#allocation11 + $0x1810] sm:$0xff]
    %v2254 = vld [vmem:[#allocation11 + $0x1818] sm:$0xff]
    %v2255 = vld [vmem:[#allocation11 + $0x1820] sm:$0xff]
    %v2256 = vld [vmem:[#allocation11 + $0x1828] sm:$0xff]
    %v2257 = vld [vmem:[#allocation11 + $0x1830] sm:$0xff]
    %v2258 = vld [vmem:[#allocation11 + $0x1838] sm:$0xff]
    %v2259 = vld [vmem:[#allocation11 + $0x1840] sm:$0xff]
    %v2260 = vld [vmem:[#allocation11 + $0x1848] sm:$0xff]
    %v2261 = vld [vmem:[#allocation11 + $0x1850] sm:$0xff]
    %v2262 = vld [vmem:[#allocation11 + $0x1858] sm:$0xff]
    %v2263 = vld [vmem:[#allocation11 + $0x1860] sm:$0xff]
    %v2264 = vld [vmem:[#allocation11 + $0x1868] sm:$0xff]
    %v2265 = vld [vmem:[#allocation11 + $0x1870] sm:$0xff]
    %v2266 = vld [vmem:[#allocation11 + $0x1878] sm:$0xff]
    %v2267 = vld [vmem:[#allocation11 + $0x1880] sm:$0xff]
    %v2268 = vld [vmem:[#allocation11 + $0x1888] sm:$0xff]
    %v2269 = vld [vmem:[#allocation11 + $0x1890] sm:$0xff]
    %v2270 = vld [vmem:[#allocation11 + $0x1898] sm:$0xff]
    %v2271 = vld [vmem:[#allocation11 + $0x18a0] sm:$0xff]
    %v2272 = vld [vmem:[#allocation11 + $0x18a8] sm:$0xff]
    %v2273 = vld [vmem:[#allocation11 + $0x18b0] sm:$0xff]
    %v2274 = vld [vmem:[#allocation11 + $0x18b8] sm:$0xff]
    %v2275 = vld [vmem:[#allocation11 + $0x18c0] sm:$0xff]
    %v2276 = vld [vmem:[#allocation11 + $0x18c8] sm:$0xff]
    %v2277 = vld [vmem:[#allocation11 + $0x18d0] sm:$0xff]
    %v2278 = vld [vmem:[#allocation11 + $0x18d8] sm:$0xff]
    %v2279 = vld [vmem:[#allocation11 + $0x18e0] sm:$0xff]
    %v2280 = vld [vmem:[#allocation11 + $0x18e8] sm:$0xff]
    %v2281 = vld [vmem:[#allocation11 + $0x18f0] sm:$0xff]
    %v2282 = vld [vmem:[#allocation11 + $0x18f8] sm:$0xff]
    %v2283 = vld [vmem:[#allocation11 + $0x1900] sm:$0xff]
    %v2284 = vld [vmem:[#allocation11 + $0x1908] sm:$0xff]
    %v2285 = vld [vmem:[#allocation11 + $0x1910] sm:$0xff]
    %v2286 = vld [vmem:[#allocation11 + $0x1918] sm:$0xff]
    %v2287 = vld [vmem:[#allocation11 + $0x1920] sm:$0xff]
    %v2288 = vld [vmem:[#allocation11 + $0x1928] sm:$0xff]
    %v2289 = vld [vmem:[#allocation11 + $0x1930] sm:$0xff]
    %v2290 = vld [vmem:[#allocation11 + $0x1938] sm:$0xff]
    %v2291 = vld [vmem:[#allocation11 + $0x1940] sm:$0xff]
    %v2292 = vld [vmem:[#allocation11 + $0x1948] sm:$0xff]
    %v2293 = vld [vmem:[#allocation11 + $0x1950] sm:$0xff]
    %v2294 = vld [vmem:[#allocation11 + $0x1958] sm:$0xff]
    %v2295 = vld [vmem:[#allocation11 + $0x1960] sm:$0xff]
    %v2296 = vld [vmem:[#allocation11 + $0x1968] sm:$0xff]
    %v2297 = vld [vmem:[#allocation11 + $0x1970] sm:$0xff]
    %v2298 = vld [vmem:[#allocation11 + $0x1978] sm:$0xff]
    %v2299 = vld [vmem:[#allocation11 + $0x1980] sm:$0xff]
    %v2300 = vld [vmem:[#allocation11 + $0x1988] sm:$0xff]
    %v2301 = vld [vmem:[#allocation11 + $0x1990] sm:$0xff]
    %v2302 = vld [vmem:[#allocation11 + $0x1998] sm:$0xff]
    %v2303 = vld [vmem:[#allocation11 + $0x19a0] sm:$0xff]
    %v2304 = vld [vmem:[#allocation11 + $0x19a8] sm:$0xff]
    %v2305 = vld [vmem:[#allocation11 + $0x19b0] sm:$0xff]
    %v2306 = vld [vmem:[#allocation11 + $0x19b8] sm:$0xff]
    %v2307 = vld [vmem:[#allocation11 + $0x19c0] sm:$0xff]
    %v2308 = vld [vmem:[#allocation11 + $0x19c8] sm:$0xff]
    %v2309 = vld [vmem:[#allocation11 + $0x19d0] sm:$0xff]
    %v2310 = vld [vmem:[#allocation11 + $0x19d8] sm:$0xff]
    %v2311 = vld [vmem:[#allocation11 + $0x19e0] sm:$0xff]
    %v2312 = vld [vmem:[#allocation11 + $0x19e8] sm:$0xff]
    %v2313 = vld [vmem:[#allocation11 + $0x19f0] sm:$0xff]
    %v2314 = vld [vmem:[#allocation11 + $0x19f8] sm:$0xff]
    %v2315 = vld [vmem:[#allocation11 + $0x1a00] sm:$0xff]
    %v2316 = vld [vmem:[#allocation11 + $0x1a08] sm:$0xff]
    %v2317 = vld [vmem:[#allocation11 + $0x1a10] sm:$0xff]
    %v2318 = vld [vmem:[#allocation11 + $0x1a18] sm:$0xff]
    %v2319 = vld [vmem:[#allocation11 + $0x1a20] sm:$0xff]
    %v2320 = vld [vmem:[#allocation11 + $0x1a28] sm:$0xff]
    %v2321 = vld [vmem:[#allocation11 + $0x1a30] sm:$0xff]
    %v2322 = vld [vmem:[#allocation11 + $0x1a38] sm:$0xff]
    %v2323 = vld [vmem:[#allocation11 + $0x1a40] sm:$0xff]
    %v2324 = vld [vmem:[#allocation11 + $0x1a48] sm:$0xff]
    %v2325 = vld [vmem:[#allocation11 + $0x1a50] sm:$0xff]
    %v2326 = vld [vmem:[#allocation11 + $0x1a58] sm:$0xff]
    %v2327 = vld [vmem:[#allocation11 + $0x1a60] sm:$0xff]
    %v2328 = vld [vmem:[#allocation11 + $0x1a68] sm:$0xff]
    %v2329 = vld [vmem:[#allocation11 + $0x1a70] sm:$0xff]
    %v2330 = vld [vmem:[#allocation11 + $0x1a78] sm:$0xff]
    %v2331 = vld [vmem:[#allocation11 + $0x1a80] sm:$0xff]
    %v2332 = vld [vmem:[#allocation11 + $0x1a88] sm:$0xff]
    %v2333 = vld [vmem:[#allocation11 + $0x1a90] sm:$0xff]
    %v2334 = vld [vmem:[#allocation11 + $0x1a98] sm:$0xff]
    %v2335 = vld [vmem:[#allocation11 + $0x1aa0] sm:$0xff]
    %v2336 = vld [vmem:[#allocation11 + $0x1aa8] sm:$0xff]
    %v2337 = vld [vmem:[#allocation11 + $0x1ab0] sm:$0xff]
    %v2338 = vld [vmem:[#allocation11 + $0x1ab8] sm:$0xff]
    %v2339 = vld [vmem:[#allocation11 + $0x1ac0] sm:$0xff]
    %v2340 = vld [vmem:[#allocation11 + $0x1ac8] sm:$0xff]
    %v2341 = vld [vmem:[#allocation11 + $0x1ad0] sm:$0xff]
    %v2342 = vld [vmem:[#allocation11 + $0x1ad8] sm:$0xff]
    %v2343 = vld [vmem:[#allocation11 + $0x1ae0] sm:$0xff]
    %v2344 = vld [vmem:[#allocation11 + $0x1ae8] sm:$0xff]
    %v2345 = vld [vmem:[#allocation11 + $0x1af0] sm:$0xff]
    %v2346 = vld [vmem:[#allocation11 + $0x1af8] sm:$0xff]
    %v2347 = vld [vmem:[#allocation11 + $0x1b00] sm:$0xff]
    %v2348 = vld [vmem:[#allocation11 + $0x1b08] sm:$0xff]
    %v2349 = vld [vmem:[#allocation11 + $0x1b10] sm:$0xff]
    %v2350 = vld [vmem:[#allocation11 + $0x1b18] sm:$0xff]
    %v2351 = vld [vmem:[#allocation11 + $0x1b20] sm:$0xff]
    %v2352 = vld [vmem:[#allocation11 + $0x1b28] sm:$0xff]
    %v2353 = vld [vmem:[#allocation11 + $0x1b30] sm:$0xff]
    %v2354 = vld [vmem:[#allocation11 + $0x1b38] sm:$0xff]
    %v2355 = vld [vmem:[#allocation11 + $0x1b40] sm:$0xff]
    %v2356 = vld [vmem:[#allocation11 + $0x1b48] sm:$0xff]
    %v2357 = vld [vmem:[#allocation11 + $0x1b50] sm:$0xff]
    %v2358 = vld [vmem:[#allocation11 + $0x1b58] sm:$0xff]
    %v2359 = vld [vmem:[#allocation11 + $0x1b60] sm:$0xff]
    %v2360 = vld [vmem:[#allocation11 + $0x1b68] sm:$0xff]
    %v2361 = vld [vmem:[#allocation11 + $0x1b70] sm:$0xff]
    %v2362 = vld [vmem:[#allocation11 + $0x1b78] sm:$0xff]
    %v2363 = vld [vmem:[#allocation11 + $0x1b80] sm:$0xff]
    %v2364 = vld [vmem:[#allocation11 + $0x1b88] sm:$0xff]
    %v2365 = vld [vmem:[#allocation11 + $0x1b90] sm:$0xff]
    %v2366 = vld [vmem:[#allocation11 + $0x1b98] sm:$0xff]
    %v2367 = vld [vmem:[#allocation11 + $0x1ba0] sm:$0xff]
    %v2368 = vld [vmem:[#allocation11 + $0x1ba8] sm:$0xff]
    %v2369 = vld [vmem:[#allocation11 + $0x1bb0] sm:$0xff]
    %v2370 = vld [vmem:[#allocation11 + $0x1bb8] sm:$0xff]
    %v2371 = vld [vmem:[#allocation11 + $0x1bc0] sm:$0xff]
    %v2372 = vld [vmem:[#allocation11 + $0x1bc8] sm:$0xff]
    %v2373 = vld [vmem:[#allocation11 + $0x1bd0] sm:$0xff]
    %v2374 = vld [vmem:[#allocation11 + $0x1bd8] sm:$0xff]
    %v2375 = vld [vmem:[#allocation11 + $0x1be0] sm:$0xff]
    %v2376 = vld [vmem:[#allocation11 + $0x1be8] sm:$0xff]
    %v2377 = vld [vmem:[#allocation11 + $0x1bf0] sm:$0xff]
    %v2378 = vld [vmem:[#allocation11 + $0x1bf8] sm:$0xff]
    %v2379 = vld [vmem:[#allocation11 + $0x1c00] sm:$0xff]
    %v2380 = vld [vmem:[#allocation11 + $0x1c08] sm:$0xff]
    %v2381 = vld [vmem:[#allocation11 + $0x1c10] sm:$0xff]
    %v2382 = vld [vmem:[#allocation11 + $0x1c18] sm:$0xff]
    %v2383 = vld [vmem:[#allocation11 + $0x1c20] sm:$0xff]
    %v2384 = vld [vmem:[#allocation11 + $0x1c28] sm:$0xff]
    %v2385 = vld [vmem:[#allocation11 + $0x1c30] sm:$0xff]
    %v2386 = vld [vmem:[#allocation11 + $0x1c38] sm:$0xff]
    %v2387 = vld [vmem:[#allocation11 + $0x1c40] sm:$0xff]
    %v2388 = vld [vmem:[#allocation11 + $0x1c48] sm:$0xff]
    %v2389 = vld [vmem:[#allocation11 + $0x1c50] sm:$0xff]
    %v2390 = vld [vmem:[#allocation11 + $0x1c58] sm:$0xff]
    %v2391 = vld [vmem:[#allocation11 + $0x1c60] sm:$0xff]
    %v2392 = vld [vmem:[#allocation11 + $0x1c68] sm:$0xff]
    %v2393 = vld [vmem:[#allocation11 + $0x1c70] sm:$0xff]
    %v2394 = vld [vmem:[#allocation11 + $0x1c78] sm:$0xff]
    %v2395 = vld [vmem:[#allocation11 + $0x1c80] sm:$0xff]
    %v2396 = vld [vmem:[#allocation11 + $0x1c88] sm:$0xff]
    %v2397 = vld [vmem:[#allocation11 + $0x1c90] sm:$0xff]
    %v2398 = vld [vmem:[#allocation11 + $0x1c98] sm:$0xff]
    %v2399 = vld [vmem:[#allocation11 + $0x1ca0] sm:$0xff]
    %v2400 = vld [vmem:[#allocation11 + $0x1ca8] sm:$0xff]
    %v2401 = vld [vmem:[#allocation11 + $0x1cb0] sm:$0xff]
    %v2402 = vld [vmem:[#allocation11 + $0x1cb8] sm:$0xff]
    %v2403 = vld [vmem:[#allocation11 + $0x1cc0] sm:$0xff]
    %v2404 = vld [vmem:[#allocation11 + $0x1cc8] sm:$0xff]
    %v2405 = vld [vmem:[#allocation11 + $0x1cd0] sm:$0xff]
    %v2406 = vld [vmem:[#allocation11 + $0x1cd8] sm:$0xff]
    %v2407 = vld [vmem:[#allocation11 + $0x1ce0] sm:$0xff]
    %v2408 = vld [vmem:[#allocation11 + $0x1ce8] sm:$0xff]
    %v2409 = vld [vmem:[#allocation11 + $0x1cf0] sm:$0xff]
    %v2410 = vld [vmem:[#allocation11 + $0x1cf8] sm:$0xff]
    %v2411 = vld [vmem:[#allocation11 + $0x1d00] sm:$0xff]
    %v2412 = vld [vmem:[#allocation11 + $0x1d08] sm:$0xff]
    %v2413 = vld [vmem:[#allocation11 + $0x1d10] sm:$0xff]
    %v2414 = vld [vmem:[#allocation11 + $0x1d18] sm:$0xff]
    %v2415 = vld [vmem:[#allocation11 + $0x1d20] sm:$0xff]
    %v2416 = vld [vmem:[#allocation11 + $0x1d28] sm:$0xff]
    %v2417 = vld [vmem:[#allocation11 + $0x1d30] sm:$0xff]
    %v2418 = vld [vmem:[#allocation11 + $0x1d38] sm:$0xff]
    %v2419 = vld [vmem:[#allocation11 + $0x1d40] sm:$0xff]
    %v2420 = vld [vmem:[#allocation11 + $0x1d48] sm:$0xff]
    %v2421 = vld [vmem:[#allocation11 + $0x1d50] sm:$0xff]
    %v2422 = vld [vmem:[#allocation11 + $0x1d58] sm:$0xff]
    %v2423 = vld [vmem:[#allocation11 + $0x1d60] sm:$0xff]
    %v2424 = vld [vmem:[#allocation11 + $0x1d68] sm:$0xff]
    %v2425 = vld [vmem:[#allocation11 + $0x1d70] sm:$0xff]
    %v2426 = vld [vmem:[#allocation11 + $0x1d78] sm:$0xff]
    %v2427 = vld [vmem:[#allocation11 + $0x1d80] sm:$0xff]
    %v2428 = vld [vmem:[#allocation11 + $0x1d88] sm:$0xff]
    %v2429 = vld [vmem:[#allocation11 + $0x1d90] sm:$0xff]
    %v2430 = vld [vmem:[#allocation11 + $0x1d98] sm:$0xff]
    %v2431 = vld [vmem:[#allocation11 + $0x1da0] sm:$0xff]
    %v2432 = vld [vmem:[#allocation11 + $0x1da8] sm:$0xff]
    %v2433 = vld [vmem:[#allocation11 + $0x1db0] sm:$0xff]
    %v2434 = vld [vmem:[#allocation11 + $0x1db8] sm:$0xff]
    %v2435 = vld [vmem:[#allocation11 + $0x1dc0] sm:$0xff]
    %v2436 = vld [vmem:[#allocation11 + $0x1dc8] sm:$0xff]
    %v2437 = vld [vmem:[#allocation11 + $0x1dd0] sm:$0xff]
    %v2438 = vld [vmem:[#allocation11 + $0x1dd8] sm:$0xff]
    %v2439 = vld [vmem:[#allocation11 + $0x1de0] sm:$0xff]
    %v2440 = vld [vmem:[#allocation11 + $0x1de8] sm:$0xff]
    %v2441 = vld [vmem:[#allocation11 + $0x1df0] sm:$0xff]
    %v2442 = vld [vmem:[#allocation11 + $0x1df8] sm:$0xff]
    %v2443 = vld [vmem:[#allocation11 + $0x1e00] sm:$0xff]
    %v2444 = vld [vmem:[#allocation11 + $0x1e08] sm:$0xff]
    %v2445 = vld [vmem:[#allocation11 + $0x1e10] sm:$0xff]
    %v2446 = vld [vmem:[#allocation11 + $0x1e18] sm:$0xff]
    %v2447 = vld [vmem:[#allocation11 + $0x1e20] sm:$0xff]
    %v2448 = vld [vmem:[#allocation11 + $0x1e28] sm:$0xff]
    %v2449 = vld [vmem:[#allocation11 + $0x1e30] sm:$0xff]
    %v2450 = vld [vmem:[#allocation11 + $0x1e38] sm:$0xff]
    %v2451 = vld [vmem:[#allocation11 + $0x1e40] sm:$0xff]
    %v2452 = vld [vmem:[#allocation11 + $0x1e48] sm:$0xff]
    %v2453 = vld [vmem:[#allocation11 + $0x1e50] sm:$0xff]
    %v2454 = vld [vmem:[#allocation11 + $0x1e58] sm:$0xff]
    %v2455 = vld [vmem:[#allocation11 + $0x1e60] sm:$0xff]
    %v2456 = vld [vmem:[#allocation11 + $0x1e68] sm:$0xff]
    %v2457 = vld [vmem:[#allocation11 + $0x1e70] sm:$0xff]
    %v2458 = vld [vmem:[#allocation11 + $0x1e78] sm:$0xff]
    %v2459 = vld [vmem:[#allocation11 + $0x1e80] sm:$0xff]
    %v2460 = vld [vmem:[#allocation11 + $0x1e88] sm:$0xff]
    %v2461 = vld [vmem:[#allocation11 + $0x1e90] sm:$0xff]
    %v2462 = vld [vmem:[#allocation11 + $0x1e98] sm:$0xff]
    %v2463 = vld [vmem:[#allocation11 + $0x1ea0] sm:$0xff]
    %v2464 = vld [vmem:[#allocation11 + $0x1ea8] sm:$0xff]
    %v2465 = vld [vmem:[#allocation11 + $0x1eb0] sm:$0xff]
    %v2466 = vld [vmem:[#allocation11 + $0x1eb8] sm:$0xff]
    %v2467 = vld [vmem:[#allocation11 + $0x1ec0] sm:$0xff]
    %v2468 = vld [vmem:[#allocation11 + $0x1ec8] sm:$0xff]
    %v2469 = vld [vmem:[#allocation11 + $0x1ed0] sm:$0xff]
    %v2470 = vld [vmem:[#allocation11 + $0x1ed8] sm:$0xff]
    %v2471 = vld [vmem:[#allocation11 + $0x1ee0] sm:$0xff]
    %v2472 = vld [vmem:[#allocation11 + $0x1ee8] sm:$0xff]
    %v2473 = vld [vmem:[#allocation11 + $0x1ef0] sm:$0xff]
    %v2474 = vld [vmem:[#allocation11 + $0x1ef8] sm:$0xff]
    %v2475 = vld [vmem:[#allocation11 + $0x1f00] sm:$0xff]
    %v2476 = vld [vmem:[#allocation11 + $0x1f08] sm:$0xff]
    %v2477 = vld [vmem:[#allocation11 + $0x1f10] sm:$0xff]
    %v2478 = vld [vmem:[#allocation11 + $0x1f18] sm:$0xff]
    %v2479 = vld [vmem:[#allocation11 + $0x1f20] sm:$0xff]
    %v2480 = vld [vmem:[#allocation11 + $0x1f28] sm:$0xff]
    %v2481 = vld [vmem:[#allocation11 + $0x1f30] sm:$0xff]
    %v2482 = vld [vmem:[#allocation11 + $0x1f38] sm:$0xff]
    %v2483 = vld [vmem:[#allocation11 + $0x1f40] sm:$0xff]
    %v2484 = vld [vmem:[#allocation11 + $0x1f48] sm:$0xff]
    %v2485 = vld [vmem:[#allocation11 + $0x1f50] sm:$0xff]
    %v2486 = vld [vmem:[#allocation11 + $0x1f58] sm:$0xff]
    %v2487 = vld [vmem:[#allocation11 + $0x1f60] sm:$0xff]
    %v2488 = vld [vmem:[#allocation11 + $0x1f68] sm:$0xff]
    %v2489 = vld [vmem:[#allocation11 + $0x1f70] sm:$0xff]
    %v2490 = vld [vmem:[#allocation11 + $0x1f78] sm:$0xff]
    %v2491 = vld [vmem:[#allocation11 + $0x1f80] sm:$0xff]
    %v2492 = vld [vmem:[#allocation11 + $0x1f88] sm:$0xff]
    %v2493 = vld [vmem:[#allocation11 + $0x1f90] sm:$0xff]
    %v2494 = vld [vmem:[#allocation11 + $0x1f98] sm:$0xff]
    %v2495 = vld [vmem:[#allocation11 + $0x1fa0] sm:$0xff]
    %v2496 = vld [vmem:[#allocation11 + $0x1fa8] sm:$0xff]
    %v2497 = vld [vmem:[#allocation11 + $0x1fb0] sm:$0xff]
    %v2498 = vld [vmem:[#allocation11 + $0x1fb8] sm:$0xff]
    %v2499 = vld [vmem:[#allocation11 + $0x1fc0] sm:$0xff]
    %v2500 = vld [vmem:[#allocation11 + $0x1fc8] sm:$0xff]
    %v2501 = vld [vmem:[#allocation11 + $0x1fd0] sm:$0xff]
    %v2502 = vld [vmem:[#allocation11 + $0x1fd8] sm:$0xff]
    %v2503 = vld [vmem:[#allocation11 + $0x1fe0] sm:$0xff]
    %v2504 = vld [vmem:[#allocation11 + $0x1fe8] sm:$0xff]
    %v2505 = vld [vmem:[#allocation11 + $0x1ff0] sm:$0xff]
    %v2506 = vld [vmem:[#allocation11 + $0x1ff8] sm:$0xff]
    %v2507 = vld [vmem:[#allocation13] sm:$0xff]
    %v2509 = vperm.slane %v2507, 0
    %v2510 = vperm.slane %v2507, 1
    %v2511 = vperm.slane %v2507, 2
    %v2512 = vperm.slane %v2507, 3
    %v2513 = vperm.slane %v2507, 4
    %v2514 = vperm.slane %v2507, 5
    %v2515 = vperm.slane %v2507, 6
    %v2516 = vperm.slane %v2507, 7
    %2525 = vmatpush.msra.mxu0 %v1603
    %2526 = vmatpush.msra.mxu0 %v1595
    %2527 = vmatpush.msra.mxu0 %v1587
    %2528 = vmatpush.msra.mxu0 %v1579
    %2529 = vmatpush.msra.mxu0 %v1571
    %2530 = vmatpush.msra.mxu0 %v1563
    %2531 = vmatpush.msra.mxu0 %v1555
    %2532 = vmatpush.msra.mxu0 %v1547
    %2533 = vmatpush.msra.mxu0 %v1539
    %2534 = vmatpush.msra.mxu0 %v1531
    %2535 = vmatpush.msra.mxu0 %v1523
    %2536 = vmatpush.msra.mxu0 %v1515
    %2537 = vmatpush.msra.mxu0 %v1507
    %2538 = vmatpush.msra.mxu0 %v1499
    %2539 = vmatpush.msra.mxu0 %v1491
    %2540 = vmatpush.msra.mxu0 %v1483
    %2541 = vmatmul.f32.gmra.mxu0 %v1475
    %v2542 = vpop.f32.mrf.mxu0
    %v2543 = vadd.f32 %v2509, %v2542
    %2544 = vdwg.mxu0
    %2545 = vmatpush.msra.mxu0 %v1731
    %2546 = vmatpush.msra.mxu0 %v1723
    %2547 = vmatpush.msra.mxu0 %v1715
    %2548 = vmatpush.msra.mxu0 %v1707
    %2549 = vmatpush.msra.mxu0 %v1699
    %2550 = vmatpush.msra.mxu0 %v1691
    %2551 = vmatpush.msra.mxu0 %v1683
    %2552 = vmatpush.msra.mxu0 %v1675
    %2553 = vmatpush.msra.mxu0 %v1667
    %2554 = vmatpush.msra.mxu0 %v1659
    %2555 = vmatpush.msra.mxu0 %v1651
    %2556 = vmatpush.msra.mxu0 %v1643
    %2557 = vmatpush.msra.mxu0 %v1635
    %2558 = vmatpush.msra.mxu0 %v1627
    %2559 = vmatpush.msra.mxu0 %v1619
    %2560 = vmatpush.msra.mxu0 %v1611
    %2561 = vmatmul.f32.gmra.mxu0 %v1476
    %v2562 = vpop.f32.mrf.mxu0
    %v2563 = vadd.f32 %v2543, %v2562
    %2564 = vdwg.mxu0
    %2565 = vmatpush.msra.mxu0 %v1859
    %2566 = vmatpush.msra.mxu0 %v1851
    %2567 = vmatpush.msra.mxu0 %v1843
    %2568 = vmatpush.msra.mxu0 %v1835
    %2569 = vmatpush.msra.mxu0 %v1827
    %2570 = vmatpush.msra.mxu0 %v1819
    %2571 = vmatpush.msra.mxu0 %v1811
    %2572 = vmatpush.msra.mxu0 %v1803
    %2573 = vmatpush.msra.mxu0 %v1795
    %2574 = vmatpush.msra.mxu0 %v1787
    %2575 = vmatpush.msra.mxu0 %v1779
    %2576 = vmatpush.msra.mxu0 %v1771
    %2577 = vmatpush.msra.mxu0 %v1763
    %2578 = vmatpush.msra.mxu0 %v1755
    %2579 = vmatpush.msra.mxu0 %v1747
    %2580 = vmatpush.msra.mxu0 %v1739
    %2581 = vmatmul.f32.gmra.mxu0 %v1477
    %v2582 = vpop.f32.mrf.mxu0
    %v2583 = vadd.f32 %v2563, %v2582
    %2584 = vdwg.mxu0
    %2585 = vmatpush.msra.mxu0 %v1987
    %2586 = vmatpush.msra.mxu0 %v1979
    %2587 = vmatpush.msra.mxu0 %v1971
    %2588 = vmatpush.msra.mxu0 %v1963
    %2589 = vmatpush.msra.mxu0 %v1955
    %2590 = vmatpush.msra.mxu0 %v1947
    %2591 = vmatpush.msra.mxu0 %v1939
    %2592 = vmatpush.msra.mxu0 %v1931
    %2593 = vmatpush.msra.mxu0 %v1923
    %2594 = vmatpush.msra.mxu0 %v1915
    %2595 = vmatpush.msra.mxu0 %v1907
    %2596 = vmatpush.msra.mxu0 %v1899
    %2597 = vmatpush.msra.mxu0 %v1891
    %2598 = vmatpush.msra.mxu0 %v1883
    %2599 = vmatpush.msra.mxu0 %v1875
    %2600 = vmatpush.msra.mxu0 %v1867
    %2601 = vmatmul.f32.gmra.mxu0 %v1478
    %v2602 = vpop.f32.mrf.mxu0
    %v2603 = vadd.f32 %v2583, %v2602
    %2604 = vdwg.mxu0
    %2605 = vmatpush.msra.mxu0 %v2115
    %2606 = vmatpush.msra.mxu0 %v2107
    %2607 = vmatpush.msra.mxu0 %v2099
    %2608 = vmatpush.msra.mxu0 %v2091
    %2609 = vmatpush.msra.mxu0 %v2083
    %2610 = vmatpush.msra.mxu0 %v2075
    %2611 = vmatpush.msra.mxu0 %v2067
    %2612 = vmatpush.msra.mxu0 %v2059
    %2613 = vmatpush.msra.mxu0 %v2051
    %2614 = vmatpush.msra.mxu0 %v2043
    %2615 = vmatpush.msra.mxu0 %v2035
    %2616 = vmatpush.msra.mxu0 %v2027
    %2617 = vmatpush.msra.mxu0 %v2019
    %2618 = vmatpush.msra.mxu0 %v2011
    %2619 = vmatpush.msra.mxu0 %v2003
    %2620 = vmatpush.msra.mxu0 %v1995
    %2621 = vmatmul.f32.gmra.mxu0 %v1479
    %v2622 = vpop.f32.mrf.mxu0
    %v2623 = vadd.f32 %v2603, %v2622
    %2624 = vdwg.mxu0
    %2625 = vmatpush.msra.mxu0 %v2243
    %2626 = vmatpush.msra.mxu0 %v2235
    %2627 = vmatpush.msra.mxu0 %v2227
    %2628 = vmatpush.msra.mxu0 %v2219
    %2629 = vmatpush.msra.mxu0 %v2211
    %2630 = vmatpush.msra.mxu0 %v2203
    %2631 = vmatpush.msra.mxu0 %v2195
    %2632 = vmatpush.msra.mxu0 %v2187
    %2633 = vmatpush.msra.mxu0 %v2179
    %2634 = vmatpush.msra.mxu0 %v2171
    %2635 = vmatpush.msra.mxu0 %v2163
    %2636 = vmatpush.msra.mxu0 %v2155
    %2637 = vmatpush.msra.mxu0 %v2147
    %2638 = vmatpush.msra.mxu0 %v2139
    %2639 = vmatpush.msra.mxu0 %v2131
    %2640 = vmatpush.msra.mxu0 %v2123
    %2641 = vmatmul.f32.gmra.mxu0 %v1480
    %v2642 = vpop.f32.mrf.mxu0
    %v2643 = vadd.f32 %v2623, %v2642
    %2644 = vdwg.mxu0
    %2645 = vmatpush.msra.mxu0 %v2371
    %2646 = vmatpush.msra.mxu0 %v2363
    %2647 = vmatpush.msra.mxu0 %v2355
    %2648 = vmatpush.msra.mxu0 %v2347
    %2649 = vmatpush.msra.mxu0 %v2339
    %2650 = vmatpush.msra.mxu0 %v2331
    %2651 = vmatpush.msra.mxu0 %v2323
    %2652 = vmatpush.msra.mxu0 %v2315
    %2653 = vmatpush.msra.mxu0 %v2307
    %2654 = vmatpush.msra.mxu0 %v2299
    %2655 = vmatpush.msra.mxu0 %v2291
    %2656 = vmatpush.msra.mxu0 %v2283
    %2657 = vmatpush.msra.mxu0 %v2275
    %2658 = vmatpush.msra.mxu0 %v2267
    %2659 = vmatpush.msra.mxu0 %v2259
    %2660 = vmatpush.msra.mxu0 %v2251
    %2661 = vmatmul.f32.gmra.mxu0 %v1481
    %v2662 = vpop.f32.mrf.mxu0
    %v2663 = vadd.f32 %v2643, %v2662
    %2664 = vdwg.mxu0
    %2665 = vmatpush.msra.mxu0 %v2499
    %2666 = vmatpush.msra.mxu0 %v2491
    %2667 = vmatpush.msra.mxu0 %v2483
    %2668 = vmatpush.msra.mxu0 %v2475
    %2669 = vmatpush.msra.mxu0 %v2467
    %2670 = vmatpush.msra.mxu0 %v2459
    %2671 = vmatpush.msra.mxu0 %v2451
    %2672 = vmatpush.msra.mxu0 %v2443
    %2673 = vmatpush.msra.mxu0 %v2435
    %2674 = vmatpush.msra.mxu0 %v2427
    %2675 = vmatpush.msra.mxu0 %v2419
    %2676 = vmatpush.msra.mxu0 %v2411
    %2677 = vmatpush.msra.mxu0 %v2403
    %2678 = vmatpush.msra.mxu0 %v2395
    %2679 = vmatpush.msra.mxu0 %v2387
    %2680 = vmatpush.msra.mxu0 %v2379
    %2681 = vmatmul.f32.gmra.mxu0 %v1482
    %v2682 = vpop.f32.mrf.mxu0
    %v2683 = vadd.f32 %v2663, %v2682
    %2684 = vdwg.mxu0
    %2685 = vmatpush.msra.mxu0 %v1604
    %2686 = vmatpush.msra.mxu0 %v1596
    %2687 = vmatpush.msra.mxu0 %v1588
    %2688 = vmatpush.msra.mxu0 %v1580
    %2689 = vmatpush.msra.mxu0 %v1572
    %2690 = vmatpush.msra.mxu0 %v1564
    %2691 = vmatpush.msra.mxu0 %v1556
    %2692 = vmatpush.msra.mxu0 %v1548
    %2693 = vmatpush.msra.mxu0 %v1540
    %2694 = vmatpush.msra.mxu0 %v1532
    %2695 = vmatpush.msra.mxu0 %v1524
    %2696 = vmatpush.msra.mxu0 %v1516
    %2697 = vmatpush.msra.mxu0 %v1508
    %2698 = vmatpush.msra.mxu0 %v1500
    %2699 = vmatpush.msra.mxu0 %v1492
    %2700 = vmatpush.msra.mxu0 %v1484
    %2701 = vmatmul.f32.gmra.mxu0 %v1475
    %v2702 = vpop.f32.mrf.mxu0
    %v2703 = vadd.f32 %v2510, %v2702
    %2704 = vdwg.mxu0
    %2705 = vmatpush.msra.mxu0 %v1732
    %2706 = vmatpush.msra.mxu0 %v1724
    %2707 = vmatpush.msra.mxu0 %v1716
    %2708 = vmatpush.msra.mxu0 %v1708
    %2709 = vmatpush.msra.mxu0 %v1700
    %2710 = vmatpush.msra.mxu0 %v1692
    %2711 = vmatpush.msra.mxu0 %v1684
    %2712 = vmatpush.msra.mxu0 %v1676
    %2713 = vmatpush.msra.mxu0 %v1668
    %2714 = vmatpush.msra.mxu0 %v1660
    %2715 = vmatpush.msra.mxu0 %v1652
    %2716 = vmatpush.msra.mxu0 %v1644
    %2717 = vmatpush.msra.mxu0 %v1636
    %2718 = vmatpush.msra.mxu0 %v1628
    %2719 = vmatpush.msra.mxu0 %v1620
    %2720 = vmatpush.msra.mxu0 %v1612
    %2721 = vmatmul.f32.gmra.mxu0 %v1476
    %v2722 = vpop.f32.mrf.mxu0
    %v2723 = vadd.f32 %v2703, %v2722
    %2724 = vdwg.mxu0
    %2725 = vmatpush.msra.mxu0 %v1860
    %2726 = vmatpush.msra.mxu0 %v1852
    %2727 = vmatpush.msra.mxu0 %v1844
    %2728 = vmatpush.msra.mxu0 %v1836
    %2729 = vmatpush.msra.mxu0 %v1828
    %2730 = vmatpush.msra.mxu0 %v1820
    %2731 = vmatpush.msra.mxu0 %v1812
    %2732 = vmatpush.msra.mxu0 %v1804
    %2733 = vmatpush.msra.mxu0 %v1796
    %2734 = vmatpush.msra.mxu0 %v1788
    %2735 = vmatpush.msra.mxu0 %v1780
    %2736 = vmatpush.msra.mxu0 %v1772
    %2737 = vmatpush.msra.mxu0 %v1764
    %2738 = vmatpush.msra.mxu0 %v1756
    %2739 = vmatpush.msra.mxu0 %v1748
    %2740 = vmatpush.msra.mxu0 %v1740
    %2741 = vmatmul.f32.gmra.mxu0 %v1477
    %v2742 = vpop.f32.mrf.mxu0
    %v2743 = vadd.f32 %v2723, %v2742
    %2744 = vdwg.mxu0
    %2745 = vmatpush.msra.mxu0 %v1988
    %2746 = vmatpush.msra.mxu0 %v1980
    %2747 = vmatpush.msra.mxu0 %v1972
    %2748 = vmatpush.msra.mxu0 %v1964
    %2749 = vmatpush.msra.mxu0 %v1956
    %2750 = vmatpush.msra.mxu0 %v1948
    %2751 = vmatpush.msra.mxu0 %v1940
    %2752 = vmatpush.msra.mxu0 %v1932
    %2753 = vmatpush.msra.mxu0 %v1924
    %2754 = vmatpush.msra.mxu0 %v1916
    %2755 = vmatpush.msra.mxu0 %v1908
    %2756 = vmatpush.msra.mxu0 %v1900
    %2757 = vmatpush.msra.mxu0 %v1892
    %2758 = vmatpush.msra.mxu0 %v1884
    %2759 = vmatpush.msra.mxu0 %v1876
    %2760 = vmatpush.msra.mxu0 %v1868
    %2761 = vmatmul.f32.gmra.mxu0 %v1478
    %v2762 = vpop.f32.mrf.mxu0
    %v2763 = vadd.f32 %v2743, %v2762
    %2764 = vdwg.mxu0
    %2765 = vmatpush.msra.mxu0 %v2116
    %2766 = vmatpush.msra.mxu0 %v2108
    %2767 = vmatpush.msra.mxu0 %v2100
    %2768 = vmatpush.msra.mxu0 %v2092
    %2769 = vmatpush.msra.mxu0 %v2084
    %2770 = vmatpush.msra.mxu0 %v2076
    %2771 = vmatpush.msra.mxu0 %v2068
    %2772 = vmatpush.msra.mxu0 %v2060
    %2773 = vmatpush.msra.mxu0 %v2052
    %2774 = vmatpush.msra.mxu0 %v2044
    %2775 = vmatpush.msra.mxu0 %v2036
    %2776 = vmatpush.msra.mxu0 %v2028
    %2777 = vmatpush.msra.mxu0 %v2020
    %2778 = vmatpush.msra.mxu0 %v2012
    %2779 = vmatpush.msra.mxu0 %v2004
    %2780 = vmatpush.msra.mxu0 %v1996
    %2781 = vmatmul.f32.gmra.mxu0 %v1479
    %v2782 = vpop.f32.mrf.mxu0
    %v2783 = vadd.f32 %v2763, %v2782
    %2784 = vdwg.mxu0
    %2785 = vmatpush.msra.mxu0 %v2244
    %2786 = vmatpush.msra.mxu0 %v2236
    %2787 = vmatpush.msra.mxu0 %v2228
    %2788 = vmatpush.msra.mxu0 %v2220
    %2789 = vmatpush.msra.mxu0 %v2212
    %2790 = vmatpush.msra.mxu0 %v2204
    %2791 = vmatpush.msra.mxu0 %v2196
    %2792 = vmatpush.msra.mxu0 %v2188
    %2793 = vmatpush.msra.mxu0 %v2180
    %2794 = vmatpush.msra.mxu0 %v2172
    %2795 = vmatpush.msra.mxu0 %v2164
    %2796 = vmatpush.msra.mxu0 %v2156
    %2797 = vmatpush.msra.mxu0 %v2148
    %2798 = vmatpush.msra.mxu0 %v2140
    %2799 = vmatpush.msra.mxu0 %v2132
    %2800 = vmatpush.msra.mxu0 %v2124
    %2801 = vmatmul.f32.gmra.mxu0 %v1480
    %v2802 = vpop.f32.mrf.mxu0
    %v2803 = vadd.f32 %v2783, %v2802
    %2804 = vdwg.mxu0
    %2805 = vmatpush.msra.mxu0 %v2372
    %2806 = vmatpush.msra.mxu0 %v2364
    %2807 = vmatpush.msra.mxu0 %v2356
    %2808 = vmatpush.msra.mxu0 %v2348
    %2809 = vmatpush.msra.mxu0 %v2340
    %2810 = vmatpush.msra.mxu0 %v2332
    %2811 = vmatpush.msra.mxu0 %v2324
    %2812 = vmatpush.msra.mxu0 %v2316
    %2813 = vmatpush.msra.mxu0 %v2308
    %2814 = vmatpush.msra.mxu0 %v2300
    %2815 = vmatpush.msra.mxu0 %v2292
    %2816 = vmatpush.msra.mxu0 %v2284
    %2817 = vmatpush.msra.mxu0 %v2276
    %2818 = vmatpush.msra.mxu0 %v2268
    %2819 = vmatpush.msra.mxu0 %v2260
    %2820 = vmatpush.msra.mxu0 %v2252
    %2821 = vmatmul.f32.gmra.mxu0 %v1481
    %v2822 = vpop.f32.mrf.mxu0
    %v2823 = vadd.f32 %v2803, %v2822
    %2824 = vdwg.mxu0
    %2825 = vmatpush.msra.mxu0 %v2500
    %2826 = vmatpush.msra.mxu0 %v2492
    %2827 = vmatpush.msra.mxu0 %v2484
    %2828 = vmatpush.msra.mxu0 %v2476
    %2829 = vmatpush.msra.mxu0 %v2468
    %2830 = vmatpush.msra.mxu0 %v2460
    %2831 = vmatpush.msra.mxu0 %v2452
    %2832 = vmatpush.msra.mxu0 %v2444
    %2833 = vmatpush.msra.mxu0 %v2436
    %2834 = vmatpush.msra.mxu0 %v2428
    %2835 = vmatpush.msra.mxu0 %v2420
    %2836 = vmatpush.msra.mxu0 %v2412
    %2837 = vmatpush.msra.mxu0 %v2404
    %2838 = vmatpush.msra.mxu0 %v2396
    %2839 = vmatpush.msra.mxu0 %v2388
    %2840 = vmatpush.msra.mxu0 %v2380
    %2841 = vmatmul.f32.gmra.mxu0 %v1482
    %v2842 = vpop.f32.mrf.mxu0
    %v2843 = vadd.f32 %v2823, %v2842
    %2844 = vdwg.mxu0
    %2845 = vmatpush.msra.mxu0 %v1605
    %2846 = vmatpush.msra.mxu0 %v1597
    %2847 = vmatpush.msra.mxu0 %v1589
    %2848 = vmatpush.msra.mxu0 %v1581
    %2849 = vmatpush.msra.mxu0 %v1573
    %2850 = vmatpush.msra.mxu0 %v1565
    %2851 = vmatpush.msra.mxu0 %v1557
    %2852 = vmatpush.msra.mxu0 %v1549
    %2853 = vmatpush.msra.mxu0 %v1541
    %2854 = vmatpush.msra.mxu0 %v1533
    %2855 = vmatpush.msra.mxu0 %v1525
    %2856 = vmatpush.msra.mxu0 %v1517
    %2857 = vmatpush.msra.mxu0 %v1509
    %2858 = vmatpush.msra.mxu0 %v1501
    %2859 = vmatpush.msra.mxu0 %v1493
    %2860 = vmatpush.msra.mxu0 %v1485
    %2861 = vmatmul.f32.gmra.mxu0 %v1475
    %v2862 = vpop.f32.mrf.mxu0
    %v2863 = vadd.f32 %v2511, %v2862
    %2864 = vdwg.mxu0
    %2865 = vmatpush.msra.mxu0 %v1733
    %2866 = vmatpush.msra.mxu0 %v1725
    %2867 = vmatpush.msra.mxu0 %v1717
    %2868 = vmatpush.msra.mxu0 %v1709
    %2869 = vmatpush.msra.mxu0 %v1701
    %2870 = vmatpush.msra.mxu0 %v1693
    %2871 = vmatpush.msra.mxu0 %v1685
    %2872 = vmatpush.msra.mxu0 %v1677
    %2873 = vmatpush.msra.mxu0 %v1669
    %2874 = vmatpush.msra.mxu0 %v1661
    %2875 = vmatpush.msra.mxu0 %v1653
    %2876 = vmatpush.msra.mxu0 %v1645
    %2877 = vmatpush.msra.mxu0 %v1637
    %2878 = vmatpush.msra.mxu0 %v1629
    %2879 = vmatpush.msra.mxu0 %v1621
    %2880 = vmatpush.msra.mxu0 %v1613
    %2881 = vmatmul.f32.gmra.mxu0 %v1476
    %v2882 = vpop.f32.mrf.mxu0
    %v2883 = vadd.f32 %v2863, %v2882
    %2884 = vdwg.mxu0
    %2885 = vmatpush.msra.mxu0 %v1861
    %2886 = vmatpush.msra.mxu0 %v1853
    %2887 = vmatpush.msra.mxu0 %v1845
    %2888 = vmatpush.msra.mxu0 %v1837
    %2889 = vmatpush.msra.mxu0 %v1829
    %2890 = vmatpush.msra.mxu0 %v1821
    %2891 = vmatpush.msra.mxu0 %v1813
    %2892 = vmatpush.msra.mxu0 %v1805
    %2893 = vmatpush.msra.mxu0 %v1797
    %2894 = vmatpush.msra.mxu0 %v1789
    %2895 = vmatpush.msra.mxu0 %v1781
    %2896 = vmatpush.msra.mxu0 %v1773
    %2897 = vmatpush.msra.mxu0 %v1765
    %2898 = vmatpush.msra.mxu0 %v1757
    %2899 = vmatpush.msra.mxu0 %v1749
    %2900 = vmatpush.msra.mxu0 %v1741
    %2901 = vmatmul.f32.gmra.mxu0 %v1477
    %v2902 = vpop.f32.mrf.mxu0
    %v2903 = vadd.f32 %v2883, %v2902
    %2904 = vdwg.mxu0
    %2905 = vmatpush.msra.mxu0 %v1989
    %2906 = vmatpush.msra.mxu0 %v1981
    %2907 = vmatpush.msra.mxu0 %v1973
    %2908 = vmatpush.msra.mxu0 %v1965
    %2909 = vmatpush.msra.mxu0 %v1957
    %2910 = vmatpush.msra.mxu0 %v1949
    %2911 = vmatpush.msra.mxu0 %v1941
    %2912 = vmatpush.msra.mxu0 %v1933
    %2913 = vmatpush.msra.mxu0 %v1925
    %2914 = vmatpush.msra.mxu0 %v1917
    %2915 = vmatpush.msra.mxu0 %v1909
    %2916 = vmatpush.msra.mxu0 %v1901
    %2917 = vmatpush.msra.mxu0 %v1893
    %2918 = vmatpush.msra.mxu0 %v1885
    %2919 = vmatpush.msra.mxu0 %v1877
    %2920 = vmatpush.msra.mxu0 %v1869
    %2921 = vmatmul.f32.gmra.mxu0 %v1478
    %v2922 = vpop.f32.mrf.mxu0
    %v2923 = vadd.f32 %v2903, %v2922
    %2924 = vdwg.mxu0
    %2925 = vmatpush.msra.mxu0 %v2117
    %2926 = vmatpush.msra.mxu0 %v2109
    %2927 = vmatpush.msra.mxu0 %v2101
    %2928 = vmatpush.msra.mxu0 %v2093
    %2929 = vmatpush.msra.mxu0 %v2085
    %2930 = vmatpush.msra.mxu0 %v2077
    %2931 = vmatpush.msra.mxu0 %v2069
    %2932 = vmatpush.msra.mxu0 %v2061
    %2933 = vmatpush.msra.mxu0 %v2053
    %2934 = vmatpush.msra.mxu0 %v2045
    %2935 = vmatpush.msra.mxu0 %v2037
    %2936 = vmatpush.msra.mxu0 %v2029
    %2937 = vmatpush.msra.mxu0 %v2021
    %2938 = vmatpush.msra.mxu0 %v2013
    %2939 = vmatpush.msra.mxu0 %v2005
    %2940 = vmatpush.msra.mxu0 %v1997
    %2941 = vmatmul.f32.gmra.mxu0 %v1479
    %v2942 = vpop.f32.mrf.mxu0
    %v2943 = vadd.f32 %v2923, %v2942
    %2944 = vdwg.mxu0
    %2945 = vmatpush.msra.mxu0 %v2245
    %2946 = vmatpush.msra.mxu0 %v2237
    %2947 = vmatpush.msra.mxu0 %v2229
    %2948 = vmatpush.msra.mxu0 %v2221
    %2949 = vmatpush.msra.mxu0 %v2213
    %2950 = vmatpush.msra.mxu0 %v2205
    %2951 = vmatpush.msra.mxu0 %v2197
    %2952 = vmatpush.msra.mxu0 %v2189
    %2953 = vmatpush.msra.mxu0 %v2181
    %2954 = vmatpush.msra.mxu0 %v2173
    %2955 = vmatpush.msra.mxu0 %v2165
    %2956 = vmatpush.msra.mxu0 %v2157
    %2957 = vmatpush.msra.mxu0 %v2149
    %2958 = vmatpush.msra.mxu0 %v2141
    %2959 = vmatpush.msra.mxu0 %v2133
    %2960 = vmatpush.msra.mxu0 %v2125
    %2961 = vmatmul.f32.gmra.mxu0 %v1480
    %v2962 = vpop.f32.mrf.mxu0
    %v2963 = vadd.f32 %v2943, %v2962
    %2964 = vdwg.mxu0
    %2965 = vmatpush.msra.mxu0 %v2373
    %2966 = vmatpush.msra.mxu0 %v2365
    %2967 = vmatpush.msra.mxu0 %v2357
    %2968 = vmatpush.msra.mxu0 %v2349
    %2969 = vmatpush.msra.mxu0 %v2341
    %2970 = vmatpush.msra.mxu0 %v2333
    %2971 = vmatpush.msra.mxu0 %v2325
    %2972 = vmatpush.msra.mxu0 %v2317
    %2973 = vmatpush.msra.mxu0 %v2309
    %2974 = vmatpush.msra.mxu0 %v2301
    %2975 = vmatpush.msra.mxu0 %v2293
    %2976 = vmatpush.msra.mxu0 %v2285
    %2977 = vmatpush.msra.mxu0 %v2277
    %2978 = vmatpush.msra.mxu0 %v2269
    %2979 = vmatpush.msra.mxu0 %v2261
    %2980 = vmatpush.msra.mxu0 %v2253
    %2981 = vmatmul.f32.gmra.mxu0 %v1481
    %v2982 = vpop.f32.mrf.mxu0
    %v2983 = vadd.f32 %v2963, %v2982
    %2984 = vdwg.mxu0
    %2985 = vmatpush.msra.mxu0 %v2501
    %2986 = vmatpush.msra.mxu0 %v2493
    %2987 = vmatpush.msra.mxu0 %v2485
    %2988 = vmatpush.msra.mxu0 %v2477
    %2989 = vmatpush.msra.mxu0 %v2469
    %2990 = vmatpush.msra.mxu0 %v2461
    %2991 = vmatpush.msra.mxu0 %v2453
    %2992 = vmatpush.msra.mxu0 %v2445
    %2993 = vmatpush.msra.mxu0 %v2437
    %2994 = vmatpush.msra.mxu0 %v2429
    %2995 = vmatpush.msra.mxu0 %v2421
    %2996 = vmatpush.msra.mxu0 %v2413
    %2997 = vmatpush.msra.mxu0 %v2405
    %2998 = vmatpush.msra.mxu0 %v2397
    %2999 = vmatpush.msra.mxu0 %v2389
    %3000 = vmatpush.msra.mxu0 %v2381
    %3001 = vmatmul.f32.gmra.mxu0 %v1482
    %v3002 = vpop.f32.mrf.mxu0
    %v3003 = vadd.f32 %v2983, %v3002
    %3004 = vdwg.mxu0
    %3005 = vmatpush.msra.mxu0 %v1606
    %3006 = vmatpush.msra.mxu0 %v1598
    %3007 = vmatpush.msra.mxu0 %v1590
    %3008 = vmatpush.msra.mxu0 %v1582
    %3009 = vmatpush.msra.mxu0 %v1574
    %3010 = vmatpush.msra.mxu0 %v1566
    %3011 = vmatpush.msra.mxu0 %v1558
    %3012 = vmatpush.msra.mxu0 %v1550
    %3013 = vmatpush.msra.mxu0 %v1542
    %3014 = vmatpush.msra.mxu0 %v1534
    %3015 = vmatpush.msra.mxu0 %v1526
    %3016 = vmatpush.msra.mxu0 %v1518
    %3017 = vmatpush.msra.mxu0 %v1510
    %3018 = vmatpush.msra.mxu0 %v1502
    %3019 = vmatpush.msra.mxu0 %v1494
    %3020 = vmatpush.msra.mxu0 %v1486
    %3021 = vmatmul.f32.gmra.mxu0 %v1475
    %v3022 = vpop.f32.mrf.mxu0
    %v3023 = vadd.f32 %v2512, %v3022
    %3024 = vdwg.mxu0
    %3025 = vmatpush.msra.mxu0 %v1734
    %3026 = vmatpush.msra.mxu0 %v1726
    %3027 = vmatpush.msra.mxu0 %v1718
    %3028 = vmatpush.msra.mxu0 %v1710
    %3029 = vmatpush.msra.mxu0 %v1702
    %3030 = vmatpush.msra.mxu0 %v1694
    %3031 = vmatpush.msra.mxu0 %v1686
    %3032 = vmatpush.msra.mxu0 %v1678
    %3033 = vmatpush.msra.mxu0 %v1670
    %3034 = vmatpush.msra.mxu0 %v1662
    %3035 = vmatpush.msra.mxu0 %v1654
    %3036 = vmatpush.msra.mxu0 %v1646
    %3037 = vmatpush.msra.mxu0 %v1638
    %3038 = vmatpush.msra.mxu0 %v1630
    %3039 = vmatpush.msra.mxu0 %v1622
    %3040 = vmatpush.msra.mxu0 %v1614
    %3041 = vmatmul.f32.gmra.mxu0 %v1476
    %v3042 = vpop.f32.mrf.mxu0
    %v3043 = vadd.f32 %v3023, %v3042
    %3044 = vdwg.mxu0
    %3045 = vmatpush.msra.mxu0 %v1862
    %3046 = vmatpush.msra.mxu0 %v1854
    %3047 = vmatpush.msra.mxu0 %v1846
    %3048 = vmatpush.msra.mxu0 %v1838
    %3049 = vmatpush.msra.mxu0 %v1830
    %3050 = vmatpush.msra.mxu0 %v1822
    %3051 = vmatpush.msra.mxu0 %v1814
    %3052 = vmatpush.msra.mxu0 %v1806
    %3053 = vmatpush.msra.mxu0 %v1798
    %3054 = vmatpush.msra.mxu0 %v1790
    %3055 = vmatpush.msra.mxu0 %v1782
    %3056 = vmatpush.msra.mxu0 %v1774
    %3057 = vmatpush.msra.mxu0 %v1766
    %3058 = vmatpush.msra.mxu0 %v1758
    %3059 = vmatpush.msra.mxu0 %v1750
    %3060 = vmatpush.msra.mxu0 %v1742
    %3061 = vmatmul.f32.gmra.mxu0 %v1477
    %v3062 = vpop.f32.mrf.mxu0
    %v3063 = vadd.f32 %v3043, %v3062
    %3064 = vdwg.mxu0
    %3065 = vmatpush.msra.mxu0 %v1990
    %3066 = vmatpush.msra.mxu0 %v1982
    %3067 = vmatpush.msra.mxu0 %v1974
    %3068 = vmatpush.msra.mxu0 %v1966
    %3069 = vmatpush.msra.mxu0 %v1958
    %3070 = vmatpush.msra.mxu0 %v1950
    %3071 = vmatpush.msra.mxu0 %v1942
    %3072 = vmatpush.msra.mxu0 %v1934
    %3073 = vmatpush.msra.mxu0 %v1926
    %3074 = vmatpush.msra.mxu0 %v1918
    %3075 = vmatpush.msra.mxu0 %v1910
    %3076 = vmatpush.msra.mxu0 %v1902
    %3077 = vmatpush.msra.mxu0 %v1894
    %3078 = vmatpush.msra.mxu0 %v1886
    %3079 = vmatpush.msra.mxu0 %v1878
    %3080 = vmatpush.msra.mxu0 %v1870
    %3081 = vmatmul.f32.gmra.mxu0 %v1478
    %v3082 = vpop.f32.mrf.mxu0
    %v3083 = vadd.f32 %v3063, %v3082
    %3084 = vdwg.mxu0
    %3085 = vmatpush.msra.mxu0 %v2118
    %3086 = vmatpush.msra.mxu0 %v2110
    %3087 = vmatpush.msra.mxu0 %v2102
    %3088 = vmatpush.msra.mxu0 %v2094
    %3089 = vmatpush.msra.mxu0 %v2086
    %3090 = vmatpush.msra.mxu0 %v2078
    %3091 = vmatpush.msra.mxu0 %v2070
    %3092 = vmatpush.msra.mxu0 %v2062
    %3093 = vmatpush.msra.mxu0 %v2054
    %3094 = vmatpush.msra.mxu0 %v2046
    %3095 = vmatpush.msra.mxu0 %v2038
    %3096 = vmatpush.msra.mxu0 %v2030
    %3097 = vmatpush.msra.mxu0 %v2022
    %3098 = vmatpush.msra.mxu0 %v2014
    %3099 = vmatpush.msra.mxu0 %v2006
    %3100 = vmatpush.msra.mxu0 %v1998
    %3101 = vmatmul.f32.gmra.mxu0 %v1479
    %v3102 = vpop.f32.mrf.mxu0
    %v3103 = vadd.f32 %v3083, %v3102
    %3104 = vdwg.mxu0
    %3105 = vmatpush.msra.mxu0 %v2246
    %3106 = vmatpush.msra.mxu0 %v2238
    %3107 = vmatpush.msra.mxu0 %v2230
    %3108 = vmatpush.msra.mxu0 %v2222
    %3109 = vmatpush.msra.mxu0 %v2214
    %3110 = vmatpush.msra.mxu0 %v2206
    %3111 = vmatpush.msra.mxu0 %v2198
    %3112 = vmatpush.msra.mxu0 %v2190
    %3113 = vmatpush.msra.mxu0 %v2182
    %3114 = vmatpush.msra.mxu0 %v2174
    %3115 = vmatpush.msra.mxu0 %v2166
    %3116 = vmatpush.msra.mxu0 %v2158
    %3117 = vmatpush.msra.mxu0 %v2150
    %3118 = vmatpush.msra.mxu0 %v2142
    %3119 = vmatpush.msra.mxu0 %v2134
    %3120 = vmatpush.msra.mxu0 %v2126
    %3121 = vmatmul.f32.gmra.mxu0 %v1480
    %v3122 = vpop.f32.mrf.mxu0
    %v3123 = vadd.f32 %v3103, %v3122
    %3124 = vdwg.mxu0
    %3125 = vmatpush.msra.mxu0 %v2374
    %3126 = vmatpush.msra.mxu0 %v2366
    %3127 = vmatpush.msra.mxu0 %v2358
    %3128 = vmatpush.msra.mxu0 %v2350
    %3129 = vmatpush.msra.mxu0 %v2342
    %3130 = vmatpush.msra.mxu0 %v2334
    %3131 = vmatpush.msra.mxu0 %v2326
    %3132 = vmatpush.msra.mxu0 %v2318
    %3133 = vmatpush.msra.mxu0 %v2310
    %3134 = vmatpush.msra.mxu0 %v2302
    %3135 = vmatpush.msra.mxu0 %v2294
    %3136 = vmatpush.msra.mxu0 %v2286
    %3137 = vmatpush.msra.mxu0 %v2278
    %3138 = vmatpush.msra.mxu0 %v2270
    %3139 = vmatpush.msra.mxu0 %v2262
    %3140 = vmatpush.msra.mxu0 %v2254
    %3141 = vmatmul.f32.gmra.mxu0 %v1481
    %v3142 = vpop.f32.mrf.mxu0
    %v3143 = vadd.f32 %v3123, %v3142
    %3144 = vdwg.mxu0
    %3145 = vmatpush.msra.mxu0 %v2502
    %3146 = vmatpush.msra.mxu0 %v2494
    %3147 = vmatpush.msra.mxu0 %v2486
    %3148 = vmatpush.msra.mxu0 %v2478
    %3149 = vmatpush.msra.mxu0 %v2470
    %3150 = vmatpush.msra.mxu0 %v2462
    %3151 = vmatpush.msra.mxu0 %v2454
    %3152 = vmatpush.msra.mxu0 %v2446
    %3153 = vmatpush.msra.mxu0 %v2438
    %3154 = vmatpush.msra.mxu0 %v2430
    %3155 = vmatpush.msra.mxu0 %v2422
    %3156 = vmatpush.msra.mxu0 %v2414
    %3157 = vmatpush.msra.mxu0 %v2406
    %3158 = vmatpush.msra.mxu0 %v2398
    %3159 = vmatpush.msra.mxu0 %v2390
    %3160 = vmatpush.msra.mxu0 %v2382
    %3161 = vmatmul.f32.gmra.mxu0 %v1482
    %v3162 = vpop.f32.mrf.mxu0
    %v3163 = vadd.f32 %v3143, %v3162
    %3164 = vdwg.mxu0
    %3165 = vmatpush.msra.mxu0 %v1607
    %3166 = vmatpush.msra.mxu0 %v1599
    %3167 = vmatpush.msra.mxu0 %v1591
    %3168 = vmatpush.msra.mxu0 %v1583
    %3169 = vmatpush.msra.mxu0 %v1575
    %3170 = vmatpush.msra.mxu0 %v1567
    %3171 = vmatpush.msra.mxu0 %v1559
    %3172 = vmatpush.msra.mxu0 %v1551
    %3173 = vmatpush.msra.mxu0 %v1543
    %3174 = vmatpush.msra.mxu0 %v1535
    %3175 = vmatpush.msra.mxu0 %v1527
    %3176 = vmatpush.msra.mxu0 %v1519
    %3177 = vmatpush.msra.mxu0 %v1511
    %3178 = vmatpush.msra.mxu0 %v1503
    %3179 = vmatpush.msra.mxu0 %v1495
    %3180 = vmatpush.msra.mxu0 %v1487
    %3181 = vmatmul.f32.gmra.mxu0 %v1475
    %v3182 = vpop.f32.mrf.mxu0
    %v3183 = vadd.f32 %v2513, %v3182
    %3184 = vdwg.mxu0
    %3185 = vmatpush.msra.mxu0 %v1735
    %3186 = vmatpush.msra.mxu0 %v1727
    %3187 = vmatpush.msra.mxu0 %v1719
    %3188 = vmatpush.msra.mxu0 %v1711
    %3189 = vmatpush.msra.mxu0 %v1703
    %3190 = vmatpush.msra.mxu0 %v1695
    %3191 = vmatpush.msra.mxu0 %v1687
    %3192 = vmatpush.msra.mxu0 %v1679
    %3193 = vmatpush.msra.mxu0 %v1671
    %3194 = vmatpush.msra.mxu0 %v1663
    %3195 = vmatpush.msra.mxu0 %v1655
    %3196 = vmatpush.msra.mxu0 %v1647
    %3197 = vmatpush.msra.mxu0 %v1639
    %3198 = vmatpush.msra.mxu0 %v1631
    %3199 = vmatpush.msra.mxu0 %v1623
    %3200 = vmatpush.msra.mxu0 %v1615
    %3201 = vmatmul.f32.gmra.mxu0 %v1476
    %v3202 = vpop.f32.mrf.mxu0
    %v3203 = vadd.f32 %v3183, %v3202
    %3204 = vdwg.mxu0
    %3205 = vmatpush.msra.mxu0 %v1863
    %3206 = vmatpush.msra.mxu0 %v1855
    %3207 = vmatpush.msra.mxu0 %v1847
    %3208 = vmatpush.msra.mxu0 %v1839
    %3209 = vmatpush.msra.mxu0 %v1831
    %3210 = vmatpush.msra.mxu0 %v1823
    %3211 = vmatpush.msra.mxu0 %v1815
    %3212 = vmatpush.msra.mxu0 %v1807
    %3213 = vmatpush.msra.mxu0 %v1799
    %3214 = vmatpush.msra.mxu0 %v1791
    %3215 = vmatpush.msra.mxu0 %v1783
    %3216 = vmatpush.msra.mxu0 %v1775
    %3217 = vmatpush.msra.mxu0 %v1767
    %3218 = vmatpush.msra.mxu0 %v1759
    %3219 = vmatpush.msra.mxu0 %v1751
    %3220 = vmatpush.msra.mxu0 %v1743
    %3221 = vmatmul.f32.gmra.mxu0 %v1477
    %v3222 = vpop.f32.mrf.mxu0
    %v3223 = vadd.f32 %v3203, %v3222
    %3224 = vdwg.mxu0
    %3225 = vmatpush.msra.mxu0 %v1991
    %3226 = vmatpush.msra.mxu0 %v1983
    %3227 = vmatpush.msra.mxu0 %v1975
    %3228 = vmatpush.msra.mxu0 %v1967
    %3229 = vmatpush.msra.mxu0 %v1959
    %3230 = vmatpush.msra.mxu0 %v1951
    %3231 = vmatpush.msra.mxu0 %v1943
    %3232 = vmatpush.msra.mxu0 %v1935
    %3233 = vmatpush.msra.mxu0 %v1927
    %3234 = vmatpush.msra.mxu0 %v1919
    %3235 = vmatpush.msra.mxu0 %v1911
    %3236 = vmatpush.msra.mxu0 %v1903
    %3237 = vmatpush.msra.mxu0 %v1895
    %3238 = vmatpush.msra.mxu0 %v1887
    %3239 = vmatpush.msra.mxu0 %v1879
    %3240 = vmatpush.msra.mxu0 %v1871
    %3241 = vmatmul.f32.gmra.mxu0 %v1478
    %v3242 = vpop.f32.mrf.mxu0
    %v3243 = vadd.f32 %v3223, %v3242
    %3244 = vdwg.mxu0
    %3245 = vmatpush.msra.mxu0 %v2119
    %3246 = vmatpush.msra.mxu0 %v2111
    %3247 = vmatpush.msra.mxu0 %v2103
    %3248 = vmatpush.msra.mxu0 %v2095
    %3249 = vmatpush.msra.mxu0 %v2087
    %3250 = vmatpush.msra.mxu0 %v2079
    %3251 = vmatpush.msra.mxu0 %v2071
    %3252 = vmatpush.msra.mxu0 %v2063
    %3253 = vmatpush.msra.mxu0 %v2055
    %3254 = vmatpush.msra.mxu0 %v2047
    %3255 = vmatpush.msra.mxu0 %v2039
    %3256 = vmatpush.msra.mxu0 %v2031
    %3257 = vmatpush.msra.mxu0 %v2023
    %3258 = vmatpush.msra.mxu0 %v2015
    %3259 = vmatpush.msra.mxu0 %v2007
    %3260 = vmatpush.msra.mxu0 %v1999
    %3261 = vmatmul.f32.gmra.mxu0 %v1479
    %v3262 = vpop.f32.mrf.mxu0
    %v3263 = vadd.f32 %v3243, %v3262
    %3264 = vdwg.mxu0
    %3265 = vmatpush.msra.mxu0 %v2247
    %3266 = vmatpush.msra.mxu0 %v2239
    %3267 = vmatpush.msra.mxu0 %v2231
    %3268 = vmatpush.msra.mxu0 %v2223
    %3269 = vmatpush.msra.mxu0 %v2215
    %3270 = vmatpush.msra.mxu0 %v2207
    %3271 = vmatpush.msra.mxu0 %v2199
    %3272 = vmatpush.msra.mxu0 %v2191
    %3273 = vmatpush.msra.mxu0 %v2183
    %3274 = vmatpush.msra.mxu0 %v2175
    %3275 = vmatpush.msra.mxu0 %v2167
    %3276 = vmatpush.msra.mxu0 %v2159
    %3277 = vmatpush.msra.mxu0 %v2151
    %3278 = vmatpush.msra.mxu0 %v2143
    %3279 = vmatpush.msra.mxu0 %v2135
    %3280 = vmatpush.msra.mxu0 %v2127
    %3281 = vmatmul.f32.gmra.mxu0 %v1480
    %v3282 = vpop.f32.mrf.mxu0
    %v3283 = vadd.f32 %v3263, %v3282
    %3284 = vdwg.mxu0
    %3285 = vmatpush.msra.mxu0 %v2375
    %3286 = vmatpush.msra.mxu0 %v2367
    %3287 = vmatpush.msra.mxu0 %v2359
    %3288 = vmatpush.msra.mxu0 %v2351
    %3289 = vmatpush.msra.mxu0 %v2343
    %3290 = vmatpush.msra.mxu0 %v2335
    %3291 = vmatpush.msra.mxu0 %v2327
    %3292 = vmatpush.msra.mxu0 %v2319
    %3293 = vmatpush.msra.mxu0 %v2311
    %3294 = vmatpush.msra.mxu0 %v2303
    %3295 = vmatpush.msra.mxu0 %v2295
    %3296 = vmatpush.msra.mxu0 %v2287
    %3297 = vmatpush.msra.mxu0 %v2279
    %3298 = vmatpush.msra.mxu0 %v2271
    %3299 = vmatpush.msra.mxu0 %v2263
    %3300 = vmatpush.msra.mxu0 %v2255
    %3301 = vmatmul.f32.gmra.mxu0 %v1481
    %v3302 = vpop.f32.mrf.mxu0
    %v3303 = vadd.f32 %v3283, %v3302
    %3304 = vdwg.mxu0
    %3305 = vmatpush.msra.mxu0 %v2503
    %3306 = vmatpush.msra.mxu0 %v2495
    %3307 = vmatpush.msra.mxu0 %v2487
    %3308 = vmatpush.msra.mxu0 %v2479
    %3309 = vmatpush.msra.mxu0 %v2471
    %3310 = vmatpush.msra.mxu0 %v2463
    %3311 = vmatpush.msra.mxu0 %v2455
    %3312 = vmatpush.msra.mxu0 %v2447
    %3313 = vmatpush.msra.mxu0 %v2439
    %3314 = vmatpush.msra.mxu0 %v2431
    %3315 = vmatpush.msra.mxu0 %v2423
    %3316 = vmatpush.msra.mxu0 %v2415
    %3317 = vmatpush.msra.mxu0 %v2407
    %3318 = vmatpush.msra.mxu0 %v2399
    %3319 = vmatpush.msra.mxu0 %v2391
    %3320 = vmatpush.msra.mxu0 %v2383
    %3321 = vmatmul.f32.gmra.mxu0 %v1482
    %v3322 = vpop.f32.mrf.mxu0
    %v3323 = vadd.f32 %v3303, %v3322
    %3324 = vdwg.mxu0
    %3325 = vmatpush.msra.mxu0 %v1608
    %3326 = vmatpush.msra.mxu0 %v1600
    %3327 = vmatpush.msra.mxu0 %v1592
    %3328 = vmatpush.msra.mxu0 %v1584
    %3329 = vmatpush.msra.mxu0 %v1576
    %3330 = vmatpush.msra.mxu0 %v1568
    %3331 = vmatpush.msra.mxu0 %v1560
    %3332 = vmatpush.msra.mxu0 %v1552
    %3333 = vmatpush.msra.mxu0 %v1544
    %3334 = vmatpush.msra.mxu0 %v1536
    %3335 = vmatpush.msra.mxu0 %v1528
    %3336 = vmatpush.msra.mxu0 %v1520
    %3337 = vmatpush.msra.mxu0 %v1512
    %3338 = vmatpush.msra.mxu0 %v1504
    %3339 = vmatpush.msra.mxu0 %v1496
    %3340 = vmatpush.msra.mxu0 %v1488
    %3341 = vmatmul.f32.gmra.mxu0 %v1475
    %v3342 = vpop.f32.mrf.mxu0
    %v3343 = vadd.f32 %v2514, %v3342
    %3344 = vdwg.mxu0
    %3345 = vmatpush.msra.mxu0 %v1736
    %3346 = vmatpush.msra.mxu0 %v1728
    %3347 = vmatpush.msra.mxu0 %v1720
    %3348 = vmatpush.msra.mxu0 %v1712
    %3349 = vmatpush.msra.mxu0 %v1704
    %3350 = vmatpush.msra.mxu0 %v1696
    %3351 = vmatpush.msra.mxu0 %v1688
    %3352 = vmatpush.msra.mxu0 %v1680
    %3353 = vmatpush.msra.mxu0 %v1672
    %3354 = vmatpush.msra.mxu0 %v1664
    %3355 = vmatpush.msra.mxu0 %v1656
    %3356 = vmatpush.msra.mxu0 %v1648
    %3357 = vmatpush.msra.mxu0 %v1640
    %3358 = vmatpush.msra.mxu0 %v1632
    %3359 = vmatpush.msra.mxu0 %v1624
    %3360 = vmatpush.msra.mxu0 %v1616
    %3361 = vmatmul.f32.gmra.mxu0 %v1476
    %v3362 = vpop.f32.mrf.mxu0
    %v3363 = vadd.f32 %v3343, %v3362
    %3364 = vdwg.mxu0
    %3365 = vmatpush.msra.mxu0 %v1864
    %3366 = vmatpush.msra.mxu0 %v1856
    %3367 = vmatpush.msra.mxu0 %v1848
    %3368 = vmatpush.msra.mxu0 %v1840
    %3369 = vmatpush.msra.mxu0 %v1832
    %3370 = vmatpush.msra.mxu0 %v1824
    %3371 = vmatpush.msra.mxu0 %v1816
    %3372 = vmatpush.msra.mxu0 %v1808
    %3373 = vmatpush.msra.mxu0 %v1800
    %3374 = vmatpush.msra.mxu0 %v1792
    %3375 = vmatpush.msra.mxu0 %v1784
    %3376 = vmatpush.msra.mxu0 %v1776
    %3377 = vmatpush.msra.mxu0 %v1768
    %3378 = vmatpush.msra.mxu0 %v1760
    %3379 = vmatpush.msra.mxu0 %v1752
    %3380 = vmatpush.msra.mxu0 %v1744
    %3381 = vmatmul.f32.gmra.mxu0 %v1477
    %v3382 = vpop.f32.mrf.mxu0
    %v3383 = vadd.f32 %v3363, %v3382
    %3384 = vdwg.mxu0
    %3385 = vmatpush.msra.mxu0 %v1992
    %3386 = vmatpush.msra.mxu0 %v1984
    %3387 = vmatpush.msra.mxu0 %v1976
    %3388 = vmatpush.msra.mxu0 %v1968
    %3389 = vmatpush.msra.mxu0 %v1960
    %3390 = vmatpush.msra.mxu0 %v1952
    %3391 = vmatpush.msra.mxu0 %v1944
    %3392 = vmatpush.msra.mxu0 %v1936
    %3393 = vmatpush.msra.mxu0 %v1928
    %3394 = vmatpush.msra.mxu0 %v1920
    %3395 = vmatpush.msra.mxu0 %v1912
    %3396 = vmatpush.msra.mxu0 %v1904
    %3397 = vmatpush.msra.mxu0 %v1896
    %3398 = vmatpush.msra.mxu0 %v1888
    %3399 = vmatpush.msra.mxu0 %v1880
    %3400 = vmatpush.msra.mxu0 %v1872
    %3401 = vmatmul.f32.gmra.mxu0 %v1478
    %v3402 = vpop.f32.mrf.mxu0
    %v3403 = vadd.f32 %v3383, %v3402
    %3404 = vdwg.mxu0
    %3405 = vmatpush.msra.mxu0 %v2120
    %3406 = vmatpush.msra.mxu0 %v2112
    %3407 = vmatpush.msra.mxu0 %v2104
    %3408 = vmatpush.msra.mxu0 %v2096
    %3409 = vmatpush.msra.mxu0 %v2088
    %3410 = vmatpush.msra.mxu0 %v2080
    %3411 = vmatpush.msra.mxu0 %v2072
    %3412 = vmatpush.msra.mxu0 %v2064
    %3413 = vmatpush.msra.mxu0 %v2056
    %3414 = vmatpush.msra.mxu0 %v2048
    %3415 = vmatpush.msra.mxu0 %v2040
    %3416 = vmatpush.msra.mxu0 %v2032
    %3417 = vmatpush.msra.mxu0 %v2024
    %3418 = vmatpush.msra.mxu0 %v2016
    %3419 = vmatpush.msra.mxu0 %v2008
    %3420 = vmatpush.msra.mxu0 %v2000
    %3421 = vmatmul.f32.gmra.mxu0 %v1479
    %v3422 = vpop.f32.mrf.mxu0
    %v3423 = vadd.f32 %v3403, %v3422
    %3424 = vdwg.mxu0
    %3425 = vmatpush.msra.mxu0 %v2248
    %3426 = vmatpush.msra.mxu0 %v2240
    %3427 = vmatpush.msra.mxu0 %v2232
    %3428 = vmatpush.msra.mxu0 %v2224
    %3429 = vmatpush.msra.mxu0 %v2216
    %3430 = vmatpush.msra.mxu0 %v2208
    %3431 = vmatpush.msra.mxu0 %v2200
    %3432 = vmatpush.msra.mxu0 %v2192
    %3433 = vmatpush.msra.mxu0 %v2184
    %3434 = vmatpush.msra.mxu0 %v2176
    %3435 = vmatpush.msra.mxu0 %v2168
    %3436 = vmatpush.msra.mxu0 %v2160
    %3437 = vmatpush.msra.mxu0 %v2152
    %3438 = vmatpush.msra.mxu0 %v2144
    %3439 = vmatpush.msra.mxu0 %v2136
    %3440 = vmatpush.msra.mxu0 %v2128
    %3441 = vmatmul.f32.gmra.mxu0 %v1480
    %v3442 = vpop.f32.mrf.mxu0
    %v3443 = vadd.f32 %v3423, %v3442
    %3444 = vdwg.mxu0
    %3445 = vmatpush.msra.mxu0 %v2376
    %3446 = vmatpush.msra.mxu0 %v2368
    %3447 = vmatpush.msra.mxu0 %v2360
    %3448 = vmatpush.msra.mxu0 %v2352
    %3449 = vmatpush.msra.mxu0 %v2344
    %3450 = vmatpush.msra.mxu0 %v2336
    %3451 = vmatpush.msra.mxu0 %v2328
    %3452 = vmatpush.msra.mxu0 %v2320
    %3453 = vmatpush.msra.mxu0 %v2312
    %3454 = vmatpush.msra.mxu0 %v2304
    %3455 = vmatpush.msra.mxu0 %v2296
    %3456 = vmatpush.msra.mxu0 %v2288
    %3457 = vmatpush.msra.mxu0 %v2280
    %3458 = vmatpush.msra.mxu0 %v2272
    %3459 = vmatpush.msra.mxu0 %v2264
    %3460 = vmatpush.msra.mxu0 %v2256
    %3461 = vmatmul.f32.gmra.mxu0 %v1481
    %v3462 = vpop.f32.mrf.mxu0
    %v3463 = vadd.f32 %v3443, %v3462
    %3464 = vdwg.mxu0
    %3465 = vmatpush.msra.mxu0 %v2504
    %3466 = vmatpush.msra.mxu0 %v2496
    %3467 = vmatpush.msra.mxu0 %v2488
    %3468 = vmatpush.msra.mxu0 %v2480
    %3469 = vmatpush.msra.mxu0 %v2472
    %3470 = vmatpush.msra.mxu0 %v2464
    %3471 = vmatpush.msra.mxu0 %v2456
    %3472 = vmatpush.msra.mxu0 %v2448
    %3473 = vmatpush.msra.mxu0 %v2440
    %3474 = vmatpush.msra.mxu0 %v2432
    %3475 = vmatpush.msra.mxu0 %v2424
    %3476 = vmatpush.msra.mxu0 %v2416
    %3477 = vmatpush.msra.mxu0 %v2408
    %3478 = vmatpush.msra.mxu0 %v2400
    %3479 = vmatpush.msra.mxu0 %v2392
    %3480 = vmatpush.msra.mxu0 %v2384
    %3481 = vmatmul.f32.gmra.mxu0 %v1482
    %v3482 = vpop.f32.mrf.mxu0
    %v3483 = vadd.f32 %v3463, %v3482
    %3484 = vdwg.mxu0
    %3485 = vmatpush.msra.mxu0 %v1609
    %3486 = vmatpush.msra.mxu0 %v1601
    %3487 = vmatpush.msra.mxu0 %v1593
    %3488 = vmatpush.msra.mxu0 %v1585
    %3489 = vmatpush.msra.mxu0 %v1577
    %3490 = vmatpush.msra.mxu0 %v1569
    %3491 = vmatpush.msra.mxu0 %v1561
    %3492 = vmatpush.msra.mxu0 %v1553
    %3493 = vmatpush.msra.mxu0 %v1545
    %3494 = vmatpush.msra.mxu0 %v1537
    %3495 = vmatpush.msra.mxu0 %v1529
    %3496 = vmatpush.msra.mxu0 %v1521
    %3497 = vmatpush.msra.mxu0 %v1513
    %3498 = vmatpush.msra.mxu0 %v1505
    %3499 = vmatpush.msra.mxu0 %v1497
    %3500 = vmatpush.msra.mxu0 %v1489
    %3501 = vmatmul.f32.gmra.mxu0 %v1475
    %v3502 = vpop.f32.mrf.mxu0
    %v3503 = vadd.f32 %v2515, %v3502
    %3504 = vdwg.mxu0
    %3505 = vmatpush.msra.mxu0 %v1737
    %3506 = vmatpush.msra.mxu0 %v1729
    %3507 = vmatpush.msra.mxu0 %v1721
    %3508 = vmatpush.msra.mxu0 %v1713
    %3509 = vmatpush.msra.mxu0 %v1705
    %3510 = vmatpush.msra.mxu0 %v1697
    %3511 = vmatpush.msra.mxu0 %v1689
    %3512 = vmatpush.msra.mxu0 %v1681
    %3513 = vmatpush.msra.mxu0 %v1673
    %3514 = vmatpush.msra.mxu0 %v1665
    %3515 = vmatpush.msra.mxu0 %v1657
    %3516 = vmatpush.msra.mxu0 %v1649
    %3517 = vmatpush.msra.mxu0 %v1641
    %3518 = vmatpush.msra.mxu0 %v1633
    %3519 = vmatpush.msra.mxu0 %v1625
    %3520 = vmatpush.msra.mxu0 %v1617
    %3521 = vmatmul.f32.gmra.mxu0 %v1476
    %v3522 = vpop.f32.mrf.mxu0
    %v3523 = vadd.f32 %v3503, %v3522
    %3524 = vdwg.mxu0
    %3525 = vmatpush.msra.mxu0 %v1865
    %3526 = vmatpush.msra.mxu0 %v1857
    %3527 = vmatpush.msra.mxu0 %v1849
    %3528 = vmatpush.msra.mxu0 %v1841
    %3529 = vmatpush.msra.mxu0 %v1833
    %3530 = vmatpush.msra.mxu0 %v1825
    %3531 = vmatpush.msra.mxu0 %v1817
    %3532 = vmatpush.msra.mxu0 %v1809
    %3533 = vmatpush.msra.mxu0 %v1801
    %3534 = vmatpush.msra.mxu0 %v1793
    %3535 = vmatpush.msra.mxu0 %v1785
    %3536 = vmatpush.msra.mxu0 %v1777
    %3537 = vmatpush.msra.mxu0 %v1769
    %3538 = vmatpush.msra.mxu0 %v1761
    %3539 = vmatpush.msra.mxu0 %v1753
    %3540 = vmatpush.msra.mxu0 %v1745
    %3541 = vmatmul.f32.gmra.mxu0 %v1477
    %v3542 = vpop.f32.mrf.mxu0
    %v3543 = vadd.f32 %v3523, %v3542
    %3544 = vdwg.mxu0
    %3545 = vmatpush.msra.mxu0 %v1993
    %3546 = vmatpush.msra.mxu0 %v1985
    %3547 = vmatpush.msra.mxu0 %v1977
    %3548 = vmatpush.msra.mxu0 %v1969
    %3549 = vmatpush.msra.mxu0 %v1961
    %3550 = vmatpush.msra.mxu0 %v1953
    %3551 = vmatpush.msra.mxu0 %v1945
    %3552 = vmatpush.msra.mxu0 %v1937
    %3553 = vmatpush.msra.mxu0 %v1929
    %3554 = vmatpush.msra.mxu0 %v1921
    %3555 = vmatpush.msra.mxu0 %v1913
    %3556 = vmatpush.msra.mxu0 %v1905
    %3557 = vmatpush.msra.mxu0 %v1897
    %3558 = vmatpush.msra.mxu0 %v1889
    %3559 = vmatpush.msra.mxu0 %v1881
    %3560 = vmatpush.msra.mxu0 %v1873
    %3561 = vmatmul.f32.gmra.mxu0 %v1478
    %v3562 = vpop.f32.mrf.mxu0
    %v3563 = vadd.f32 %v3543, %v3562
    %3564 = vdwg.mxu0
    %3565 = vmatpush.msra.mxu0 %v2121
    %3566 = vmatpush.msra.mxu0 %v2113
    %3567 = vmatpush.msra.mxu0 %v2105
    %3568 = vmatpush.msra.mxu0 %v2097
    %3569 = vmatpush.msra.mxu0 %v2089
    %3570 = vmatpush.msra.mxu0 %v2081
    %3571 = vmatpush.msra.mxu0 %v2073
    %3572 = vmatpush.msra.mxu0 %v2065
    %3573 = vmatpush.msra.mxu0 %v2057
    %3574 = vmatpush.msra.mxu0 %v2049
    %3575 = vmatpush.msra.mxu0 %v2041
    %3576 = vmatpush.msra.mxu0 %v2033
    %3577 = vmatpush.msra.mxu0 %v2025
    %3578 = vmatpush.msra.mxu0 %v2017
    %3579 = vmatpush.msra.mxu0 %v2009
    %3580 = vmatpush.msra.mxu0 %v2001
    %3581 = vmatmul.f32.gmra.mxu0 %v1479
    %v3582 = vpop.f32.mrf.mxu0
    %v3583 = vadd.f32 %v3563, %v3582
    %3584 = vdwg.mxu0
    %3585 = vmatpush.msra.mxu0 %v2249
    %3586 = vmatpush.msra.mxu0 %v2241
    %3587 = vmatpush.msra.mxu0 %v2233
    %3588 = vmatpush.msra.mxu0 %v2225
    %3589 = vmatpush.msra.mxu0 %v2217
    %3590 = vmatpush.msra.mxu0 %v2209
    %3591 = vmatpush.msra.mxu0 %v2201
    %3592 = vmatpush.msra.mxu0 %v2193
    %3593 = vmatpush.msra.mxu0 %v2185
    %3594 = vmatpush.msra.mxu0 %v2177
    %3595 = vmatpush.msra.mxu0 %v2169
    %3596 = vmatpush.msra.mxu0 %v2161
    %3597 = vmatpush.msra.mxu0 %v2153
    %3598 = vmatpush.msra.mxu0 %v2145
    %3599 = vmatpush.msra.mxu0 %v2137
    %3600 = vmatpush.msra.mxu0 %v2129
    %3601 = vmatmul.f32.gmra.mxu0 %v1480
    %v3602 = vpop.f32.mrf.mxu0
    %v3603 = vadd.f32 %v3583, %v3602
    %3604 = vdwg.mxu0
    %3605 = vmatpush.msra.mxu0 %v2377
    %3606 = vmatpush.msra.mxu0 %v2369
    %3607 = vmatpush.msra.mxu0 %v2361
    %3608 = vmatpush.msra.mxu0 %v2353
    %3609 = vmatpush.msra.mxu0 %v2345
    %3610 = vmatpush.msra.mxu0 %v2337
    %3611 = vmatpush.msra.mxu0 %v2329
    %3612 = vmatpush.msra.mxu0 %v2321
    %3613 = vmatpush.msra.mxu0 %v2313
    %3614 = vmatpush.msra.mxu0 %v2305
    %3615 = vmatpush.msra.mxu0 %v2297
    %3616 = vmatpush.msra.mxu0 %v2289
    %3617 = vmatpush.msra.mxu0 %v2281
    %3618 = vmatpush.msra.mxu0 %v2273
    %3619 = vmatpush.msra.mxu0 %v2265
    %3620 = vmatpush.msra.mxu0 %v2257
    %3621 = vmatmul.f32.gmra.mxu0 %v1481
    %v3622 = vpop.f32.mrf.mxu0
    %v3623 = vadd.f32 %v3603, %v3622
    %3624 = vdwg.mxu0
    %3625 = vmatpush.msra.mxu0 %v2505
    %3626 = vmatpush.msra.mxu0 %v2497
    %3627 = vmatpush.msra.mxu0 %v2489
    %3628 = vmatpush.msra.mxu0 %v2481
    %3629 = vmatpush.msra.mxu0 %v2473
    %3630 = vmatpush.msra.mxu0 %v2465
    %3631 = vmatpush.msra.mxu0 %v2457
    %3632 = vmatpush.msra.mxu0 %v2449
    %3633 = vmatpush.msra.mxu0 %v2441
    %3634 = vmatpush.msra.mxu0 %v2433
    %3635 = vmatpush.msra.mxu0 %v2425
    %3636 = vmatpush.msra.mxu0 %v2417
    %3637 = vmatpush.msra.mxu0 %v2409
    %3638 = vmatpush.msra.mxu0 %v2401
    %3639 = vmatpush.msra.mxu0 %v2393
    %3640 = vmatpush.msra.mxu0 %v2385
    %3641 = vmatmul.f32.gmra.mxu0 %v1482
    %v3642 = vpop.f32.mrf.mxu0
    %v3643 = vadd.f32 %v3623, %v3642
    %3644 = vdwg.mxu0
    %3645 = vmatpush.msra.mxu0 %v1610
    %3646 = vmatpush.msra.mxu0 %v1602
    %3647 = vmatpush.msra.mxu0 %v1594
    %3648 = vmatpush.msra.mxu0 %v1586
    %3649 = vmatpush.msra.mxu0 %v1578
    %3650 = vmatpush.msra.mxu0 %v1570
    %3651 = vmatpush.msra.mxu0 %v1562
    %3652 = vmatpush.msra.mxu0 %v1554
    %3653 = vmatpush.msra.mxu0 %v1546
    %3654 = vmatpush.msra.mxu0 %v1538
    %3655 = vmatpush.msra.mxu0 %v1530
    %3656 = vmatpush.msra.mxu0 %v1522
    %3657 = vmatpush.msra.mxu0 %v1514
    %3658 = vmatpush.msra.mxu0 %v1506
    %3659 = vmatpush.msra.mxu0 %v1498
    %3660 = vmatpush.msra.mxu0 %v1490
    %3661 = vmatmul.f32.gmra.mxu0 %v1475
    %v3662 = vpop.f32.mrf.mxu0
    %v3663 = vadd.f32 %v2516, %v3662
    %3664 = vdwg.mxu0
    %3665 = vmatpush.msra.mxu0 %v1738
    %3666 = vmatpush.msra.mxu0 %v1730
    %3667 = vmatpush.msra.mxu0 %v1722
    %3668 = vmatpush.msra.mxu0 %v1714
    %3669 = vmatpush.msra.mxu0 %v1706
    %3670 = vmatpush.msra.mxu0 %v1698
    %3671 = vmatpush.msra.mxu0 %v1690
    %3672 = vmatpush.msra.mxu0 %v1682
    %3673 = vmatpush.msra.mxu0 %v1674
    %3674 = vmatpush.msra.mxu0 %v1666
    %3675 = vmatpush.msra.mxu0 %v1658
    %3676 = vmatpush.msra.mxu0 %v1650
    %3677 = vmatpush.msra.mxu0 %v1642
    %3678 = vmatpush.msra.mxu0 %v1634
    %3679 = vmatpush.msra.mxu0 %v1626
    %3680 = vmatpush.msra.mxu0 %v1618
    %3681 = vmatmul.f32.gmra.mxu0 %v1476
    %v3682 = vpop.f32.mrf.mxu0
    %v3683 = vadd.f32 %v3663, %v3682
    %3684 = vdwg.mxu0
    %3685 = vmatpush.msra.mxu0 %v1866
    %3686 = vmatpush.msra.mxu0 %v1858
    %3687 = vmatpush.msra.mxu0 %v1850
    %3688 = vmatpush.msra.mxu0 %v1842
    %3689 = vmatpush.msra.mxu0 %v1834
    %3690 = vmatpush.msra.mxu0 %v1826
    %3691 = vmatpush.msra.mxu0 %v1818
    %3692 = vmatpush.msra.mxu0 %v1810
    %3693 = vmatpush.msra.mxu0 %v1802
    %3694 = vmatpush.msra.mxu0 %v1794
    %3695 = vmatpush.msra.mxu0 %v1786
    %3696 = vmatpush.msra.mxu0 %v1778
    %3697 = vmatpush.msra.mxu0 %v1770
    %3698 = vmatpush.msra.mxu0 %v1762
    %3699 = vmatpush.msra.mxu0 %v1754
    %3700 = vmatpush.msra.mxu0 %v1746
    %3701 = vmatmul.f32.gmra.mxu0 %v1477
    %v3702 = vpop.f32.mrf.mxu0
    %v3703 = vadd.f32 %v3683, %v3702
    %3704 = vdwg.mxu0
    %3705 = vmatpush.msra.mxu0 %v1994
    %3706 = vmatpush.msra.mxu0 %v1986
    %3707 = vmatpush.msra.mxu0 %v1978
    %3708 = vmatpush.msra.mxu0 %v1970
    %3709 = vmatpush.msra.mxu0 %v1962
    %3710 = vmatpush.msra.mxu0 %v1954
    %3711 = vmatpush.msra.mxu0 %v1946
    %3712 = vmatpush.msra.mxu0 %v1938
    %3713 = vmatpush.msra.mxu0 %v1930
    %3714 = vmatpush.msra.mxu0 %v1922
    %3715 = vmatpush.msra.mxu0 %v1914
    %3716 = vmatpush.msra.mxu0 %v1906
    %3717 = vmatpush.msra.mxu0 %v1898
    %3718 = vmatpush.msra.mxu0 %v1890
    %3719 = vmatpush.msra.mxu0 %v1882
    %3720 = vmatpush.msra.mxu0 %v1874
    %3721 = vmatmul.f32.gmra.mxu0 %v1478
    %v3722 = vpop.f32.mrf.mxu0
    %v3723 = vadd.f32 %v3703, %v3722
    %3724 = vdwg.mxu0
    %3725 = vmatpush.msra.mxu0 %v2122
    %3726 = vmatpush.msra.mxu0 %v2114
    %3727 = vmatpush.msra.mxu0 %v2106
    %3728 = vmatpush.msra.mxu0 %v2098
    %3729 = vmatpush.msra.mxu0 %v2090
    %3730 = vmatpush.msra.mxu0 %v2082
    %3731 = vmatpush.msra.mxu0 %v2074
    %3732 = vmatpush.msra.mxu0 %v2066
    %3733 = vmatpush.msra.mxu0 %v2058
    %3734 = vmatpush.msra.mxu0 %v2050
    %3735 = vmatpush.msra.mxu0 %v2042
    %3736 = vmatpush.msra.mxu0 %v2034
    %3737 = vmatpush.msra.mxu0 %v2026
    %3738 = vmatpush.msra.mxu0 %v2018
    %3739 = vmatpush.msra.mxu0 %v2010
    %3740 = vmatpush.msra.mxu0 %v2002
    %3741 = vmatmul.f32.gmra.mxu0 %v1479
    %v3742 = vpop.f32.mrf.mxu0
    %v3743 = vadd.f32 %v3723, %v3742
    %3744 = vdwg.mxu0
    %3745 = vmatpush.msra.mxu0 %v2250
    %3746 = vmatpush.msra.mxu0 %v2242
    %3747 = vmatpush.msra.mxu0 %v2234
    %3748 = vmatpush.msra.mxu0 %v2226
    %3749 = vmatpush.msra.mxu0 %v2218
    %3750 = vmatpush.msra.mxu0 %v2210
    %3751 = vmatpush.msra.mxu0 %v2202
    %3752 = vmatpush.msra.mxu0 %v2194
    %3753 = vmatpush.msra.mxu0 %v2186
    %3754 = vmatpush.msra.mxu0 %v2178
    %3755 = vmatpush.msra.mxu0 %v2170
    %3756 = vmatpush.msra.mxu0 %v2162
    %3757 = vmatpush.msra.mxu0 %v2154
    %3758 = vmatpush.msra.mxu0 %v2146
    %3759 = vmatpush.msra.mxu0 %v2138
    %3760 = vmatpush.msra.mxu0 %v2130
    %3761 = vmatmul.f32.gmra.mxu0 %v1480
    %v3762 = vpop.f32.mrf.mxu0
    %v3763 = vadd.f32 %v3743, %v3762
    %3764 = vdwg.mxu0
    %3765 = vmatpush.msra.mxu0 %v2378
    %3766 = vmatpush.msra.mxu0 %v2370
    %3767 = vmatpush.msra.mxu0 %v2362
    %3768 = vmatpush.msra.mxu0 %v2354
    %3769 = vmatpush.msra.mxu0 %v2346
    %3770 = vmatpush.msra.mxu0 %v2338
    %3771 = vmatpush.msra.mxu0 %v2330
    %3772 = vmatpush.msra.mxu0 %v2322
    %3773 = vmatpush.msra.mxu0 %v2314
    %3774 = vmatpush.msra.mxu0 %v2306
    %3775 = vmatpush.msra.mxu0 %v2298
    %3776 = vmatpush.msra.mxu0 %v2290
    %3777 = vmatpush.msra.mxu0 %v2282
    %3778 = vmatpush.msra.mxu0 %v2274
    %3779 = vmatpush.msra.mxu0 %v2266
    %3780 = vmatpush.msra.mxu0 %v2258
    %3781 = vmatmul.f32.gmra.mxu0 %v1481
    %v3782 = vpop.f32.mrf.mxu0
    %v3783 = vadd.f32 %v3763, %v3782
    %3784 = vdwg.mxu0
    %3785 = vmatpush.msra.mxu0 %v2506
    %3786 = vmatpush.msra.mxu0 %v2498
    %3787 = vmatpush.msra.mxu0 %v2490
    %3788 = vmatpush.msra.mxu0 %v2482
    %3789 = vmatpush.msra.mxu0 %v2474
    %3790 = vmatpush.msra.mxu0 %v2466
    %3791 = vmatpush.msra.mxu0 %v2458
    %3792 = vmatpush.msra.mxu0 %v2450
    %3793 = vmatpush.msra.mxu0 %v2442
    %3794 = vmatpush.msra.mxu0 %v2434
    %3795 = vmatpush.msra.mxu0 %v2426
    %3796 = vmatpush.msra.mxu0 %v2418
    %3797 = vmatpush.msra.mxu0 %v2410
    %3798 = vmatpush.msra.mxu0 %v2402
    %3799 = vmatpush.msra.mxu0 %v2394
    %3800 = vmatpush.msra.mxu0 %v2386
    %3801 = vmatmul.f32.gmra.mxu0 %v1482
    %v3802 = vpop.f32.mrf.mxu0
    %v3803 = vadd.f32 %v3783, %v3802
    %3804 = vdwg.mxu0
    %v3805 = vmax.f32 %v2683, 0.0
    %v3806 = vmax.f32 %v2843, 0.0
    %v3807 = vmax.f32 %v3003, 0.0
    %v3808 = vmax.f32 %v3163, 0.0
    %v3809 = vmax.f32 %v3323, 0.0
    %v3810 = vmax.f32 %v3483, 0.0
    %v3811 = vmax.f32 %v3643, 0.0
    %v3812 = vmax.f32 %v3803, 0.0
    %v3813 = vld [vmem:[#allocation14] sm:$0xff]
    %v3814 = vld [vmem:[#allocation14 + $0x8] sm:$0xff]
    %v3815 = vld [vmem:[#allocation14 + $0x10] sm:$0xff]
    %v3816 = vld [vmem:[#allocation14 + $0x18] sm:$0xff]
    %v3817 = vld [vmem:[#allocation14 + $0x20] sm:$0xff]
    %v3818 = vld [vmem:[#allocation14 + $0x28] sm:$0xff]
    %v3819 = vld [vmem:[#allocation14 + $0x30] sm:$0xff]
    %v3820 = vld [vmem:[#allocation14 + $0x38] sm:$0xff]
    %v3821 = vld [vmem:[#allocation14 + $0x40] sm:$0xff]
    %v3822 = vld [vmem:[#allocation14 + $0x48] sm:$0xff]
    %v3823 = vld [vmem:[#allocation14 + $0x50] sm:$0xff]
    %v3824 = vld [vmem:[#allocation14 + $0x58] sm:$0xff]
    %v3825 = vld [vmem:[#allocation14 + $0x60] sm:$0xff]
    %v3826 = vld [vmem:[#allocation14 + $0x68] sm:$0xff]
    %v3827 = vld [vmem:[#allocation14 + $0x70] sm:$0xff]
    %v3828 = vld [vmem:[#allocation14 + $0x78] sm:$0xff]
    %v3829 = vld [vmem:[#allocation14 + $0x80] sm:$0xff]
    %v3830 = vld [vmem:[#allocation14 + $0x88] sm:$0xff]
    %v3831 = vld [vmem:[#allocation14 + $0x90] sm:$0xff]
    %v3832 = vld [vmem:[#allocation14 + $0x98] sm:$0xff]
    %v3833 = vld [vmem:[#allocation14 + $0xa0] sm:$0xff]
    %v3834 = vld [vmem:[#allocation14 + $0xa8] sm:$0xff]
    %v3835 = vld [vmem:[#allocation14 + $0xb0] sm:$0xff]
    %v3836 = vld [vmem:[#allocation14 + $0xb8] sm:$0xff]
    %v3837 = vld [vmem:[#allocation14 + $0xc0] sm:$0xff]
    %v3838 = vld [vmem:[#allocation14 + $0xc8] sm:$0xff]
    %v3839 = vld [vmem:[#allocation14 + $0xd0] sm:$0xff]
    %v3840 = vld [vmem:[#allocation14 + $0xd8] sm:$0xff]
    %v3841 = vld [vmem:[#allocation14 + $0xe0] sm:$0xff]
    %v3842 = vld [vmem:[#allocation14 + $0xe8] sm:$0xff]
    %v3843 = vld [vmem:[#allocation14 + $0xf0] sm:$0xff]
    %v3844 = vld [vmem:[#allocation14 + $0xf8] sm:$0xff]
    %v3845 = vld [vmem:[#allocation14 + $0x100] sm:$0xff]
    %v3846 = vld [vmem:[#allocation14 + $0x108] sm:$0xff]
    %v3847 = vld [vmem:[#allocation14 + $0x110] sm:$0xff]
    %v3848 = vld [vmem:[#allocation14 + $0x118] sm:$0xff]
    %v3849 = vld [vmem:[#allocation14 + $0x120] sm:$0xff]
    %v3850 = vld [vmem:[#allocation14 + $0x128] sm:$0xff]
    %v3851 = vld [vmem:[#allocation14 + $0x130] sm:$0xff]
    %v3852 = vld [vmem:[#allocation14 + $0x138] sm:$0xff]
    %v3853 = vld [vmem:[#allocation14 + $0x140] sm:$0xff]
    %v3854 = vld [vmem:[#allocation14 + $0x148] sm:$0xff]
    %v3855 = vld [vmem:[#allocation14 + $0x150] sm:$0xff]
    %v3856 = vld [vmem:[#allocation14 + $0x158] sm:$0xff]
    %v3857 = vld [vmem:[#allocation14 + $0x160] sm:$0xff]
    %v3858 = vld [vmem:[#allocation14 + $0x168] sm:$0xff]
    %v3859 = vld [vmem:[#allocation14 + $0x170] sm:$0xff]
    %v3860 = vld [vmem:[#allocation14 + $0x178] sm:$0xff]
    %v3861 = vld [vmem:[#allocation14 + $0x180] sm:$0xff]
    %v3862 = vld [vmem:[#allocation14 + $0x188] sm:$0xff]
    %v3863 = vld [vmem:[#allocation14 + $0x190] sm:$0xff]
    %v3864 = vld [vmem:[#allocation14 + $0x198] sm:$0xff]
    %v3865 = vld [vmem:[#allocation14 + $0x1a0] sm:$0xff]
    %v3866 = vld [vmem:[#allocation14 + $0x1a8] sm:$0xff]
    %v3867 = vld [vmem:[#allocation14 + $0x1b0] sm:$0xff]
    %v3868 = vld [vmem:[#allocation14 + $0x1b8] sm:$0xff]
    %v3869 = vld [vmem:[#allocation14 + $0x1c0] sm:$0xff]
    %v3870 = vld [vmem:[#allocation14 + $0x1c8] sm:$0xff]
    %v3871 = vld [vmem:[#allocation14 + $0x1d0] sm:$0xff]
    %v3872 = vld [vmem:[#allocation14 + $0x1d8] sm:$0xff]
    %v3873 = vld [vmem:[#allocation14 + $0x1e0] sm:$0xff]
    %v3874 = vld [vmem:[#allocation14 + $0x1e8] sm:$0xff]
    %v3875 = vld [vmem:[#allocation14 + $0x1f0] sm:$0xff]
    %v3876 = vld [vmem:[#allocation14 + $0x1f8] sm:$0xff]
    %v3877 = vld [vmem:[#allocation14 + $0x200] sm:$0xff]
    %v3878 = vld [vmem:[#allocation14 + $0x208] sm:$0xff]
    %v3879 = vld [vmem:[#allocation14 + $0x210] sm:$0xff]
    %v3880 = vld [vmem:[#allocation14 + $0x218] sm:$0xff]
    %v3881 = vld [vmem:[#allocation14 + $0x220] sm:$0xff]
    %v3882 = vld [vmem:[#allocation14 + $0x228] sm:$0xff]
    %v3883 = vld [vmem:[#allocation14 + $0x230] sm:$0xff]
    %v3884 = vld [vmem:[#allocation14 + $0x238] sm:$0xff]
    %v3885 = vld [vmem:[#allocation14 + $0x240] sm:$0xff]
    %v3886 = vld [vmem:[#allocation14 + $0x248] sm:$0xff]
    %v3887 = vld [vmem:[#allocation14 + $0x250] sm:$0xff]
    %v3888 = vld [vmem:[#allocation14 + $0x258] sm:$0xff]
    %v3889 = vld [vmem:[#allocation14 + $0x260] sm:$0xff]
    %v3890 = vld [vmem:[#allocation14 + $0x268] sm:$0xff]
    %v3891 = vld [vmem:[#allocation14 + $0x270] sm:$0xff]
    %v3892 = vld [vmem:[#allocation14 + $0x278] sm:$0xff]
    %v3893 = vld [vmem:[#allocation14 + $0x280] sm:$0xff]
    %v3894 = vld [vmem:[#allocation14 + $0x288] sm:$0xff]
    %v3895 = vld [vmem:[#allocation14 + $0x290] sm:$0xff]
    %v3896 = vld [vmem:[#allocation14 + $0x298] sm:$0xff]
    %v3897 = vld [vmem:[#allocation14 + $0x2a0] sm:$0xff]
    %v3898 = vld [vmem:[#allocation14 + $0x2a8] sm:$0xff]
    %v3899 = vld [vmem:[#allocation14 + $0x2b0] sm:$0xff]
    %v3900 = vld [vmem:[#allocation14 + $0x2b8] sm:$0xff]
    %v3901 = vld [vmem:[#allocation14 + $0x2c0] sm:$0xff]
    %v3902 = vld [vmem:[#allocation14 + $0x2c8] sm:$0xff]
    %v3903 = vld [vmem:[#allocation14 + $0x2d0] sm:$0xff]
    %v3904 = vld [vmem:[#allocation14 + $0x2d8] sm:$0xff]
    %v3905 = vld [vmem:[#allocation14 + $0x2e0] sm:$0xff]
    %v3906 = vld [vmem:[#allocation14 + $0x2e8] sm:$0xff]
    %v3907 = vld [vmem:[#allocation14 + $0x2f0] sm:$0xff]
    %v3908 = vld [vmem:[#allocation14 + $0x2f8] sm:$0xff]
    %v3909 = vld [vmem:[#allocation14 + $0x300] sm:$0xff]
    %v3910 = vld [vmem:[#allocation14 + $0x308] sm:$0xff]
    %v3911 = vld [vmem:[#allocation14 + $0x310] sm:$0xff]
    %v3912 = vld [vmem:[#allocation14 + $0x318] sm:$0xff]
    %v3913 = vld [vmem:[#allocation14 + $0x320] sm:$0xff]
    %v3914 = vld [vmem:[#allocation14 + $0x328] sm:$0xff]
    %v3915 = vld [vmem:[#allocation14 + $0x330] sm:$0xff]
    %v3916 = vld [vmem:[#allocation14 + $0x338] sm:$0xff]
    %v3917 = vld [vmem:[#allocation14 + $0x340] sm:$0xff]
    %v3918 = vld [vmem:[#allocation14 + $0x348] sm:$0xff]
    %v3919 = vld [vmem:[#allocation14 + $0x350] sm:$0xff]
    %v3920 = vld [vmem:[#allocation14 + $0x358] sm:$0xff]
    %v3921 = vld [vmem:[#allocation14 + $0x360] sm:$0xff]
    %v3922 = vld [vmem:[#allocation14 + $0x368] sm:$0xff]
    %v3923 = vld [vmem:[#allocation14 + $0x370] sm:$0xff]
    %v3924 = vld [vmem:[#allocation14 + $0x378] sm:$0xff]
    %v3925 = vld [vmem:[#allocation14 + $0x380] sm:$0xff]
    %v3926 = vld [vmem:[#allocation14 + $0x388] sm:$0xff]
    %v3927 = vld [vmem:[#allocation14 + $0x390] sm:$0xff]
    %v3928 = vld [vmem:[#allocation14 + $0x398] sm:$0xff]
    %v3929 = vld [vmem:[#allocation14 + $0x3a0] sm:$0xff]
    %v3930 = vld [vmem:[#allocation14 + $0x3a8] sm:$0xff]
    %v3931 = vld [vmem:[#allocation14 + $0x3b0] sm:$0xff]
    %v3932 = vld [vmem:[#allocation14 + $0x3b8] sm:$0xff]
    %v3933 = vld [vmem:[#allocation14 + $0x3c0] sm:$0xff]
    %v3934 = vld [vmem:[#allocation14 + $0x3c8] sm:$0xff]
    %v3935 = vld [vmem:[#allocation14 + $0x3d0] sm:$0xff]
    %v3936 = vld [vmem:[#allocation14 + $0x3d8] sm:$0xff]
    %v3937 = vld [vmem:[#allocation14 + $0x3e0] sm:$0xff]
    %v3938 = vld [vmem:[#allocation14 + $0x3e8] sm:$0xff]
    %v3939 = vld [vmem:[#allocation14 + $0x3f0] sm:$0xff]
    %v3940 = vld [vmem:[#allocation14 + $0x3f8] sm:$0xff]
    %v3941 = vld [vmem:[#allocation16] sm:$0x1]
    %v3943 = vperm.slane %v3941, 0
    %3945 = vmatpush.msra.mxu0 %v3828
    %3946 = vmatpush.msra.mxu0 %v3827
    %3947 = vmatpush.msra.mxu0 %v3826
    %3948 = vmatpush.msra.mxu0 %v3825
    %3949 = vmatpush.msra.mxu0 %v3824
    %3950 = vmatpush.msra.mxu0 %v3823
    %3951 = vmatpush.msra.mxu0 %v3822
    %3952 = vmatpush.msra.mxu0 %v3821
    %3953 = vmatpush.msra.mxu0 %v3820
    %3954 = vmatpush.msra.mxu0 %v3819
    %3955 = vmatpush.msra.mxu0 %v3818
    %3956 = vmatpush.msra.mxu0 %v3817
    %3957 = vmatpush.msra.mxu0 %v3816
    %3958 = vmatpush.msra.mxu0 %v3815
    %3959 = vmatpush.msra.mxu0 %v3814
    %3960 = vmatpush.msra.mxu0 %v3813
    %3961 = vmatmul.f32.gmra.mxu0 %v3805
    %v3962 = vpop.f32.mrf.mxu0
    %v3963 = vadd.f32 %v3943, %v3962
    %3964 = vdwg.mxu0
    %3965 = vmatpush.msra.mxu0 %v3844
    %3966 = vmatpush.msra.mxu0 %v3843
    %3967 = vmatpush.msra.mxu0 %v3842
    %3968 = vmatpush.msra.mxu0 %v3841
    %3969 = vmatpush.msra.mxu0 %v3840
    %3970 = vmatpush.msra.mxu0 %v3839
    %3971 = vmatpush.msra.mxu0 %v3838
    %3972 = vmatpush.msra.mxu0 %v3837
    %3973 = vmatpush.msra.mxu0 %v3836
    %3974 = vmatpush.msra.mxu0 %v3835
    %3975 = vmatpush.msra.mxu0 %v3834
    %3976 = vmatpush.msra.mxu0 %v3833
    %3977 = vmatpush.msra.mxu0 %v3832
    %3978 = vmatpush.msra.mxu0 %v3831
    %3979 = vmatpush.msra.mxu0 %v3830
    %3980 = vmatpush.msra.mxu0 %v3829
    %3981 = vmatmul.f32.gmra.mxu0 %v3806
    %v3982 = vpop.f32.mrf.mxu0
    %v3983 = vadd.f32 %v3963, %v3982
    %3984 = vdwg.mxu0
    %3985 = vmatpush.msra.mxu0 %v3860
    %3986 = vmatpush.msra.mxu0 %v3859
    %3987 = vmatpush.msra.mxu0 %v3858
    %3988 = vmatpush.msra.mxu0 %v3857
    %3989 = vmatpush.msra.mxu0 %v3856
    %3990 = vmatpush.msra.mxu0 %v3855
    %3991 = vmatpush.msra.mxu0 %v3854
    %3992 = vmatpush.msra.mxu0 %v3853
    %3993 = vmatpush.msra.mxu0 %v3852
    %3994 = vmatpush.msra.mxu0 %v3851
    %3995 = vmatpush.msra.mxu0 %v3850
    %3996 = vmatpush.msra.mxu0 %v3849
    %3997 = vmatpush.msra.mxu0 %v3848
    %3998 = vmatpush.msra.mxu0 %v3847
    %3999 = vmatpush.msra.mxu0 %v3846
    %4000 = vmatpush.msra.mxu0 %v3845
    %4001 = vmatmul.f32.gmra.mxu0 %v3807
    %v4002 = vpop.f32.mrf.mxu0
    %v4003 = vadd.f32 %v3983, %v4002
    %4004 = vdwg.mxu0
    %4005 = vmatpush.msra.mxu0 %v3876
    %4006 = vmatpush.msra.mxu0 %v3875
    %4007 = vmatpush.msra.mxu0 %v3874
    %4008 = vmatpush.msra.mxu0 %v3873
    %4009 = vmatpush.msra.mxu0 %v3872
    %4010 = vmatpush.msra.mxu0 %v3871
    %4011 = vmatpush.msra.mxu0 %v3870
    %4012 = vmatpush.msra.mxu0 %v3869
    %4013 = vmatpush.msra.mxu0 %v3868
    %4014 = vmatpush.msra.mxu0 %v3867
    %4015 = vmatpush.msra.mxu0 %v3866
    %4016 = vmatpush.msra.mxu0 %v3865
    %4017 = vmatpush.msra.mxu0 %v3864
    %4018 = vmatpush.msra.mxu0 %v3863
    %4019 = vmatpush.msra.mxu0 %v3862
    %4020 = vmatpush.msra.mxu0 %v3861
    %4021 = vmatmul.f32.gmra.mxu0 %v3808
    %v4022 = vpop.f32.mrf.mxu0
    %v4023 = vadd.f32 %v4003, %v4022
    %4024 = vdwg.mxu0
    %4025 = vmatpush.msra.mxu0 %v3892
    %4026 = vmatpush.msra.mxu0 %v3891
    %4027 = vmatpush.msra.mxu0 %v3890
    %4028 = vmatpush.msra.mxu0 %v3889
    %4029 = vmatpush.msra.mxu0 %v3888
    %4030 = vmatpush.msra.mxu0 %v3887
    %4031 = vmatpush.msra.mxu0 %v3886
    %4032 = vmatpush.msra.mxu0 %v3885
    %4033 = vmatpush.msra.mxu0 %v3884
    %4034 = vmatpush.msra.mxu0 %v3883
    %4035 = vmatpush.msra.mxu0 %v3882
    %4036 = vmatpush.msra.mxu0 %v3881
    %4037 = vmatpush.msra.mxu0 %v3880
    %4038 = vmatpush.msra.mxu0 %v3879
    %4039 = vmatpush.msra.mxu0 %v3878
    %4040 = vmatpush.msra.mxu0 %v3877
    %4041 = vmatmul.f32.gmra.mxu0 %v3809
    %v4042 = vpop.f32.mrf.mxu0
    %v4043 = vadd.f32 %v4023, %v4042
    %4044 = vdwg.mxu0
    %4045 = vmatpush.msra.mxu0 %v3908
    %4046 = vmatpush.msra.mxu0 %v3907
    %4047 = vmatpush.msra.mxu0 %v3906
    %4048 = vmatpush.msra.mxu0 %v3905
    %4049 = vmatpush.msra.mxu0 %v3904
    %4050 = vmatpush.msra.mxu0 %v3903
    %4051 = vmatpush.msra.mxu0 %v3902
    %4052 = vmatpush.msra.mxu0 %v3901
    %4053 = vmatpush.msra.mxu0 %v3900
    %4054 = vmatpush.msra.mxu0 %v3899
    %4055 = vmatpush.msra.mxu0 %v3898
    %4056 = vmatpush.msra.mxu0 %v3897
    %4057 = vmatpush.msra.mxu0 %v3896
    %4058 = vmatpush.msra.mxu0 %v3895
    %4059 = vmatpush.msra.mxu0 %v3894
    %4060 = vmatpush.msra.mxu0 %v3893
    %4061 = vmatmul.f32.gmra.mxu0 %v3810
    %v4062 = vpop.f32.mrf.mxu0
    %v4063 = vadd.f32 %v4043, %v4062
    %4064 = vdwg.mxu0
    %4065 = vmatpush.msra.mxu0 %v3924
    %4066 = vmatpush.msra.mxu0 %v3923
    %4067 = vmatpush.msra.mxu0 %v3922
    %4068 = vmatpush.msra.mxu0 %v3921
    %4069 = vmatpush.msra.mxu0 %v3920
    %4070 = vmatpush.msra.mxu0 %v3919
    %4071 = vmatpush.msra.mxu0 %v3918
    %4072 = vmatpush.msra.mxu0 %v3917
    %4073 = vmatpush.msra.mxu0 %v3916
    %4074 = vmatpush.msra.mxu0 %v3915
    %4075 = vmatpush.msra.mxu0 %v3914
    %4076 = vmatpush.msra.mxu0 %v3913
    %4077 = vmatpush.msra.mxu0 %v3912
    %4078 = vmatpush.msra.mxu0 %v3911
    %4079 = vmatpush.msra.mxu0 %v3910
    %4080 = vmatpush.msra.mxu0 %v3909
    %4081 = vmatmul.f32.gmra.mxu0 %v3811
    %v4082 = vpop.f32.mrf.mxu0
    %v4083 = vadd.f32 %v4063, %v4082
    %4084 = vdwg.mxu0
    %4085 = vmatpush.msra.mxu0 %v3940
    %4086 = vmatpush.msra.mxu0 %v3939
    %4087 = vmatpush.msra.mxu0 %v3938
    %4088 = vmatpush.msra.mxu0 %v3937
    %4089 = vmatpush.msra.mxu0 %v3936
    %4090 = vmatpush.msra.mxu0 %v3935
    %4091 = vmatpush.msra.mxu0 %v3934
    %4092 = vmatpush.msra.mxu0 %v3933
    %4093 = vmatpush.msra.mxu0 %v3932
    %4094 = vmatpush.msra.mxu0 %v3931
    %4095 = vmatpush.msra.mxu0 %v3930
    %4096 = vmatpush.msra.mxu0 %v3929
    %4097 = vmatpush.msra.mxu0 %v3928
    %4098 = vmatpush.msra.mxu0 %v3927
    %4099 = vmatpush.msra.mxu0 %v3926
    %4100 = vmatpush.msra.mxu0 %v3925
    %4101 = vmatmul.f32.gmra.mxu0 %v3812
    %v4102 = vpop.f32.mrf.mxu0
    %v4103 = vadd.f32 %v4083, %v4102
    %4104 = vdwg.mxu0
    %v4105 = vmax.f32 %v4103, 0.0
    %v4106 = vld [vmem:[#allocation17] sm:$0xff]
    %v4107 = vld [vmem:[#allocation17 + $0x8] sm:$0xff]
    %v4108 = vld [vmem:[#allocation17 + $0x10] sm:$0xff]
    %v4109 = vld [vmem:[#allocation17 + $0x18] sm:$0xff]
    %v4110 = vld [vmem:[#allocation17 + $0x20] sm:$0xff]
    %v4111 = vld [vmem:[#allocation17 + $0x28] sm:$0xff]
    %v4112 = vld [vmem:[#allocation17 + $0x30] sm:$0xff]
    %v4113 = vld [vmem:[#allocation17 + $0x38] sm:$0xff]
    %v4114 = vld [vmem:[#allocation17 + $0x40] sm:$0xff]
    %v4115 = vld [vmem:[#allocation17 + $0x48] sm:$0xff]
    %v4116 = vld [vmem:[#allocation17 + $0x50] sm:$0xff]
    %v4117 = vld [vmem:[#allocation17 + $0x58] sm:$0xff]
    %v4118 = vld [vmem:[#allocation17 + $0x60] sm:$0xff]
    %v4119 = vld [vmem:[#allocation17 + $0x68] sm:$0xff]
    %v4120 = vld [vmem:[#allocation17 + $0x70] sm:$0xff]
    %v4121 = vld [vmem:[#allocation17 + $0x78] sm:$0xff]
    %v4122 = vld [vmem:[#allocation19] sm:$0x1]
    %v4124 = vperm.slane %v4122, 0
    %4126 = vmatpush.msra.mxu0 %v4121
    %4127 = vmatpush.msra.mxu0 %v4120
    %4128 = vmatpush.msra.mxu0 %v4119
    %4129 = vmatpush.msra.mxu0 %v4118
    %4130 = vmatpush.msra.mxu0 %v4117
    %4131 = vmatpush.msra.mxu0 %v4116
    %4132 = vmatpush.msra.mxu0 %v4115
    %4133 = vmatpush.msra.mxu0 %v4114
    %4134 = vmatpush.msra.mxu0 %v4113
    %4135 = vmatpush.msra.mxu0 %v4112
    %4136 = vmatpush.msra.mxu0 %v4111
    %4137 = vmatpush.msra.mxu0 %v4110
    %4138 = vmatpush.msra.mxu0 %v4109
    %4139 = vmatpush.msra.mxu0 %v4108
    %4140 = vmatpush.msra.mxu0 %v4107
    %4141 = vmatpush.msra.mxu0 %v4106
    %4142 = vmatmul.f32.gmra.mxu0 %v4105
    %v4143 = vpop.f32.mrf.mxu0
    %v4144 = vadd.f32 %v4124, %v4143
    %4145 = vdwg.mxu0
    %4146 = vst [vmem:[#allocation20] sm:$0xff] %v4144
    // Predicated region
    $region90: #{tpu_custom_call.1} parent=1 // pred_check
      _
    $region91: #{tpu_custom_call.1} parent=1 // pred_check_branch
      %4148 = sbr.rel (0) target = $region93
    $region92: #{tpu_custom_call.1} parent=1 // pred_region
      %4150 = vsyncadd [#allocation4], 0
      %s4152 = sshll.u32 [#allocation20], 4
      %s4153 = int_to_ptr.vmem [resolvable:$true] %s4152
      %s4154 = sshll.u32 %s11, 4
      %s4155 = int_to_ptr.hbm [resolvable:$true] %s4154
      %4157 = dma.vmem_to_hbm [thread:$0]  %s4153, 128, %s4155, [#allocation4]
    $region93: #{tpu_custom_call.1} parent=1 // pred_fallthru
      _
    // Predicated region
    $region94: #{tpu_custom_call.1} parent=1 // pred_check
      _
    $region95: #{tpu_custom_call.1} parent=1 // pred_check_branch
      %4159 = sbr.rel (0) target = $region97
    $region96: #{tpu_custom_call.1} parent=1 // pred_region
      %4161 = dma.done [#allocation4], 128
    $region97: #{tpu_custom_call.1} parent=1 // pred_fallthru
      _
    %4162 = vsyncpa [#allocation3], 1
    %4163 = vsyncpa [#allocation6], 1
    %4164 = vsyncpa [#allocation9], 1
    %4165 = vsyncpa [#allocation12], 1
    %4166 = vsyncpa [#allocation15], 1
    %4167 = vsyncpa [#allocation18], 1
    %4168 = vsyncpa [#allocation4], 1

</llo_original>
